<compile_context>
chip_gen: v7x
topology: tpu7x:2x2x1
jax: 0.10.0
libtpu: 0.0.40
codegen_flags: <defaults>
</compile_context>

<pallas_src>
import jax
import jax.numpy as jnp
from jax import lax
from jax.experimental import pallas as pl
from jax.experimental.pallas import tpu as pltpu

_EPS = 1e-5  # PyTorch InstanceNorm2d default eps


def _conv3x3(pad_ref, w_ref):
    """3x3 'same' convolution as a single MXU matmul.

    pad_ref: (H+2, W+2, C) f32 VMEM scratch holding the zero-padded input.
    w_ref:   (9*C, Cout) bf16 weights, K ordered (ky, kx, cin).
    returns: (H*W, Cout) f32.
    """
    Hp, Wp, C = pad_ref.shape
    H, W = Hp - 2, Wp - 2
    taps = []
    for dy in range(3):
        for dx in range(3):
            taps.append(pad_ref[dy:dy + H, dx:dx + W, :].astype(jnp.bfloat16))
    col = jnp.concatenate(taps, axis=-1).reshape(H * W, 9 * C)
    return jnp.dot(col, w_ref[...], preferred_element_type=jnp.float32)


def _instance_norm_affine(y, g_ref, b_ref):
    """Per-channel instance norm over the pixel axis, one-pass statistics.

    y: (H*W, C) f32.  g_ref, b_ref: (1, C) f32.
    """
    inv_n = 1.0 / y.shape[0]
    mean = jnp.sum(y, axis=0, keepdims=True) * inv_n
    ex2 = jnp.sum(y * y, axis=0, keepdims=True) * inv_n
    var = ex2 - mean * mean  # biased variance (InstanceNorm2d training mode)
    scale = g_ref[...] * lax.rsqrt(var + _EPS)
    shift = b_ref[...] - mean * scale
    return y * scale + shift


def _residual_block_kernel(x_ref, w1_ref, w2_ref, g1_ref, b1_ref, g2_ref, b2_ref,
                           out_ref, pad_ref):
    # Per-grid-step block shapes:
    #   x_ref   : (1, H, W, C)  f32
    #   w*_ref  : (9*C, C)      bf16
    #   g*, b*  : (1, C)        f32
    #   out_ref : (1, H, W, C)  f32
    #   pad_ref : (H+2, W+2, C) f32 VMEM scratch
    H, W, C = out_ref.shape[1], out_ref.shape[2], out_ref.shape[3]

    # Build the zero-padded conv input in VMEM (no padded HBM array, no second
    # input stream).  The single zero-fill also provides the zero border for
    # conv2, whose interior is overwritten below.  (Only the 1-px border truly
    # needs zeroing; the full fill is kept for simple, robust lowering.)
    pad_ref[...] = jnp.zeros_like(pad_ref)
    pad_ref[1:H + 1, 1:W + 1, :] = x_ref[0]

    # conv1 (one K=9*C matmul) -> instance norm 1 (+affine) -> ReLU
    y = _conv3x3(pad_ref, w1_ref)
    y = _instance_norm_affine(y, g1_ref, b1_ref)
    y = jnp.maximum(y, 0.0)

    # Re-stage the activation into the (still zero-bordered) scratch for conv2.
    pad_ref[1:H + 1, 1:W + 1, :] = y.reshape(H, W, C)

    # conv2 -> instance norm 2 (+affine)
    z = _conv3x3(pad_ref, w2_ref)
    z = _instance_norm_affine(z, g2_ref, b2_ref)

    # residual add with the original f32 input (still resident in VMEM)
    out_ref[0] = x_ref[0] + z.reshape(H, W, C)


def _vmem_estimate_bytes(C, H, W):
    f32, bf16 = 4, 2
    x_blk = H * W * C * f32
    out_blk = H * W * C * f32
    weights = 2 * 9 * C * C * bf16
    affine = 4 * C * f32
    scratch = (H + 2) * (W + 2) * C * f32
    col = H * W * 9 * C * bf16
    acc = H * W * C * f32
    # pipelined operands are double-buffered; col/acc counted twice for slack
    return 2 * (x_blk + out_blk + weights + affine) + scratch + 2 * (col + acc)


def residual_block(x_nchw, w1, w2, g1, b1, g2, b2):
    """x_nchw: (N, C, H, W); w1, w2: (C, C, 3, 3) in PyTorch OIHW layout."""
    N, C, H, W = x_nchw.shape
    Cout = w1.shape[0]
    assert C == Cout, "residual add requires dim_in == dim_out"

    # NHWC (channels on the lane dim).  A model kept end-to-end in NHWC would
    # not need these boundary transposes.
    x = jnp.transpose(x_nchw, (0, 2, 3, 1)).astype(jnp.float32)

    # OIHW -> (ky, kx, cin, cout) -> (9*cin, cout); K order matches the
    # kernel's im2col concat order (dy, dx, cin).  bf16 operands for the MXU.
    w1_k = jnp.transpose(w1, (2, 3, 1, 0)).reshape(9 * C, C).astype(jnp.bfloat16)
    w2_k = jnp.transpose(w2, (2, 3, 1, 0)).reshape(9 * C, C).astype(jnp.bfloat16)
    g1r, b1r, g2r, b2r = (v.reshape(1, C).astype(jnp.float32)
                          for v in (g1, b1, g2, b2))

    vmem_limit = int(min(48 * 2 ** 20,
                         max(16 * 2 ** 20, 4 * _vmem_estimate_bytes(C, H, W))))

    out = pl.pallas_call(
        _residual_block_kernel,
        out_shape=jax.ShapeDtypeStruct((N, H, W, C), jnp.float32),
        grid_spec=pltpu.PrefetchScalarGridSpec(
            num_scalar_prefetch=0,
            grid=(N,),  # one grid step per batch element
            in_specs=[
                pl.BlockSpec((1, H, W, C), lambda n: (n, 0, 0, 0)),
                pl.BlockSpec((9 * C, C), lambda n: (0, 0)),
                pl.BlockSpec((9 * C, C), lambda n: (0, 0)),
                pl.BlockSpec((1, C), lambda n: (0, 0)),
                pl.BlockSpec((1, C), lambda n: (0, 0)),
                pl.BlockSpec((1, C), lambda n: (0, 0)),
                pl.BlockSpec((1, C), lambda n: (0, 0)),
            ],
            out_specs=pl.BlockSpec((1, H, W, C), lambda n: (n, 0, 0, 0)),
            scratch_shapes=[pltpu.VMEM((H + 2, W + 2, C), jnp.float32)],
        ),
        compiler_params=pltpu.CompilerParams(
            dimension_semantics=("parallel",),
            vmem_limit_bytes=vmem_limit),
    )(x, w1_k, w2_k, g1r, b1r, g2r, b2r)

    return jnp.transpose(out, (0, 3, 1, 2))  # back to NCHW


def _reference(x, w1, w2, g1, b1, g2, b2, conv_dtype=jnp.float32):
    """Pure-JAX NCHW reference matching the PyTorch module (training mode).

    conv_dtype=bfloat16 emulates the kernel's bf16 matmul operands (with f32
    accumulation) for a tight comparison; float32 is the exact module math.
    """
    def conv(t, w):
        return lax.conv_general_dilated(
            t.astype(conv_dtype).astype(jnp.float32),
            w.astype(conv_dtype).astype(jnp.float32),
            window_strides=(1, 1), padding=((1, 1), (1, 1)),
            dimension_numbers=("NCHW", "OIHW", "NCHW"),
            precision=lax.Precision.HIGHEST)

    def inorm(t, g, b):
        m = jnp.mean(t, axis=(2, 3), keepdims=True)
        v = jnp.mean((t - m) ** 2, axis=(2, 3), keepdims=True)
        tn = (t - m) / jnp.sqrt(v + _EPS)
        return tn * g.reshape(1, -1, 1, 1) + b.reshape(1, -1, 1, 1)

    y = conv(x, w1)
    y = inorm(y, g1, b1)
    y = jnp.maximum(y, 0.0)
    y = conv(y, w2)
    y = inorm(y, g2, b2)
    return x + y


if __name__ == "__main__":
    key = jax.random.PRNGKey(0)
    kx, k1, k2, kg1, kb1, kg2, kb2 = jax.random.split(key, 7)

    N, C, H, W = 2, 4, 16, 16  # dim_in = dim_out = 4
    x = jax.random.normal(kx, (N, C, H, W), jnp.float32)
    w1 = 0.1 * jax.random.normal(k1, (C, C, 3, 3), jnp.float32)
    w2 = 0.1 * jax.random.normal(k2, (C, C, 3, 3), jnp.float32)
    g1 = 1.0 + 0.1 * jax.random.normal(kg1, (C,), jnp.float32)
    b1 = 0.1 * jax.random.normal(kb1, (C,), jnp.float32)
    g2 = 1.0 + 0.1 * jax.random.normal(kg2, (C,), jnp.float32)
    b2 = 0.1 * jax.random.normal(kb2, (C,), jnp.float32)

    out = jax.block_until_ready(residual_block(x, w1, w2, g1, b1, g2, b2))
    assert out.shape == (N, C, H, W)

    # Tight check vs a reference that applies the same bf16 quantization to the
    # conv operands (validates padding / im2col / IN / residual logic).
    ref_q = _reference(x, w1, w2, g1, b1, g2, b2, conv_dtype=jnp.bfloat16)
    err_q = float(jnp.max(jnp.abs(out - ref_q)))
    assert err_q < 2e-3, f"mismatch vs bf16-emulating reference: {err_q}"

    # Looser sanity check vs the exact f32 module math (bf16 rounding only).
    ref_f = _reference(x, w1, w2, g1, b1, g2, b2, conv_dtype=jnp.float32)
    err_f = float(jnp.max(jnp.abs(out - ref_f)))
    assert err_f < 7.5e-2, f"mismatch vs f32 reference: {err_f}"

    print("KERNEL_OK")
</pallas_src>

<mosaic_0001>
module attributes {stable_mosaic.version = 11 : i64} {
  func.func @_residual_block_kernel(%arg0: i32, %arg1: memref<1x16x16x4xf32, #tpu.memory_space<vmem>>, %arg2: memref<36x4xbf16, #tpu.memory_space<vmem>>, %arg3: memref<36x4xbf16, #tpu.memory_space<vmem>>, %arg4: memref<1x4xf32, #tpu.memory_space<vmem>>, %arg5: memref<1x4xf32, #tpu.memory_space<vmem>>, %arg6: memref<1x4xf32, #tpu.memory_space<vmem>>, %arg7: memref<1x4xf32, #tpu.memory_space<vmem>>, %arg8: memref<1x16x16x4xf32, #tpu.memory_space<vmem>>, %arg9: memref<18x18x4xf32, #tpu.memory_space<vmem>>) attributes {dimension_semantics = [#tpu.dimension_semantics<parallel>], iteration_bounds = array<i64: 2>, scalar_prefetch = 0 : i64, scratch_operands = 1 : i64, tpu.core_type = #tpu.core_type<tc>, window_params = [{transform_indices = @transform_0, window_bounds = array<i64: 1, 16, 16, 4>}, {pipeline_mode = #tpu.pipeline_mode<synchronous>, transform_indices = @transform_1, window_bounds = array<i64: 36, 4>}, {pipeline_mode = #tpu.pipeline_mode<synchronous>, transform_indices = @transform_2, window_bounds = array<i64: 36, 4>}, {pipeline_mode = #tpu.pipeline_mode<synchronous>, transform_indices = @transform_3, window_bounds = array<i64: 1, 4>}, {pipeline_mode = #tpu.pipeline_mode<synchronous>, transform_indices = @transform_4, window_bounds = array<i64: 1, 4>}, {pipeline_mode = #tpu.pipeline_mode<synchronous>, transform_indices = @transform_5, window_bounds = array<i64: 1, 4>}, {pipeline_mode = #tpu.pipeline_mode<synchronous>, transform_indices = @transform_6, window_bounds = array<i64: 1, 4>}, {transform_indices = @transform_7, window_bounds = array<i64: 1, 16, 16, 4>}]} {
    %cst = arith.constant 0.000000e+00 : f32
    %0 = vector.broadcast %cst : f32 to vector<18x18x4xf32>
    %c0 = arith.constant 0 : index
    %c0_0 = arith.constant 0 : index
    %c0_1 = arith.constant 0 : index
    %1 = vector.load %arg9[%c0, %c0_0, %c0_1] : memref<18x18x4xf32, #tpu.memory_space<vmem>>, vector<18x18x4xf32>
    tpu.vector_store %arg9[%c0, %c0_0, %c0_1], %0 {strides = array<i32>} : memref<18x18x4xf32, #tpu.memory_space<vmem>>, vector<18x18x4xf32>,
    %c0_2 = arith.constant 0 : index
    %c0_3 = arith.constant 0 : index
    %c0_4 = arith.constant 0 : index
    %c0_5 = arith.constant 0 : index
    %2 = vector.load %arg1[%c0_2, %c0_3, %c0_4, %c0_5] : memref<1x16x16x4xf32, #tpu.memory_space<vmem>>, vector<1x16x16x4xf32>
    %3 = vector.shape_cast %2 : vector<1x16x16x4xf32> to vector<16x16x4xf32>
    %c1 = arith.constant 1 : index
    %c1_6 = arith.constant 1 : index
    %c0_7 = arith.constant 0 : index
    %4 = vector.load %arg9[%c1, %c1_6, %c0_7] : memref<18x18x4xf32, #tpu.memory_space<vmem>>, vector<16x16x4xf32>
    tpu.vector_store %arg9[%c1, %c1_6, %c0_7], %3 {strides = array<i32>} : memref<18x18x4xf32, #tpu.memory_space<vmem>>, vector<16x16x4xf32>,
    %c0_8 = arith.constant 0 : index
    %c0_9 = arith.constant 0 : index
    %c0_10 = arith.constant 0 : index
    %5 = vector.load %arg9[%c0_8, %c0_9, %c0_10] : memref<18x18x4xf32, #tpu.memory_space<vmem>>, vector<16x16x4xf32>
    %6 = arith.truncf %5 : vector<16x16x4xf32> to vector<16x16x4xbf16>
    %c0_11 = arith.constant 0 : index
    %c1_12 = arith.constant 1 : index
    %c0_13 = arith.constant 0 : index
    %7 = vector.load %arg9[%c0_11, %c1_12, %c0_13] : memref<18x18x4xf32, #tpu.memory_space<vmem>>, vector<16x16x4xf32>
    %8 = arith.truncf %7 : vector<16x16x4xf32> to vector<16x16x4xbf16>
    %c0_14 = arith.constant 0 : index
    %c2 = arith.constant 2 : index
    %c0_15 = arith.constant 0 : index
    %9 = vector.load %arg9[%c0_14, %c2, %c0_15] : memref<18x18x4xf32, #tpu.memory_space<vmem>>, vector<16x16x4xf32>
    %10 = arith.truncf %9 : vector<16x16x4xf32> to vector<16x16x4xbf16>
    %c1_16 = arith.constant 1 : index
    %c0_17 = arith.constant 0 : index
    %c0_18 = arith.constant 0 : index
    %11 = vector.load %arg9[%c1_16, %c0_17, %c0_18] : memref<18x18x4xf32, #tpu.memory_space<vmem>>, vector<16x16x4xf32>
    %12 = arith.truncf %11 : vector<16x16x4xf32> to vector<16x16x4xbf16>
    %c1_19 = arith.constant 1 : index
    %c1_20 = arith.constant 1 : index
    %c0_21 = arith.constant 0 : index
    %13 = vector.load %arg9[%c1_19, %c1_20, %c0_21] : memref<18x18x4xf32, #tpu.memory_space<vmem>>, vector<16x16x4xf32>
    %14 = arith.truncf %13 : vector<16x16x4xf32> to vector<16x16x4xbf16>
    %c1_22 = arith.constant 1 : index
    %c2_23 = arith.constant 2 : index
    %c0_24 = arith.constant 0 : index
    %15 = vector.load %arg9[%c1_22, %c2_23, %c0_24] : memref<18x18x4xf32, #tpu.memory_space<vmem>>, vector<16x16x4xf32>
    %16 = arith.truncf %15 : vector<16x16x4xf32> to vector<16x16x4xbf16>
    %c2_25 = arith.constant 2 : index
    %c0_26 = arith.constant 0 : index
    %c0_27 = arith.constant 0 : index
    %17 = vector.load %arg9[%c2_25, %c0_26, %c0_27] : memref<18x18x4xf32, #tpu.memory_space<vmem>>, vector<16x16x4xf32>
    %18 = arith.truncf %17 : vector<16x16x4xf32> to vector<16x16x4xbf16>
    %c2_28 = arith.constant 2 : index
    %c1_29 = arith.constant 1 : index
    %c0_30 = arith.constant 0 : index
    %19 = vector.load %arg9[%c2_28, %c1_29, %c0_30] : memref<18x18x4xf32, #tpu.memory_space<vmem>>, vector<16x16x4xf32>
    %20 = arith.truncf %19 : vector<16x16x4xf32> to vector<16x16x4xbf16>
    %c2_31 = arith.constant 2 : index
    %c2_32 = arith.constant 2 : index
    %c0_33 = arith.constant 0 : index
    %21 = vector.load %arg9[%c2_31, %c2_32, %c0_33] : memref<18x18x4xf32, #tpu.memory_space<vmem>>, vector<16x16x4xf32>
    %22 = arith.truncf %21 : vector<16x16x4xf32> to vector<16x16x4xbf16>
    %23 = tpu.concatenate %6, %8, %10, %12, %14, %16, %18, %20, %22 in 2 : vector<16x16x4xbf16>, vector<16x16x4xbf16>, vector<16x16x4xbf16>, vector<16x16x4xbf16>, vector<16x16x4xbf16>, vector<16x16x4xbf16>, vector<16x16x4xbf16>, vector<16x16x4xbf16>, vector<16x16x4xbf16> -> vector<16x16x36xbf16>
    %24 = vector.shape_cast %23 : vector<16x16x36xbf16> to vector<256x36xbf16>
    %c0_34 = arith.constant 0 : index
    %c0_35 = arith.constant 0 : index
    %25 = vector.load %arg2[%c0_34, %c0_35] : memref<36x4xbf16, #tpu.memory_space<vmem>>, vector<36x4xbf16>
    %cst_36 = arith.constant dense<0.000000e+00> : vector<256x4xf32>
    %26 = tpu.matmul %24, %25, %cst_36 {dimension_numbers = #tpu.dot_dimension_numbers<[1], [0], [0], [1], [0, 0, 1, 1], [], []>} : vector<256x36xbf16>, vector<36x4xbf16>, vector<256x4xf32> -> vector<256x4xf32>
    %cst_37 = arith.constant dense<0.000000e+00> : vector<4xf32>
    %27 = vector.multi_reduction <add>, %26, %cst_37 [0] : vector<256x4xf32> to vector<4xf32>
    %28 = vector.shape_cast %27 : vector<4xf32> to vector<1x4xf32>
    %cst_38 = arith.constant 3.906250e-03 : f32
    %29 = vector.broadcast %cst_38 : f32 to vector<1x4xf32>
    %30 = arith.mulf %28, %29 : vector<1x4xf32>
    %31 = arith.mulf %26, %26 : vector<256x4xf32>
    %cst_39 = arith.constant dense<0.000000e+00> : vector<4xf32>
    %32 = vector.multi_reduction <add>, %31, %cst_39 [0] : vector<256x4xf32> to vector<4xf32>
    %33 = vector.shape_cast %32 : vector<4xf32> to vector<1x4xf32>
    %cst_40 = arith.constant 3.906250e-03 : f32
    %34 = vector.broadcast %cst_40 : f32 to vector<1x4xf32>
    %35 = arith.mulf %33, %34 : vector<1x4xf32>
    %36 = arith.mulf %30, %30 : vector<1x4xf32>
    %37 = arith.subf %35, %36 : vector<1x4xf32>
    %c0_41 = arith.constant 0 : index
    %c0_42 = arith.constant 0 : index
    %38 = vector.load %arg4[%c0_41, %c0_42] : memref<1x4xf32, #tpu.memory_space<vmem>>, vector<1x4xf32>
    %cst_43 = arith.constant 9.99999974E-6 : f32
    %39 = vector.broadcast %cst_43 : f32 to vector<1x4xf32>
    %40 = arith.addf %37, %39 : vector<1x4xf32>
    %41 = math.rsqrt %40 : vector<1x4xf32>
    %42 = arith.mulf %38, %41 : vector<1x4xf32>
    %c0_44 = arith.constant 0 : index
    %c0_45 = arith.constant 0 : index
    %43 = vector.load %arg5[%c0_44, %c0_45] : memref<1x4xf32, #tpu.memory_space<vmem>>, vector<1x4xf32>
    %44 = arith.mulf %30, %42 : vector<1x4xf32>
    %45 = arith.subf %43, %44 : vector<1x4xf32>
    %46 = vector.broadcast %42 : vector<1x4xf32> to vector<256x4xf32>
    %47 = arith.mulf %26, %46 : vector<256x4xf32>
    %48 = vector.broadcast %45 : vector<1x4xf32> to vector<256x4xf32>
    %49 = arith.addf %47, %48 : vector<256x4xf32>
    %cst_46 = arith.constant 0.000000e+00 : f32
    %50 = vector.broadcast %cst_46 : f32 to vector<256x4xf32>
    %51 = arith.maximumf %49, %50 : vector<256x4xf32>
    %52 = vector.shape_cast %51 : vector<256x4xf32> to vector<16x16x4xf32>
    %c1_47 = arith.constant 1 : index
    %c1_48 = arith.constant 1 : index
    %c0_49 = arith.constant 0 : index
    %53 = vector.load %arg9[%c1_47, %c1_48, %c0_49] : memref<18x18x4xf32, #tpu.memory_space<vmem>>, vector<16x16x4xf32>
    tpu.vector_store %arg9[%c1_47, %c1_48, %c0_49], %52 {strides = array<i32>} : memref<18x18x4xf32, #tpu.memory_space<vmem>>, vector<16x16x4xf32>,
    %c0_50 = arith.constant 0 : index
    %c0_51 = arith.constant 0 : index
    %c0_52 = arith.constant 0 : index
    %54 = vector.load %arg9[%c0_50, %c0_51, %c0_52] : memref<18x18x4xf32, #tpu.memory_space<vmem>>, vector<16x16x4xf32>
    %55 = arith.truncf %54 : vector<16x16x4xf32> to vector<16x16x4xbf16>
    %c0_53 = arith.constant 0 : index
    %c1_54 = arith.constant 1 : index
    %c0_55 = arith.constant 0 : index
    %56 = vector.load %arg9[%c0_53, %c1_54, %c0_55] : memref<18x18x4xf32, #tpu.memory_space<vmem>>, vector<16x16x4xf32>
    %57 = arith.truncf %56 : vector<16x16x4xf32> to vector<16x16x4xbf16>
    %c0_56 = arith.constant 0 : index
    %c2_57 = arith.constant 2 : index
    %c0_58 = arith.constant 0 : index
    %58 = vector.load %arg9[%c0_56, %c2_57, %c0_58] : memref<18x18x4xf32, #tpu.memory_space<vmem>>, vector<16x16x4xf32>
    %59 = arith.truncf %58 : vector<16x16x4xf32> to vector<16x16x4xbf16>
    %c1_59 = arith.constant 1 : index
    %c0_60 = arith.constant 0 : index
    %c0_61 = arith.constant 0 : index
    %60 = vector.load %arg9[%c1_59, %c0_60, %c0_61] : memref<18x18x4xf32, #tpu.memory_space<vmem>>, vector<16x16x4xf32>
    %61 = arith.truncf %60 : vector<16x16x4xf32> to vector<16x16x4xbf16>
    %c1_62 = arith.constant 1 : index
    %c1_63 = arith.constant 1 : index
    %c0_64 = arith.constant 0 : index
    %62 = vector.load %arg9[%c1_62, %c1_63, %c0_64] : memref<18x18x4xf32, #tpu.memory_space<vmem>>, vector<16x16x4xf32>
    %63 = arith.truncf %62 : vector<16x16x4xf32> to vector<16x16x4xbf16>
    %c1_65 = arith.constant 1 : index
    %c2_66 = arith.constant 2 : index
    %c0_67 = arith.constant 0 : index
    %64 = vector.load %arg9[%c1_65, %c2_66, %c0_67] : memref<18x18x4xf32, #tpu.memory_space<vmem>>, vector<16x16x4xf32>
    %65 = arith.truncf %64 : vector<16x16x4xf32> to vector<16x16x4xbf16>
    %c2_68 = arith.constant 2 : index
    %c0_69 = arith.constant 0 : index
    %c0_70 = arith.constant 0 : index
    %66 = vector.load %arg9[%c2_68, %c0_69, %c0_70] : memref<18x18x4xf32, #tpu.memory_space<vmem>>, vector<16x16x4xf32>
    %67 = arith.truncf %66 : vector<16x16x4xf32> to vector<16x16x4xbf16>
    %c2_71 = arith.constant 2 : index
    %c1_72 = arith.constant 1 : index
    %c0_73 = arith.constant 0 : index
    %68 = vector.load %arg9[%c2_71, %c1_72, %c0_73] : memref<18x18x4xf32, #tpu.memory_space<vmem>>, vector<16x16x4xf32>
    %69 = arith.truncf %68 : vector<16x16x4xf32> to vector<16x16x4xbf16>
    %c2_74 = arith.constant 2 : index
    %c2_75 = arith.constant 2 : index
    %c0_76 = arith.constant 0 : index
    %70 = vector.load %arg9[%c2_74, %c2_75, %c0_76] : memref<18x18x4xf32, #tpu.memory_space<vmem>>, vector<16x16x4xf32>
    %71 = arith.truncf %70 : vector<16x16x4xf32> to vector<16x16x4xbf16>
    %72 = tpu.concatenate %55, %57, %59, %61, %63, %65, %67, %69, %71 in 2 : vector<16x16x4xbf16>, vector<16x16x4xbf16>, vector<16x16x4xbf16>, vector<16x16x4xbf16>, vector<16x16x4xbf16>, vector<16x16x4xbf16>, vector<16x16x4xbf16>, vector<16x16x4xbf16>, vector<16x16x4xbf16> -> vector<16x16x36xbf16>
    %73 = vector.shape_cast %72 : vector<16x16x36xbf16> to vector<256x36xbf16>
    %c0_77 = arith.constant 0 : index
    %c0_78 = arith.constant 0 : index
    %74 = vector.load %arg3[%c0_77, %c0_78] : memref<36x4xbf16, #tpu.memory_space<vmem>>, vector<36x4xbf16>
    %cst_79 = arith.constant dense<0.000000e+00> : vector<256x4xf32>
    %75 = tpu.matmul %73, %74, %cst_79 {dimension_numbers = #tpu.dot_dimension_numbers<[1], [0], [0], [1], [0, 0, 1, 1], [], []>} : vector<256x36xbf16>, vector<36x4xbf16>, vector<256x4xf32> -> vector<256x4xf32>
    %cst_80 = arith.constant dense<0.000000e+00> : vector<4xf32>
    %76 = vector.multi_reduction <add>, %75, %cst_80 [0] : vector<256x4xf32> to vector<4xf32>
    %77 = vector.shape_cast %76 : vector<4xf32> to vector<1x4xf32>
    %cst_81 = arith.constant 3.906250e-03 : f32
    %78 = vector.broadcast %cst_81 : f32 to vector<1x4xf32>
    %79 = arith.mulf %77, %78 : vector<1x4xf32>
    %80 = arith.mulf %75, %75 : vector<256x4xf32>
    %cst_82 = arith.constant dense<0.000000e+00> : vector<4xf32>
    %81 = vector.multi_reduction <add>, %80, %cst_82 [0] : vector<256x4xf32> to vector<4xf32>
    %82 = vector.shape_cast %81 : vector<4xf32> to vector<1x4xf32>
    %cst_83 = arith.constant 3.906250e-03 : f32
    %83 = vector.broadcast %cst_83 : f32 to vector<1x4xf32>
    %84 = arith.mulf %82, %83 : vector<1x4xf32>
    %85 = arith.mulf %79, %79 : vector<1x4xf32>
    %86 = arith.subf %84, %85 : vector<1x4xf32>
    %c0_84 = arith.constant 0 : index
    %c0_85 = arith.constant 0 : index
    %87 = vector.load %arg6[%c0_84, %c0_85] : memref<1x4xf32, #tpu.memory_space<vmem>>, vector<1x4xf32>
    %cst_86 = arith.constant 9.99999974E-6 : f32
    %88 = vector.broadcast %cst_86 : f32 to vector<1x4xf32>
    %89 = arith.addf %86, %88 : vector<1x4xf32>
    %90 = math.rsqrt %89 : vector<1x4xf32>
    %91 = arith.mulf %87, %90 : vector<1x4xf32>
    %c0_87 = arith.constant 0 : index
    %c0_88 = arith.constant 0 : index
    %92 = vector.load %arg7[%c0_87, %c0_88] : memref<1x4xf32, #tpu.memory_space<vmem>>, vector<1x4xf32>
    %93 = arith.mulf %79, %91 : vector<1x4xf32>
    %94 = arith.subf %92, %93 : vector<1x4xf32>
    %95 = vector.broadcast %91 : vector<1x4xf32> to vector<256x4xf32>
    %96 = arith.mulf %75, %95 : vector<256x4xf32>
    %97 = vector.broadcast %94 : vector<1x4xf32> to vector<256x4xf32>
    %98 = arith.addf %96, %97 : vector<256x4xf32>
    %c0_89 = arith.constant 0 : index
    %c0_90 = arith.constant 0 : index
    %c0_91 = arith.constant 0 : index
    %c0_92 = arith.constant 0 : index
    %99 = vector.load %arg1[%c0_89, %c0_90, %c0_91, %c0_92] : memref<1x16x16x4xf32, #tpu.memory_space<vmem>>, vector<1x16x16x4xf32>
    %100 = vector.shape_cast %99 : vector<1x16x16x4xf32> to vector<16x16x4xf32>
    %101 = vector.shape_cast %98 : vector<256x4xf32> to vector<16x16x4xf32>
    %102 = arith.addf %100, %101 : vector<16x16x4xf32>
    %c0_93 = arith.constant 0 : index
    %c0_94 = arith.constant 0 : index
    %c0_95 = arith.constant 0 : index
    %c0_96 = arith.constant 0 : index
    %103 = vector.load %arg8[%c0_93, %c0_94, %c0_95, %c0_96] : memref<1x16x16x4xf32, #tpu.memory_space<vmem>>, vector<1x16x16x4xf32>
    %104 = vector.shape_cast %103 : vector<1x16x16x4xf32> to vector<16x16x4xf32>
    %105 = vector.shape_cast %102 : vector<16x16x4xf32> to vector<1x16x16x4xf32>
    tpu.vector_store %arg8[%c0_93, %c0_94, %c0_95, %c0_96], %105 {strides = array<i32>} : memref<1x16x16x4xf32, #tpu.memory_space<vmem>>, vector<1x16x16x4xf32>,
    return
  }
  func.func @transform_0(%arg0: i32) -> (i32, i32, i32, i32) {
    %c0_i32 = arith.constant 0 : i32
    %c0_i32_0 = arith.constant 0 : i32
    %c0_i32_1 = arith.constant 0 : i32
    %c0_i32_2 = arith.constant 0 : i32
    return %arg0, %c0_i32, %c0_i32_0, %c0_i32_1 : i32, i32, i32, i32
  }
  func.func @transform_1(%arg0: i32) -> (i32, i32) {
    %c0_i32 = arith.constant 0 : i32
    %c0_i32_0 = arith.constant 0 : i32
    %c0_i32_1 = arith.constant 0 : i32
    return %c0_i32, %c0_i32_0 : i32, i32
  }
  func.func @transform_2(%arg0: i32) -> (i32, i32) {
    %c0_i32 = arith.constant 0 : i32
    %c0_i32_0 = arith.constant 0 : i32
    %c0_i32_1 = arith.constant 0 : i32
    return %c0_i32, %c0_i32_0 : i32, i32
  }
  func.func @transform_3(%arg0: i32) -> (i32, i32) {
    %c0_i32 = arith.constant 0 : i32
    %c0_i32_0 = arith.constant 0 : i32
    %c0_i32_1 = arith.constant 0 : i32
    return %c0_i32, %c0_i32_0 : i32, i32
  }
  func.func @transform_4(%arg0: i32) -> (i32, i32) {
    %c0_i32 = arith.constant 0 : i32
    %c0_i32_0 = arith.constant 0 : i32
    %c0_i32_1 = arith.constant 0 : i32
    return %c0_i32, %c0_i32_0 : i32, i32
  }
  func.func @transform_5(%arg0: i32) -> (i32, i32) {
    %c0_i32 = arith.constant 0 : i32
    %c0_i32_0 = arith.constant 0 : i32
    %c0_i32_1 = arith.constant 0 : i32
    return %c0_i32, %c0_i32_0 : i32, i32
  }
  func.func @transform_6(%arg0: i32) -> (i32, i32) {
    %c0_i32 = arith.constant 0 : i32
    %c0_i32_0 = arith.constant 0 : i32
    %c0_i32_1 = arith.constant 0 : i32
    return %c0_i32, %c0_i32_0 : i32, i32
  }
  func.func @transform_7(%arg0: i32) -> (i32, i32, i32, i32) {
    %c0_i32 = arith.constant 0 : i32
    %c0_i32_0 = arith.constant 0 : i32
    %c0_i32_1 = arith.constant 0 : i32
    %c0_i32_2 = arith.constant 0 : i32
    return %arg0, %c0_i32, %c0_i32_0, %c0_i32_1 : i32, i32, i32, i32
  }
}

</mosaic_0001>

<llo_original>
// kernel: tpu_custom_call.1
$region0: #{tpu_custom_call.1}
  #allocation0 [shape = 'u32[]', space=smem, size = 0x4, offset = 0x4, fixed_abs, tag = 'smem constant byte address 0x4 - core index']
  #allocation1 [shape = 'u32[144,128]{1,0:T(1,128)}', space=vmem, size = 0x12000, scoped, tag = 'internal scratch']
  #allocation2 [shape = 'f32[18,18,4]{2,1,0:T(8,128)}', space=vmem, size = 0x36000, scoped, tag = 'scratch operand']
  %s0 = inlined_call_operand.vmem [shape: f32[2,16,16,4], index: 0, kind: input, shape index: {}]
  %s1 = inlined_call_operand.vmem [shape: bf16[36,4], index: 1, kind: input, shape index: {}]
  %s2 = inlined_call_operand.vmem [shape: bf16[36,4], index: 2, kind: input, shape index: {}]
  %s3 = inlined_call_operand.vmem [shape: f32[1,4], index: 3, kind: input, shape index: {}]
  %s4 = inlined_call_operand.vmem [shape: f32[1,4], index: 4, kind: input, shape index: {}]
  %s5 = inlined_call_operand.vmem [shape: f32[1,4], index: 5, kind: input, shape index: {}]
  %s6 = inlined_call_operand.vmem [shape: f32[1,4], index: 6, kind: input, shape index: {}]
  %s7 = inlined_call_operand.vmem [shape: f32[2,16,16,4], index: 7, kind: output, shape index: {}]
  %s8 = sld [smem:[#allocation0]]
  $region61: #{tpu_custom_call.1} parent=0
    _
  %s10 = ssub.s32 1, %s8
  %s11 = scalar_select 0, %s10, %s8
  loop: start=0, step=1, limit=4
  $region2: #{tpu_custom_call.1} parent=0 // loop_pre_header
    _
  $region3: #{tpu_custom_call.1} parent=0 // loop_header
    %s13 = sphi 0, %s17
    %p14 = scmp.ge.s32.totalorder %s13, 4
    %s23 = sphi 0, %s25
    %s26 = sphi 0, %s23
    %s27 = sphi 0, %s26
    %s43 = sphi 0, %s27
    %s47 = sphi 0, %s47
    %s49 = sphi 0, %s47
    %s50 = sphi 0, %s49
    %s64 = sphi 0, %s50
    %s68 = sphi 0, %s68
    %s70 = sphi 0, %s68
    %s71 = sphi 0, %s70
    %s85 = sphi 0, %s71
    %s89 = sphi 0, %s89
    %s91 = sphi 0, %s89
    %s92 = sphi 0, %s91
    %s106 = sphi 0, %s92
    %s110 = sphi 0, %s110
    %s112 = sphi 0, %s110
    %s113 = sphi 0, %s112
    %s127 = sphi 0, %s113
    %s131 = sphi 0, %s131
    %s133 = sphi 0, %s131
    %s134 = sphi 0, %s133
    %s148 = sphi 0, %s134
    %s152 = sphi 0, %s152
    %s154 = sphi 0, %s152
    %s155 = sphi 0, %s154
    %s169 = sphi 0, %s155
    %s175 = sphi 0, %s177
    %s178 = sphi 0, %s175
    %s179 = sphi 0, %s178
    %s195 = sphi 0, %s179
  $region4: #{tpu_custom_call.1} parent=0 // loop_header_branch
    %16 = sbr.rel (%p14) target = $region8
  $region5: #{tpu_custom_call.1} parent=0 // loop_body
    %s18 = ssub.s32 %s13, 1
    %s19 = ssub.s32 %s13, 2
    %s20 = sadd.s32 %s13, 1
    %s21 = ssub.s32 %s13, %s20
    %p22 = scmp.eq.s32.totalorder %s21, 0
    %s24 = sadd.s32 %s23, 1
    %s25 = scalar_select %p22, %s23, %s24
    %p28 = pneg %p22
    %p29 = scmp.eq.s32.totalorder %s13, 1
    %p30 = por %p28, %p29
    %p31 = scmp.ne.s32.totalorder %s23, %s26
    %p32 = scmp.eq.s32.totalorder %s13, 0
    %p33 = por %p31, %p32
    %p34 = scmp.ne.s32.totalorder %s23, %s26
    %p35 = scmp.eq.s32.totalorder %s18, 1
    %p36 = por %p34, %p35
    %p37 = scmp.ne.s32.totalorder %s26, %s27
    %p38 = scmp.eq.s32.totalorder %s18, 0
    %p39 = por %p37, %p38
    %p40 = scmp.ne.s32.totalorder %s26, %s27
    %p41 = scmp.eq.s32.totalorder %s19, 1
    %p42 = por %p40, %p41
    %p44 = scmp.ne.s32.totalorder %s27, %s43
    %p45 = scmp.eq.s32.totalorder %s19, 0
    %p46 = por %p44, %p45
    %s48 = sadd.s32 %s47, 1
    %p51 = scmp.eq.s32.totalorder %s13, 1
    %p52 = scmp.ne.s32.totalorder %s47, %s49
    %p53 = scmp.eq.s32.totalorder %s13, 0
    %p54 = por %p52, %p53
    %p55 = scmp.ne.s32.totalorder %s47, %s49
    %p56 = scmp.eq.s32.totalorder %s18, 1
    %p57 = por %p55, %p56
    %p58 = scmp.ne.s32.totalorder %s49, %s50
    %p59 = scmp.eq.s32.totalorder %s18, 0
    %p60 = por %p58, %p59
    %p61 = scmp.ne.s32.totalorder %s49, %s50
    %p62 = scmp.eq.s32.totalorder %s19, 1
    %p63 = por %p61, %p62
    %p65 = scmp.ne.s32.totalorder %s50, %s64
    %p66 = scmp.eq.s32.totalorder %s19, 0
    %p67 = por %p65, %p66
    %s69 = sadd.s32 %s68, 1
    %p72 = scmp.eq.s32.totalorder %s13, 1
    %p73 = scmp.ne.s32.totalorder %s68, %s70
    %p74 = scmp.eq.s32.totalorder %s13, 0
    %p75 = por %p73, %p74
    %p76 = scmp.ne.s32.totalorder %s68, %s70
    %p77 = scmp.eq.s32.totalorder %s18, 1
    %p78 = por %p76, %p77
    %p79 = scmp.ne.s32.totalorder %s70, %s71
    %p80 = scmp.eq.s32.totalorder %s18, 0
    %p81 = por %p79, %p80
    %p82 = scmp.ne.s32.totalorder %s70, %s71
    %p83 = scmp.eq.s32.totalorder %s19, 1
    %p84 = por %p82, %p83
    %p86 = scmp.ne.s32.totalorder %s71, %s85
    %p87 = scmp.eq.s32.totalorder %s19, 0
    %p88 = por %p86, %p87
    %s90 = sadd.s32 %s89, 1
    %p93 = scmp.eq.s32.totalorder %s13, 1
    %p94 = scmp.ne.s32.totalorder %s89, %s91
    %p95 = scmp.eq.s32.totalorder %s13, 0
    %p96 = por %p94, %p95
    %p97 = scmp.ne.s32.totalorder %s89, %s91
    %p98 = scmp.eq.s32.totalorder %s18, 1
    %p99 = por %p97, %p98
    %p100 = scmp.ne.s32.totalorder %s91, %s92
    %p101 = scmp.eq.s32.totalorder %s18, 0
    %p102 = por %p100, %p101
    %p103 = scmp.ne.s32.totalorder %s91, %s92
    %p104 = scmp.eq.s32.totalorder %s19, 1
    %p105 = por %p103, %p104
    %p107 = scmp.ne.s32.totalorder %s92, %s106
    %p108 = scmp.eq.s32.totalorder %s19, 0
    %p109 = por %p107, %p108
    %s111 = sadd.s32 %s110, 1
    %p114 = scmp.eq.s32.totalorder %s13, 1
    %p115 = scmp.ne.s32.totalorder %s110, %s112
    %p116 = scmp.eq.s32.totalorder %s13, 0
    %p117 = por %p115, %p116
    %p118 = scmp.ne.s32.totalorder %s110, %s112
    %p119 = scmp.eq.s32.totalorder %s18, 1
    %p120 = por %p118, %p119
    %p121 = scmp.ne.s32.totalorder %s112, %s113
    %p122 = scmp.eq.s32.totalorder %s18, 0
    %p123 = por %p121, %p122
    %p124 = scmp.ne.s32.totalorder %s112, %s113
    %p125 = scmp.eq.s32.totalorder %s19, 1
    %p126 = por %p124, %p125
    %p128 = scmp.ne.s32.totalorder %s113, %s127
    %p129 = scmp.eq.s32.totalorder %s19, 0
    %p130 = por %p128, %p129
    %s132 = sadd.s32 %s131, 1
    %p135 = scmp.eq.s32.totalorder %s13, 1
    %p136 = scmp.ne.s32.totalorder %s131, %s133
    %p137 = scmp.eq.s32.totalorder %s13, 0
    %p138 = por %p136, %p137
    %p139 = scmp.ne.s32.totalorder %s131, %s133
    %p140 = scmp.eq.s32.totalorder %s18, 1
    %p141 = por %p139, %p140
    %p142 = scmp.ne.s32.totalorder %s133, %s134
    %p143 = scmp.eq.s32.totalorder %s18, 0
    %p144 = por %p142, %p143
    %p145 = scmp.ne.s32.totalorder %s133, %s134
    %p146 = scmp.eq.s32.totalorder %s19, 1
    %p147 = por %p145, %p146
    %p149 = scmp.ne.s32.totalorder %s134, %s148
    %p150 = scmp.eq.s32.totalorder %s19, 0
    %p151 = por %p149, %p150
    %s153 = sadd.s32 %s152, 1
    %p156 = scmp.eq.s32.totalorder %s13, 1
    %p157 = scmp.ne.s32.totalorder %s152, %s154
    %p158 = scmp.eq.s32.totalorder %s13, 0
    %p159 = por %p157, %p158
    %p160 = scmp.ne.s32.totalorder %s152, %s154
    %p161 = scmp.eq.s32.totalorder %s18, 1
    %p162 = por %p160, %p161
    %p163 = scmp.ne.s32.totalorder %s154, %s155
    %p164 = scmp.eq.s32.totalorder %s18, 0
    %p165 = por %p163, %p164
    %p166 = scmp.ne.s32.totalorder %s154, %s155
    %p167 = scmp.eq.s32.totalorder %s19, 1
    %p168 = por %p166, %p167
    %p170 = scmp.ne.s32.totalorder %s155, %s169
    %p171 = scmp.eq.s32.totalorder %s19, 0
    %p172 = por %p170, %p171
    %s173 = ssub.s32 %s13, %s20
    %p174 = scmp.eq.s32.totalorder %s173, 0
    %s176 = sadd.s32 %s175, 1
    %s177 = scalar_select %p174, %s175, %s176
    %p180 = pneg %p174
    %p181 = scmp.eq.s32.totalorder %s13, 1
    %p182 = por %p180, %p181
    %p183 = scmp.ne.s32.totalorder %s175, %s178
    %p184 = scmp.eq.s32.totalorder %s13, 0
    %p185 = por %p183, %p184
    %p186 = scmp.ne.s32.totalorder %s175, %s178
    %p187 = scmp.eq.s32.totalorder %s18, 1
    %p188 = por %p186, %p187
    %p189 = scmp.ne.s32.totalorder %s178, %s179
    %p190 = scmp.eq.s32.totalorder %s18, 0
    %p191 = por %p189, %p190
    %p192 = scmp.ne.s32.totalorder %s178, %s179
    %p193 = scmp.eq.s32.totalorder %s19, 1
    %p194 = por %p192, %p193
    %p196 = scmp.ne.s32.totalorder %s179, %s195
    %p197 = scmp.eq.s32.totalorder %s19, 0
    %p198 = por %p196, %p197
    %p199 = scmp.le.s32.totalorder 1, %s13
    %p200 = scmp.lt.s32.totalorder %s13, 3
    %p201 = pnand %p199, %p200
    %p202 = pneg %p201
    // Predicated region
    $region9: #{tpu_custom_call.1} parent=5 // pred_check
      _
    $region10: #{tpu_custom_call.1} parent=5 // pred_check_branch
      %204 = sbr.rel (%p201) target = $region12
    $region11: #{tpu_custom_call.1} parent=5 // pred_region
      %s205 = ssub.s32 %s13, 1
      // Predicated region
      $region13: #{tpu_custom_call.1} parent=11 // pred_check
        %p206 = pneg %p60
      $region14: #{tpu_custom_call.1} parent=11 // pred_check_branch
        %208 = sbr.rel (%p206) target = $region16
      $region15: #{tpu_custom_call.1} parent=11 // pred_region
        _
      $region16: #{tpu_custom_call.1} parent=11 // pred_fallthru
        _
      // Predicated region
      $region17: #{tpu_custom_call.1} parent=11 // pred_check
        %p209 = pneg %p81
      $region18: #{tpu_custom_call.1} parent=11 // pred_check_branch
        %211 = sbr.rel (%p209) target = $region20
      $region19: #{tpu_custom_call.1} parent=11 // pred_region
        _
      $region20: #{tpu_custom_call.1} parent=11 // pred_fallthru
        _
      // Predicated region
      $region21: #{tpu_custom_call.1} parent=11 // pred_check
        %p212 = pneg %p102
      $region22: #{tpu_custom_call.1} parent=11 // pred_check_branch
        %214 = sbr.rel (%p212) target = $region24
      $region23: #{tpu_custom_call.1} parent=11 // pred_region
        _
      $region24: #{tpu_custom_call.1} parent=11 // pred_fallthru
        _
      // Predicated region
      $region25: #{tpu_custom_call.1} parent=11 // pred_check
        %p215 = pneg %p123
      $region26: #{tpu_custom_call.1} parent=11 // pred_check_branch
        %217 = sbr.rel (%p215) target = $region28
      $region27: #{tpu_custom_call.1} parent=11 // pred_region
        _
      $region28: #{tpu_custom_call.1} parent=11 // pred_fallthru
        _
      // Predicated region
      $region29: #{tpu_custom_call.1} parent=11 // pred_check
        %p218 = pneg %p144
      $region30: #{tpu_custom_call.1} parent=11 // pred_check_branch
        %220 = sbr.rel (%p218) target = $region32
      $region31: #{tpu_custom_call.1} parent=11 // pred_region
        _
      $region32: #{tpu_custom_call.1} parent=11 // pred_fallthru
        _
      // Predicated region
      $region33: #{tpu_custom_call.1} parent=11 // pred_check
        %p221 = pneg %p165
      $region34: #{tpu_custom_call.1} parent=11 // pred_check_branch
        %223 = sbr.rel (%p221) target = $region36
      $region35: #{tpu_custom_call.1} parent=11 // pred_region
        _
      $region36: #{tpu_custom_call.1} parent=11 // pred_fallthru
        _
    $region12: #{tpu_custom_call.1} parent=5 // pred_fallthru
      _
    %p224 = scmp.lt.s32.totalorder %s13, 2
    // Predicated region
    $region37: #{tpu_custom_call.1} parent=5 // pred_check
      %p225 = pneg %p224
    $region38: #{tpu_custom_call.1} parent=5 // pred_check_branch
      %227 = sbr.rel (%p225) target = $region40
    $region39: #{tpu_custom_call.1} parent=5 // pred_region
      // Predicated region
      $region41: #{tpu_custom_call.1} parent=39 // pred_check
        %p228 = pneg %p33
      $region42: #{tpu_custom_call.1} parent=39 // pred_check_branch
        %230 = sbr.rel (%p228) target = $region44
      $region43: #{tpu_custom_call.1} parent=39 // pred_region
        %p231 = scmp.lt.s32.totalorder %s13, 1
        %s232 = scalar_select %p231, %s13, 1
        %s233 = smul.addr %s232, 32
        %s234 = smul.addr %s233, 8
        %s235 = scalar_lea.vmem %s0, %s234
      $region44: #{tpu_custom_call.1} parent=39 // pred_fallthru
        _
    $region40: #{tpu_custom_call.1} parent=5 // pred_fallthru
      _
    %p236 = scmp.le.s32.totalorder 1, %s13
    %p237 = scmp.lt.s32.totalorder %s13, 3
    %p238 = pnand %p236, %p237
    %p239 = pneg %p238
    // Predicated region
    $region45: #{tpu_custom_call.1} parent=5 // pred_check
      _
    $region46: #{tpu_custom_call.1} parent=5 // pred_check_branch
      %241 = sbr.rel (%p238) target = $region48
    $region47: #{tpu_custom_call.1} parent=5 // pred_region
      %s242 = ssub.s32 %s13, 1
      %p243 = scmp.lt.s32.totalorder %s18, 1
      %s244 = scalar_select %p243, %s18, 1
      %s245 = smul.addr %s244, 32
      %s246 = smul.addr %s245, 8
      %s247 = scalar_lea.vmem %s0, %s246
      %p248 = pneg %p39
      %p249 = pneg %p36
      %p250 = pneg %p60
      %p251 = pneg %p57
      %p252 = pneg %p81
      %p253 = pneg %p78
      %p254 = pneg %p102
      %p255 = pneg %p99
      %p256 = pneg %p123
      %p257 = pneg %p120
      %p258 = pneg %p144
      %p259 = pneg %p141
      %p260 = pneg %p165
      %p261 = pneg %p162
      %p262 = pneg %p191
      %p263 = pneg %p188
      %p264 = scmp.lt.s32.totalorder %s18, 1
      %s265 = scalar_select %p264, %s18, 1
      %s266 = smul.addr %s265, 32
      %s267 = smul.addr %s266, 8
      %s268 = scalar_lea.vmem %s7, %s267
      %p269 = scmp.lt.s32.totalorder %s18, 1
      %s270 = scalar_select %p269, %s18, 1
      %s271 = smul.addr %s270, 32
      %s272 = smul.addr %s271, 8
      %s273 = scalar_lea.vmem %s0, %s272
      %p274 = scmp.lt.s32.totalorder %s18, 1
      %s275 = scalar_select %p274, %s18, 1
      %s276 = smul.addr %s275, 32
      %s277 = smul.addr %s276, 8
      %s278 = scalar_lea.vmem %s7, %s277
      %vm280 = vcmask 31744
      %281 = vst.msk [vmem:[#allocation2] sm:$0xff] %vm280, 0.0
      %282 = vst.msk [vmem:[#allocation2 + $0x8] sm:$0xff] %vm280, 0.0
      %vm283 = vcmask 25600
      %284 = vst.msk [vmem:[#allocation2 + $0x10] sm:$0x3] %vm283, 0.0
      %285 = vst.msk [vmem:[#allocation2 + $0x18] sm:$0xff] %vm280, 0.0
      %286 = vst.msk [vmem:[#allocation2 + $0x20] sm:$0xff] %vm280, 0.0
      %287 = vst.msk [vmem:[#allocation2 + $0x28] sm:$0x3] %vm283, 0.0
      %288 = vst.msk [vmem:[#allocation2 + $0x30] sm:$0xff] %vm280, 0.0
      %289 = vst.msk [vmem:[#allocation2 + $0x38] sm:$0xff] %vm280, 0.0
      %290 = vst.msk [vmem:[#allocation2 + $0x40] sm:$0x3] %vm283, 0.0
      %291 = vst.msk [vmem:[#allocation2 + $0x48] sm:$0xff] %vm280, 0.0
      %292 = vst.msk [vmem:[#allocation2 + $0x50] sm:$0xff] %vm280, 0.0
      %293 = vst.msk [vmem:[#allocation2 + $0x58] sm:$0x3] %vm283, 0.0
      %294 = vst.msk [vmem:[#allocation2 + $0x60] sm:$0xff] %vm280, 0.0
      %295 = vst.msk [vmem:[#allocation2 + $0x68] sm:$0xff] %vm280, 0.0
      %296 = vst.msk [vmem:[#allocation2 + $0x70] sm:$0x3] %vm283, 0.0
      %297 = vst.msk [vmem:[#allocation2 + $0x78] sm:$0xff] %vm280, 0.0
      %298 = vst.msk [vmem:[#allocation2 + $0x80] sm:$0xff] %vm280, 0.0
      %299 = vst.msk [vmem:[#allocation2 + $0x88] sm:$0x3] %vm283, 0.0
      %300 = vst.msk [vmem:[#allocation2 + $0x90] sm:$0xff] %vm280, 0.0
      %301 = vst.msk [vmem:[#allocation2 + $0x98] sm:$0xff] %vm280, 0.0
      %302 = vst.msk [vmem:[#allocation2 + $0xa0] sm:$0x3] %vm283, 0.0
      %303 = vst.msk [vmem:[#allocation2 + $0xa8] sm:$0xff] %vm280, 0.0
      %304 = vst.msk [vmem:[#allocation2 + $0xb0] sm:$0xff] %vm280, 0.0
      %305 = vst.msk [vmem:[#allocation2 + $0xb8] sm:$0x3] %vm283, 0.0
      %306 = vst.msk [vmem:[#allocation2 + $0xc0] sm:$0xff] %vm280, 0.0
      %307 = vst.msk [vmem:[#allocation2 + $0xc8] sm:$0xff] %vm280, 0.0
      %308 = vst.msk [vmem:[#allocation2 + $0xd0] sm:$0x3] %vm283, 0.0
      %309 = vst.msk [vmem:[#allocation2 + $0xd8] sm:$0xff] %vm280, 0.0
      %310 = vst.msk [vmem:[#allocation2 + $0xe0] sm:$0xff] %vm280, 0.0
      %311 = vst.msk [vmem:[#allocation2 + $0xe8] sm:$0x3] %vm283, 0.0
      %312 = vst.msk [vmem:[#allocation2 + $0xf0] sm:$0xff] %vm280, 0.0
      %313 = vst.msk [vmem:[#allocation2 + $0xf8] sm:$0xff] %vm280, 0.0
      %314 = vst.msk [vmem:[#allocation2 + $0x100] sm:$0x3] %vm283, 0.0
      %315 = vst.msk [vmem:[#allocation2 + $0x108] sm:$0xff] %vm280, 0.0
      %316 = vst.msk [vmem:[#allocation2 + $0x110] sm:$0xff] %vm280, 0.0
      %317 = vst.msk [vmem:[#allocation2 + $0x118] sm:$0x3] %vm283, 0.0
      %318 = vst.msk [vmem:[#allocation2 + $0x120] sm:$0xff] %vm280, 0.0
      %319 = vst.msk [vmem:[#allocation2 + $0x128] sm:$0xff] %vm280, 0.0
      %320 = vst.msk [vmem:[#allocation2 + $0x130] sm:$0x3] %vm283, 0.0
      %321 = vst.msk [vmem:[#allocation2 + $0x138] sm:$0xff] %vm280, 0.0
      %322 = vst.msk [vmem:[#allocation2 + $0x140] sm:$0xff] %vm280, 0.0
      %323 = vst.msk [vmem:[#allocation2 + $0x148] sm:$0x3] %vm283, 0.0
      %324 = vst.msk [vmem:[#allocation2 + $0x150] sm:$0xff] %vm280, 0.0
      %325 = vst.msk [vmem:[#allocation2 + $0x158] sm:$0xff] %vm280, 0.0
      %326 = vst.msk [vmem:[#allocation2 + $0x160] sm:$0x3] %vm283, 0.0
      %327 = vst.msk [vmem:[#allocation2 + $0x168] sm:$0xff] %vm280, 0.0
      %328 = vst.msk [vmem:[#allocation2 + $0x170] sm:$0xff] %vm280, 0.0
      %329 = vst.msk [vmem:[#allocation2 + $0x178] sm:$0x3] %vm283, 0.0
      %330 = vst.msk [vmem:[#allocation2 + $0x180] sm:$0xff] %vm280, 0.0
      %331 = vst.msk [vmem:[#allocation2 + $0x188] sm:$0xff] %vm280, 0.0
      %332 = vst.msk [vmem:[#allocation2 + $0x190] sm:$0x3] %vm283, 0.0
      %333 = vst.msk [vmem:[#allocation2 + $0x198] sm:$0xff] %vm280, 0.0
      %334 = vst.msk [vmem:[#allocation2 + $0x1a0] sm:$0xff] %vm280, 0.0
      %335 = vst.msk [vmem:[#allocation2 + $0x1a8] sm:$0x3] %vm283, 0.0
      %v336 = vld [vmem:[%s273] sm:$0xff]
      %v337 = vld [vmem:[%s273 + $0x8] sm:$0xff]
      %v338 = vld [vmem:[%s273 + $0x10] sm:$0xff]
      %v339 = vld [vmem:[%s273 + $0x18] sm:$0xff]
      %v340 = vld [vmem:[%s273 + $0x20] sm:$0xff]
      %v341 = vld [vmem:[%s273 + $0x28] sm:$0xff]
      %v342 = vld [vmem:[%s273 + $0x30] sm:$0xff]
      %v343 = vld [vmem:[%s273 + $0x38] sm:$0xff]
      %v344 = vld [vmem:[%s273 + $0x40] sm:$0xff]
      %v345 = vld [vmem:[%s273 + $0x48] sm:$0xff]
      %v346 = vld [vmem:[%s273 + $0x50] sm:$0xff]
      %v347 = vld [vmem:[%s273 + $0x58] sm:$0xff]
      %v348 = vld [vmem:[%s273 + $0x60] sm:$0xff]
      %v349 = vld [vmem:[%s273 + $0x68] sm:$0xff]
      %v350 = vld [vmem:[%s273 + $0x70] sm:$0xff]
      %v351 = vld [vmem:[%s273 + $0x78] sm:$0xff]
      %v352 = vld [vmem:[%s273 + $0x80] sm:$0xff]
      %v353 = vld [vmem:[%s273 + $0x88] sm:$0xff]
      %v354 = vld [vmem:[%s273 + $0x90] sm:$0xff]
      %v355 = vld [vmem:[%s273 + $0x98] sm:$0xff]
      %v356 = vld [vmem:[%s273 + $0xa0] sm:$0xff]
      %v357 = vld [vmem:[%s273 + $0xa8] sm:$0xff]
      %v358 = vld [vmem:[%s273 + $0xb0] sm:$0xff]
      %v359 = vld [vmem:[%s273 + $0xb8] sm:$0xff]
      %v360 = vld [vmem:[%s273 + $0xc0] sm:$0xff]
      %v361 = vld [vmem:[%s273 + $0xc8] sm:$0xff]
      %v362 = vld [vmem:[%s273 + $0xd0] sm:$0xff]
      %v363 = vld [vmem:[%s273 + $0xd8] sm:$0xff]
      %v364 = vld [vmem:[%s273 + $0xe0] sm:$0xff]
      %v365 = vld [vmem:[%s273 + $0xe8] sm:$0xff]
      %v366 = vld [vmem:[%s273 + $0xf0] sm:$0xff]
      %v367 = vld [vmem:[%s273 + $0xf8] sm:$0xff]
      %s368 = scalar_lea.vmem [#allocation2], 24
      %369 = vst.msk [vmem:[%s368 + $0x1] sm:$0xff] %vm280, %v336
      %370 = vst.msk [vmem:[%s368 + $0x9] sm:$0xff] %vm280, %v337
      %371 = vst.msk [vmem:[%s368 + $0x19] sm:$0xff] %vm280, %v338
      %372 = vst.msk [vmem:[%s368 + $0x21] sm:$0xff] %vm280, %v339
      %373 = vst.msk [vmem:[%s368 + $0x31] sm:$0xff] %vm280, %v340
      %374 = vst.msk [vmem:[%s368 + $0x39] sm:$0xff] %vm280, %v341
      %375 = vst.msk [vmem:[%s368 + $0x49] sm:$0xff] %vm280, %v342
      %376 = vst.msk [vmem:[%s368 + $0x51] sm:$0xff] %vm280, %v343
      %377 = vst.msk [vmem:[%s368 + $0x61] sm:$0xff] %vm280, %v344
      %378 = vst.msk [vmem:[%s368 + $0x69] sm:$0xff] %vm280, %v345
      %379 = vst.msk [vmem:[%s368 + $0x79] sm:$0xff] %vm280, %v346
      %380 = vst.msk [vmem:[%s368 + $0x81] sm:$0xff] %vm280, %v347
      %381 = vst.msk [vmem:[%s368 + $0x91] sm:$0xff] %vm280, %v348
      %382 = vst.msk [vmem:[%s368 + $0x99] sm:$0xff] %vm280, %v349
      %383 = vst.msk [vmem:[%s368 + $0xa9] sm:$0xff] %vm280, %v350
      %384 = vst.msk [vmem:[%s368 + $0xb1] sm:$0xff] %vm280, %v351
      %385 = vst.msk [vmem:[%s368 + $0xc1] sm:$0xff] %vm280, %v352
      %386 = vst.msk [vmem:[%s368 + $0xc9] sm:$0xff] %vm280, %v353
      %387 = vst.msk [vmem:[%s368 + $0xd9] sm:$0xff] %vm280, %v354
      %388 = vst.msk [vmem:[%s368 + $0xe1] sm:$0xff] %vm280, %v355
      %389 = vst.msk [vmem:[%s368 + $0xf1] sm:$0xff] %vm280, %v356
      %390 = vst.msk [vmem:[%s368 + $0xf9] sm:$0xff] %vm280, %v357
      %391 = vst.msk [vmem:[%s368 + $0x109] sm:$0xff] %vm280, %v358
      %392 = vst.msk [vmem:[%s368 + $0x111] sm:$0xff] %vm280, %v359
      %393 = vst.msk [vmem:[%s368 + $0x121] sm:$0xff] %vm280, %v360
      %394 = vst.msk [vmem:[%s368 + $0x129] sm:$0xff] %vm280, %v361
      %395 = vst.msk [vmem:[%s368 + $0x139] sm:$0xff] %vm280, %v362
      %396 = vst.msk [vmem:[%s368 + $0x141] sm:$0xff] %vm280, %v363
      %397 = vst.msk [vmem:[%s368 + $0x151] sm:$0xff] %vm280, %v364
      %398 = vst.msk [vmem:[%s368 + $0x159] sm:$0xff] %vm280, %v365
      %399 = vst.msk [vmem:[%s368 + $0x169] sm:$0xff] %vm280, %v366
      %400 = vst.msk [vmem:[%s368 + $0x171] sm:$0xff] %vm280, %v367
      %v401 = vld [vmem:[#allocation2] sm:$0xff]
      %v402 = vld [vmem:[#allocation2 + $0x8] sm:$0xff]
      %v403 = vld [vmem:[#allocation2 + $0x18] sm:$0xff]
      %v404 = vld [vmem:[#allocation2 + $0x20] sm:$0xff]
      %v405 = vld [vmem:[#allocation2 + $0x30] sm:$0xff]
      %v406 = vld [vmem:[#allocation2 + $0x38] sm:$0xff]
      %v407 = vld [vmem:[#allocation2 + $0x48] sm:$0xff]
      %v408 = vld [vmem:[#allocation2 + $0x50] sm:$0xff]
      %v409 = vld [vmem:[#allocation2 + $0x60] sm:$0xff]
      %v410 = vld [vmem:[#allocation2 + $0x68] sm:$0xff]
      %v411 = vld [vmem:[#allocation2 + $0x78] sm:$0xff]
      %v412 = vld [vmem:[#allocation2 + $0x80] sm:$0xff]
      %v413 = vld [vmem:[#allocation2 + $0x90] sm:$0xff]
      %v414 = vld [vmem:[#allocation2 + $0x98] sm:$0xff]
      %v415 = vld [vmem:[#allocation2 + $0xa8] sm:$0xff]
      %v416 = vld [vmem:[#allocation2 + $0xb0] sm:$0xff]
      %v417 = vld [vmem:[#allocation2 + $0xc0] sm:$0xff]
      %v418 = vld [vmem:[#allocation2 + $0xc8] sm:$0xff]
      %v419 = vld [vmem:[#allocation2 + $0xd8] sm:$0xff]
      %v420 = vld [vmem:[#allocation2 + $0xe0] sm:$0xff]
      %v421 = vld [vmem:[#allocation2 + $0xf0] sm:$0xff]
      %v422 = vld [vmem:[#allocation2 + $0xf8] sm:$0xff]
      %v423 = vld [vmem:[#allocation2 + $0x108] sm:$0xff]
      %v424 = vld [vmem:[#allocation2 + $0x110] sm:$0xff]
      %v425 = vld [vmem:[#allocation2 + $0x120] sm:$0xff]
      %v426 = vld [vmem:[#allocation2 + $0x128] sm:$0xff]
      %v427 = vld [vmem:[#allocation2 + $0x138] sm:$0xff]
      %v428 = vld [vmem:[#allocation2 + $0x140] sm:$0xff]
      %v429 = vld [vmem:[#allocation2 + $0x150] sm:$0xff]
      %v430 = vld [vmem:[#allocation2 + $0x158] sm:$0xff]
      %v431 = vld [vmem:[#allocation2 + $0x168] sm:$0xff]
      %v432 = vld [vmem:[#allocation2 + $0x170] sm:$0xff]
      %v433 = vpack.c.bf16 %v402, %v401
      %v434 = vpack.c.bf16 %v404, %v403
      %v435 = vpack.c.bf16 %v406, %v405
      %v436 = vpack.c.bf16 %v408, %v407
      %v437 = vpack.c.bf16 %v410, %v409
      %v438 = vpack.c.bf16 %v412, %v411
      %v439 = vpack.c.bf16 %v414, %v413
      %v440 = vpack.c.bf16 %v416, %v415
      %v441 = vpack.c.bf16 %v418, %v417
      %v442 = vpack.c.bf16 %v420, %v419
      %v443 = vpack.c.bf16 %v422, %v421
      %v444 = vpack.c.bf16 %v424, %v423
      %v445 = vpack.c.bf16 %v426, %v425
      %v446 = vpack.c.bf16 %v428, %v427
      %v447 = vpack.c.bf16 %v430, %v429
      %v448 = vpack.c.bf16 %v432, %v431
      %v449 = vld [vmem:[#allocation2 + $0x1] sm:$0xff]
      %v450 = vld [vmem:[#allocation2 + $0x9] sm:$0xff]
      %v451 = vld [vmem:[#allocation2 + $0x19] sm:$0xff]
      %v452 = vld [vmem:[#allocation2 + $0x21] sm:$0xff]
      %v453 = vld [vmem:[#allocation2 + $0x31] sm:$0xff]
      %v454 = vld [vmem:[#allocation2 + $0x39] sm:$0xff]
      %v455 = vld [vmem:[#allocation2 + $0x49] sm:$0xff]
      %v456 = vld [vmem:[#allocation2 + $0x51] sm:$0xff]
      %v457 = vld [vmem:[#allocation2 + $0x61] sm:$0xff]
      %v458 = vld [vmem:[#allocation2 + $0x69] sm:$0xff]
      %v459 = vld [vmem:[#allocation2 + $0x79] sm:$0xff]
      %v460 = vld [vmem:[#allocation2 + $0x81] sm:$0xff]
      %v461 = vld [vmem:[#allocation2 + $0x91] sm:$0xff]
      %v462 = vld [vmem:[#allocation2 + $0x99] sm:$0xff]
      %v463 = vld [vmem:[#allocation2 + $0xa9] sm:$0xff]
      %v464 = vld [vmem:[#allocation2 + $0xb1] sm:$0xff]
      %v465 = vld [vmem:[#allocation2 + $0xc1] sm:$0xff]
      %v466 = vld [vmem:[#allocation2 + $0xc9] sm:$0xff]
      %v467 = vld [vmem:[#allocation2 + $0xd9] sm:$0xff]
      %v468 = vld [vmem:[#allocation2 + $0xe1] sm:$0xff]
      %v469 = vld [vmem:[#allocation2 + $0xf1] sm:$0xff]
      %v470 = vld [vmem:[#allocation2 + $0xf9] sm:$0xff]
      %v471 = vld [vmem:[#allocation2 + $0x109] sm:$0xff]
      %v472 = vld [vmem:[#allocation2 + $0x111] sm:$0xff]
      %v473 = vld [vmem:[#allocation2 + $0x121] sm:$0xff]
      %v474 = vld [vmem:[#allocation2 + $0x129] sm:$0xff]
      %v475 = vld [vmem:[#allocation2 + $0x139] sm:$0xff]
      %v476 = vld [vmem:[#allocation2 + $0x141] sm:$0xff]
      %v477 = vld [vmem:[#allocation2 + $0x151] sm:$0xff]
      %v478 = vld [vmem:[#allocation2 + $0x159] sm:$0xff]
      %v479 = vld [vmem:[#allocation2 + $0x169] sm:$0xff]
      %v480 = vld [vmem:[#allocation2 + $0x171] sm:$0xff]
      %v481 = vpack.c.bf16 %v450, %v449
      %v482 = vpack.c.bf16 %v452, %v451
      %v483 = vpack.c.bf16 %v454, %v453
      %v484 = vpack.c.bf16 %v456, %v455
      %v485 = vpack.c.bf16 %v458, %v457
      %v486 = vpack.c.bf16 %v460, %v459
      %v487 = vpack.c.bf16 %v462, %v461
      %v488 = vpack.c.bf16 %v464, %v463
      %v489 = vpack.c.bf16 %v466, %v465
      %v490 = vpack.c.bf16 %v468, %v467
      %v491 = vpack.c.bf16 %v470, %v469
      %v492 = vpack.c.bf16 %v472, %v471
      %v493 = vpack.c.bf16 %v474, %v473
      %v494 = vpack.c.bf16 %v476, %v475
      %v495 = vpack.c.bf16 %v478, %v477
      %v496 = vpack.c.bf16 %v480, %v479
      %v497 = vld [vmem:[#allocation2 + $0x2] sm:$0xff]
      %v498 = vld [vmem:[#allocation2 + $0xa] sm:$0xff]
      %v499 = vld [vmem:[#allocation2 + $0x1a] sm:$0xff]
      %v500 = vld [vmem:[#allocation2 + $0x22] sm:$0xff]
      %v501 = vld [vmem:[#allocation2 + $0x32] sm:$0xff]
      %v502 = vld [vmem:[#allocation2 + $0x3a] sm:$0xff]
      %v503 = vld [vmem:[#allocation2 + $0x4a] sm:$0xff]
      %v504 = vld [vmem:[#allocation2 + $0x52] sm:$0xff]
      %v505 = vld [vmem:[#allocation2 + $0x62] sm:$0xff]
      %v506 = vld [vmem:[#allocation2 + $0x6a] sm:$0xff]
      %v507 = vld [vmem:[#allocation2 + $0x7a] sm:$0xff]
      %v508 = vld [vmem:[#allocation2 + $0x82] sm:$0xff]
      %v509 = vld [vmem:[#allocation2 + $0x92] sm:$0xff]
      %v510 = vld [vmem:[#allocation2 + $0x9a] sm:$0xff]
      %v511 = vld [vmem:[#allocation2 + $0xaa] sm:$0xff]
      %v512 = vld [vmem:[#allocation2 + $0xb2] sm:$0xff]
      %v513 = vld [vmem:[#allocation2 + $0xc2] sm:$0xff]
      %v514 = vld [vmem:[#allocation2 + $0xca] sm:$0xff]
      %v515 = vld [vmem:[#allocation2 + $0xda] sm:$0xff]
      %v516 = vld [vmem:[#allocation2 + $0xe2] sm:$0xff]
      %v517 = vld [vmem:[#allocation2 + $0xf2] sm:$0xff]
      %v518 = vld [vmem:[#allocation2 + $0xfa] sm:$0xff]
      %v519 = vld [vmem:[#allocation2 + $0x10a] sm:$0xff]
      %v520 = vld [vmem:[#allocation2 + $0x112] sm:$0xff]
      %v521 = vld [vmem:[#allocation2 + $0x122] sm:$0xff]
      %v522 = vld [vmem:[#allocation2 + $0x12a] sm:$0xff]
      %v523 = vld [vmem:[#allocation2 + $0x13a] sm:$0xff]
      %v524 = vld [vmem:[#allocation2 + $0x142] sm:$0xff]
      %v525 = vld [vmem:[#allocation2 + $0x152] sm:$0xff]
      %v526 = vld [vmem:[#allocation2 + $0x15a] sm:$0xff]
      %v527 = vld [vmem:[#allocation2 + $0x16a] sm:$0xff]
      %v528 = vld [vmem:[#allocation2 + $0x172] sm:$0xff]
      %v529 = vpack.c.bf16 %v498, %v497
      %v530 = vpack.c.bf16 %v500, %v499
      %v531 = vpack.c.bf16 %v502, %v501
      %v532 = vpack.c.bf16 %v504, %v503
      %v533 = vpack.c.bf16 %v506, %v505
      %v534 = vpack.c.bf16 %v508, %v507
      %v535 = vpack.c.bf16 %v510, %v509
      %v536 = vpack.c.bf16 %v512, %v511
      %v537 = vpack.c.bf16 %v514, %v513
      %v538 = vpack.c.bf16 %v516, %v515
      %v539 = vpack.c.bf16 %v518, %v517
      %v540 = vpack.c.bf16 %v520, %v519
      %v541 = vpack.c.bf16 %v522, %v521
      %v542 = vpack.c.bf16 %v524, %v523
      %v543 = vpack.c.bf16 %v526, %v525
      %v544 = vpack.c.bf16 %v528, %v527
      %v545 = vld [vmem:[%s368] sm:$0xff]
      %v546 = vld [vmem:[%s368 + $0x8] sm:$0xff]
      %v547 = vld [vmem:[%s368 + $0x18] sm:$0xff]
      %v548 = vld [vmem:[%s368 + $0x20] sm:$0xff]
      %v549 = vld [vmem:[%s368 + $0x30] sm:$0xff]
      %v550 = vld [vmem:[%s368 + $0x38] sm:$0xff]
      %v551 = vld [vmem:[%s368 + $0x48] sm:$0xff]
      %v552 = vld [vmem:[%s368 + $0x50] sm:$0xff]
      %v553 = vld [vmem:[%s368 + $0x60] sm:$0xff]
      %v554 = vld [vmem:[%s368 + $0x68] sm:$0xff]
      %v555 = vld [vmem:[%s368 + $0x78] sm:$0xff]
      %v556 = vld [vmem:[%s368 + $0x80] sm:$0xff]
      %v557 = vld [vmem:[%s368 + $0x90] sm:$0xff]
      %v558 = vld [vmem:[%s368 + $0x98] sm:$0xff]
      %v559 = vld [vmem:[%s368 + $0xa8] sm:$0xff]
      %v560 = vld [vmem:[%s368 + $0xb0] sm:$0xff]
      %v561 = vld [vmem:[%s368 + $0xc0] sm:$0xff]
      %v562 = vld [vmem:[%s368 + $0xc8] sm:$0xff]
      %v563 = vld [vmem:[%s368 + $0xd8] sm:$0xff]
      %v564 = vld [vmem:[%s368 + $0xe0] sm:$0xff]
      %v565 = vld [vmem:[%s368 + $0xf0] sm:$0xff]
      %v566 = vld [vmem:[%s368 + $0xf8] sm:$0xff]
      %v567 = vld [vmem:[%s368 + $0x108] sm:$0xff]
      %v568 = vld [vmem:[%s368 + $0x110] sm:$0xff]
      %v569 = vld [vmem:[%s368 + $0x120] sm:$0xff]
      %v570 = vld [vmem:[%s368 + $0x128] sm:$0xff]
      %v571 = vld [vmem:[%s368 + $0x138] sm:$0xff]
      %v572 = vld [vmem:[%s368 + $0x140] sm:$0xff]
      %v573 = vld [vmem:[%s368 + $0x150] sm:$0xff]
      %v574 = vld [vmem:[%s368 + $0x158] sm:$0xff]
      %v575 = vld [vmem:[%s368 + $0x168] sm:$0xff]
      %v576 = vld [vmem:[%s368 + $0x170] sm:$0xff]
      %v577 = vpack.c.bf16 %v546, %v545
      %v578 = vpack.c.bf16 %v548, %v547
      %v579 = vpack.c.bf16 %v550, %v549
      %v580 = vpack.c.bf16 %v552, %v551
      %v581 = vpack.c.bf16 %v554, %v553
      %v582 = vpack.c.bf16 %v556, %v555
      %v583 = vpack.c.bf16 %v558, %v557
      %v584 = vpack.c.bf16 %v560, %v559
      %v585 = vpack.c.bf16 %v562, %v561
      %v586 = vpack.c.bf16 %v564, %v563
      %v587 = vpack.c.bf16 %v566, %v565
      %v588 = vpack.c.bf16 %v568, %v567
      %v589 = vpack.c.bf16 %v570, %v569
      %v590 = vpack.c.bf16 %v572, %v571
      %v591 = vpack.c.bf16 %v574, %v573
      %v592 = vpack.c.bf16 %v576, %v575
      %v593 = vld [vmem:[%s368 + $0x1] sm:$0xff]
      %v594 = vld [vmem:[%s368 + $0x9] sm:$0xff]
      %v595 = vld [vmem:[%s368 + $0x19] sm:$0xff]
      %v596 = vld [vmem:[%s368 + $0x21] sm:$0xff]
      %v597 = vld [vmem:[%s368 + $0x31] sm:$0xff]
      %v598 = vld [vmem:[%s368 + $0x39] sm:$0xff]
      %v599 = vld [vmem:[%s368 + $0x49] sm:$0xff]
      %v600 = vld [vmem:[%s368 + $0x51] sm:$0xff]
      %v601 = vld [vmem:[%s368 + $0x61] sm:$0xff]
      %v602 = vld [vmem:[%s368 + $0x69] sm:$0xff]
      %v603 = vld [vmem:[%s368 + $0x79] sm:$0xff]
      %v604 = vld [vmem:[%s368 + $0x81] sm:$0xff]
      %v605 = vld [vmem:[%s368 + $0x91] sm:$0xff]
      %v606 = vld [vmem:[%s368 + $0x99] sm:$0xff]
      %v607 = vld [vmem:[%s368 + $0xa9] sm:$0xff]
      %v608 = vld [vmem:[%s368 + $0xb1] sm:$0xff]
      %v609 = vld [vmem:[%s368 + $0xc1] sm:$0xff]
      %v610 = vld [vmem:[%s368 + $0xc9] sm:$0xff]
      %v611 = vld [vmem:[%s368 + $0xd9] sm:$0xff]
      %v612 = vld [vmem:[%s368 + $0xe1] sm:$0xff]
      %v613 = vld [vmem:[%s368 + $0xf1] sm:$0xff]
      %v614 = vld [vmem:[%s368 + $0xf9] sm:$0xff]
      %v615 = vld [vmem:[%s368 + $0x109] sm:$0xff]
      %v616 = vld [vmem:[%s368 + $0x111] sm:$0xff]
      %v617 = vld [vmem:[%s368 + $0x121] sm:$0xff]
      %v618 = vld [vmem:[%s368 + $0x129] sm:$0xff]
      %v619 = vld [vmem:[%s368 + $0x139] sm:$0xff]
      %v620 = vld [vmem:[%s368 + $0x141] sm:$0xff]
      %v621 = vld [vmem:[%s368 + $0x151] sm:$0xff]
      %v622 = vld [vmem:[%s368 + $0x159] sm:$0xff]
      %v623 = vld [vmem:[%s368 + $0x169] sm:$0xff]
      %v624 = vld [vmem:[%s368 + $0x171] sm:$0xff]
      %v625 = vpack.c.bf16 %v594, %v593
      %v626 = vpack.c.bf16 %v596, %v595
      %v627 = vpack.c.bf16 %v598, %v597
      %v628 = vpack.c.bf16 %v600, %v599
      %v629 = vpack.c.bf16 %v602, %v601
      %v630 = vpack.c.bf16 %v604, %v603
      %v631 = vpack.c.bf16 %v606, %v605
      %v632 = vpack.c.bf16 %v608, %v607
      %v633 = vpack.c.bf16 %v610, %v609
      %v634 = vpack.c.bf16 %v612, %v611
      %v635 = vpack.c.bf16 %v614, %v613
      %v636 = vpack.c.bf16 %v616, %v615
      %v637 = vpack.c.bf16 %v618, %v617
      %v638 = vpack.c.bf16 %v620, %v619
      %v639 = vpack.c.bf16 %v622, %v621
      %v640 = vpack.c.bf16 %v624, %v623
      %v641 = vld [vmem:[%s368 + $0x2] sm:$0xff]
      %v642 = vld [vmem:[%s368 + $0xa] sm:$0xff]
      %v643 = vld [vmem:[%s368 + $0x1a] sm:$0xff]
      %v644 = vld [vmem:[%s368 + $0x22] sm:$0xff]
      %v645 = vld [vmem:[%s368 + $0x32] sm:$0xff]
      %v646 = vld [vmem:[%s368 + $0x3a] sm:$0xff]
      %v647 = vld [vmem:[%s368 + $0x4a] sm:$0xff]
      %v648 = vld [vmem:[%s368 + $0x52] sm:$0xff]
      %v649 = vld [vmem:[%s368 + $0x62] sm:$0xff]
      %v650 = vld [vmem:[%s368 + $0x6a] sm:$0xff]
      %v651 = vld [vmem:[%s368 + $0x7a] sm:$0xff]
      %v652 = vld [vmem:[%s368 + $0x82] sm:$0xff]
      %v653 = vld [vmem:[%s368 + $0x92] sm:$0xff]
      %v654 = vld [vmem:[%s368 + $0x9a] sm:$0xff]
      %v655 = vld [vmem:[%s368 + $0xaa] sm:$0xff]
      %v656 = vld [vmem:[%s368 + $0xb2] sm:$0xff]
      %v657 = vld [vmem:[%s368 + $0xc2] sm:$0xff]
      %v658 = vld [vmem:[%s368 + $0xca] sm:$0xff]
      %v659 = vld [vmem:[%s368 + $0xda] sm:$0xff]
      %v660 = vld [vmem:[%s368 + $0xe2] sm:$0xff]
      %v661 = vld [vmem:[%s368 + $0xf2] sm:$0xff]
      %v662 = vld [vmem:[%s368 + $0xfa] sm:$0xff]
      %v663 = vld [vmem:[%s368 + $0x10a] sm:$0xff]
      %v664 = vld [vmem:[%s368 + $0x112] sm:$0xff]
      %v665 = vld [vmem:[%s368 + $0x122] sm:$0xff]
      %v666 = vld [vmem:[%s368 + $0x12a] sm:$0xff]
      %v667 = vld [vmem:[%s368 + $0x13a] sm:$0xff]
      %v668 = vld [vmem:[%s368 + $0x142] sm:$0xff]
      %v669 = vld [vmem:[%s368 + $0x152] sm:$0xff]
      %v670 = vld [vmem:[%s368 + $0x15a] sm:$0xff]
      %v671 = vld [vmem:[%s368 + $0x16a] sm:$0xff]
      %v672 = vld [vmem:[%s368 + $0x172] sm:$0xff]
      %v673 = vpack.c.bf16 %v642, %v641
      %v674 = vpack.c.bf16 %v644, %v643
      %v675 = vpack.c.bf16 %v646, %v645
      %v676 = vpack.c.bf16 %v648, %v647
      %v677 = vpack.c.bf16 %v650, %v649
      %v678 = vpack.c.bf16 %v652, %v651
      %v679 = vpack.c.bf16 %v654, %v653
      %v680 = vpack.c.bf16 %v656, %v655
      %v681 = vpack.c.bf16 %v658, %v657
      %v682 = vpack.c.bf16 %v660, %v659
      %v683 = vpack.c.bf16 %v662, %v661
      %v684 = vpack.c.bf16 %v664, %v663
      %v685 = vpack.c.bf16 %v666, %v665
      %v686 = vpack.c.bf16 %v668, %v667
      %v687 = vpack.c.bf16 %v670, %v669
      %v688 = vpack.c.bf16 %v672, %v671
      %s689 = scalar_lea.vmem [#allocation2], 48
      %v690 = vld [vmem:[%s689] sm:$0xff]
      %v691 = vld [vmem:[%s689 + $0x8] sm:$0xff]
      %v692 = vld [vmem:[%s689 + $0x18] sm:$0xff]
      %v693 = vld [vmem:[%s689 + $0x20] sm:$0xff]
      %v694 = vld [vmem:[%s689 + $0x30] sm:$0xff]
      %v695 = vld [vmem:[%s689 + $0x38] sm:$0xff]
      %v696 = vld [vmem:[%s689 + $0x48] sm:$0xff]
      %v697 = vld [vmem:[%s689 + $0x50] sm:$0xff]
      %v698 = vld [vmem:[%s689 + $0x60] sm:$0xff]
      %v699 = vld [vmem:[%s689 + $0x68] sm:$0xff]
      %v700 = vld [vmem:[%s689 + $0x78] sm:$0xff]
      %v701 = vld [vmem:[%s689 + $0x80] sm:$0xff]
      %v702 = vld [vmem:[%s689 + $0x90] sm:$0xff]
      %v703 = vld [vmem:[%s689 + $0x98] sm:$0xff]
      %v704 = vld [vmem:[%s689 + $0xa8] sm:$0xff]
      %v705 = vld [vmem:[%s689 + $0xb0] sm:$0xff]
      %v706 = vld [vmem:[%s689 + $0xc0] sm:$0xff]
      %v707 = vld [vmem:[%s689 + $0xc8] sm:$0xff]
      %v708 = vld [vmem:[%s689 + $0xd8] sm:$0xff]
      %v709 = vld [vmem:[%s689 + $0xe0] sm:$0xff]
      %v710 = vld [vmem:[%s689 + $0xf0] sm:$0xff]
      %v711 = vld [vmem:[%s689 + $0xf8] sm:$0xff]
      %v712 = vld [vmem:[%s689 + $0x108] sm:$0xff]
      %v713 = vld [vmem:[%s689 + $0x110] sm:$0xff]
      %v714 = vld [vmem:[%s689 + $0x120] sm:$0xff]
      %v715 = vld [vmem:[%s689 + $0x128] sm:$0xff]
      %v716 = vld [vmem:[%s689 + $0x138] sm:$0xff]
      %v717 = vld [vmem:[%s689 + $0x140] sm:$0xff]
      %v718 = vld [vmem:[%s689 + $0x150] sm:$0xff]
      %v719 = vld [vmem:[%s689 + $0x158] sm:$0xff]
      %v720 = vld [vmem:[%s689 + $0x168] sm:$0xff]
      %v721 = vld [vmem:[%s689 + $0x170] sm:$0xff]
      %v722 = vpack.c.bf16 %v691, %v690
      %v723 = vpack.c.bf16 %v693, %v692
      %v724 = vpack.c.bf16 %v695, %v694
      %v725 = vpack.c.bf16 %v697, %v696
      %v726 = vpack.c.bf16 %v699, %v698
      %v727 = vpack.c.bf16 %v701, %v700
      %v728 = vpack.c.bf16 %v703, %v702
      %v729 = vpack.c.bf16 %v705, %v704
      %v730 = vpack.c.bf16 %v707, %v706
      %v731 = vpack.c.bf16 %v709, %v708
      %v732 = vpack.c.bf16 %v711, %v710
      %v733 = vpack.c.bf16 %v713, %v712
      %v734 = vpack.c.bf16 %v715, %v714
      %v735 = vpack.c.bf16 %v717, %v716
      %v736 = vpack.c.bf16 %v719, %v718
      %v737 = vpack.c.bf16 %v721, %v720
      %v738 = vld [vmem:[%s689 + $0x1] sm:$0xff]
      %v739 = vld [vmem:[%s689 + $0x9] sm:$0xff]
      %v740 = vld [vmem:[%s689 + $0x19] sm:$0xff]
      %v741 = vld [vmem:[%s689 + $0x21] sm:$0xff]
      %v742 = vld [vmem:[%s689 + $0x31] sm:$0xff]
      %v743 = vld [vmem:[%s689 + $0x39] sm:$0xff]
      %v744 = vld [vmem:[%s689 + $0x49] sm:$0xff]
      %v745 = vld [vmem:[%s689 + $0x51] sm:$0xff]
      %v746 = vld [vmem:[%s689 + $0x61] sm:$0xff]
      %v747 = vld [vmem:[%s689 + $0x69] sm:$0xff]
      %v748 = vld [vmem:[%s689 + $0x79] sm:$0xff]
      %v749 = vld [vmem:[%s689 + $0x81] sm:$0xff]
      %v750 = vld [vmem:[%s689 + $0x91] sm:$0xff]
      %v751 = vld [vmem:[%s689 + $0x99] sm:$0xff]
      %v752 = vld [vmem:[%s689 + $0xa9] sm:$0xff]
      %v753 = vld [vmem:[%s689 + $0xb1] sm:$0xff]
      %v754 = vld [vmem:[%s689 + $0xc1] sm:$0xff]
      %v755 = vld [vmem:[%s689 + $0xc9] sm:$0xff]
      %v756 = vld [vmem:[%s689 + $0xd9] sm:$0xff]
      %v757 = vld [vmem:[%s689 + $0xe1] sm:$0xff]
      %v758 = vld [vmem:[%s689 + $0xf1] sm:$0xff]
      %v759 = vld [vmem:[%s689 + $0xf9] sm:$0xff]
      %v760 = vld [vmem:[%s689 + $0x109] sm:$0xff]
      %v761 = vld [vmem:[%s689 + $0x111] sm:$0xff]
      %v762 = vld [vmem:[%s689 + $0x121] sm:$0xff]
      %v763 = vld [vmem:[%s689 + $0x129] sm:$0xff]
      %v764 = vld [vmem:[%s689 + $0x139] sm:$0xff]
      %v765 = vld [vmem:[%s689 + $0x141] sm:$0xff]
      %v766 = vld [vmem:[%s689 + $0x151] sm:$0xff]
      %v767 = vld [vmem:[%s689 + $0x159] sm:$0xff]
      %v768 = vld [vmem:[%s689 + $0x169] sm:$0xff]
      %v769 = vld [vmem:[%s689 + $0x171] sm:$0xff]
      %v770 = vpack.c.bf16 %v739, %v738
      %v771 = vpack.c.bf16 %v741, %v740
      %v772 = vpack.c.bf16 %v743, %v742
      %v773 = vpack.c.bf16 %v745, %v744
      %v774 = vpack.c.bf16 %v747, %v746
      %v775 = vpack.c.bf16 %v749, %v748
      %v776 = vpack.c.bf16 %v751, %v750
      %v777 = vpack.c.bf16 %v753, %v752
      %v778 = vpack.c.bf16 %v755, %v754
      %v779 = vpack.c.bf16 %v757, %v756
      %v780 = vpack.c.bf16 %v759, %v758
      %v781 = vpack.c.bf16 %v761, %v760
      %v782 = vpack.c.bf16 %v763, %v762
      %v783 = vpack.c.bf16 %v765, %v764
      %v784 = vpack.c.bf16 %v767, %v766
      %v785 = vpack.c.bf16 %v769, %v768
      %v786 = vld [vmem:[%s689 + $0x2] sm:$0xff]
      %v787 = vld [vmem:[%s689 + $0xa] sm:$0xff]
      %v788 = vld [vmem:[%s689 + $0x1a] sm:$0xff]
      %v789 = vld [vmem:[%s689 + $0x22] sm:$0xff]
      %v790 = vld [vmem:[%s689 + $0x32] sm:$0xff]
      %v791 = vld [vmem:[%s689 + $0x3a] sm:$0xff]
      %v792 = vld [vmem:[%s689 + $0x4a] sm:$0xff]
      %v793 = vld [vmem:[%s689 + $0x52] sm:$0xff]
      %v794 = vld [vmem:[%s689 + $0x62] sm:$0xff]
      %v795 = vld [vmem:[%s689 + $0x6a] sm:$0xff]
      %v796 = vld [vmem:[%s689 + $0x7a] sm:$0xff]
      %v797 = vld [vmem:[%s689 + $0x82] sm:$0xff]
      %v798 = vld [vmem:[%s689 + $0x92] sm:$0xff]
      %v799 = vld [vmem:[%s689 + $0x9a] sm:$0xff]
      %v800 = vld [vmem:[%s689 + $0xaa] sm:$0xff]
      %v801 = vld [vmem:[%s689 + $0xb2] sm:$0xff]
      %v802 = vld [vmem:[%s689 + $0xc2] sm:$0xff]
      %v803 = vld [vmem:[%s689 + $0xca] sm:$0xff]
      %v804 = vld [vmem:[%s689 + $0xda] sm:$0xff]
      %v805 = vld [vmem:[%s689 + $0xe2] sm:$0xff]
      %v806 = vld [vmem:[%s689 + $0xf2] sm:$0xff]
      %v807 = vld [vmem:[%s689 + $0xfa] sm:$0xff]
      %v808 = vld [vmem:[%s689 + $0x10a] sm:$0xff]
      %v809 = vld [vmem:[%s689 + $0x112] sm:$0xff]
      %v810 = vld [vmem:[%s689 + $0x122] sm:$0xff]
      %v811 = vld [vmem:[%s689 + $0x12a] sm:$0xff]
      %v812 = vld [vmem:[%s689 + $0x13a] sm:$0xff]
      %v813 = vld [vmem:[%s689 + $0x142] sm:$0xff]
      %v814 = vld [vmem:[%s689 + $0x152] sm:$0xff]
      %v815 = vld [vmem:[%s689 + $0x15a] sm:$0xff]
      %v816 = vld [vmem:[%s689 + $0x16a] sm:$0xff]
      %v817 = vld [vmem:[%s689 + $0x172] sm:$0xff]
      %v818 = vpack.c.bf16 %v787, %v786
      %v819 = vpack.c.bf16 %v789, %v788
      %v820 = vpack.c.bf16 %v791, %v790
      %v821 = vpack.c.bf16 %v793, %v792
      %v822 = vpack.c.bf16 %v795, %v794
      %v823 = vpack.c.bf16 %v797, %v796
      %v824 = vpack.c.bf16 %v799, %v798
      %v825 = vpack.c.bf16 %v801, %v800
      %v826 = vpack.c.bf16 %v803, %v802
      %v827 = vpack.c.bf16 %v805, %v804
      %v828 = vpack.c.bf16 %v807, %v806
      %v829 = vpack.c.bf16 %v809, %v808
      %v830 = vpack.c.bf16 %v811, %v810
      %v831 = vpack.c.bf16 %v813, %v812
      %v832 = vpack.c.bf16 %v815, %v814
      %v833 = vpack.c.bf16 %v817, %v816
      %850 = vrot.lane.b32.xlu0 %v481, 4
      %v851 = vpop.permute.xlu0 %850
      %852 = vrot.lane.b32.xlu0 %v482, 4
      %v853 = vpop.permute.xlu0 %852
      %854 = vrot.lane.b32.xlu0 %v483, 4
      %v855 = vpop.permute.xlu0 %854
      %856 = vrot.lane.b32.xlu0 %v484, 4
      %v857 = vpop.permute.xlu0 %856
      %858 = vrot.lane.b32.xlu0 %v485, 4
      %v859 = vpop.permute.xlu0 %858
      %860 = vrot.lane.b32.xlu0 %v486, 4
      %v861 = vpop.permute.xlu0 %860
      %862 = vrot.lane.b32.xlu0 %v487, 4
      %v863 = vpop.permute.xlu0 %862
      %864 = vrot.lane.b32.xlu0 %v488, 4
      %v865 = vpop.permute.xlu0 %864
      %866 = vrot.lane.b32.xlu0 %v489, 4
      %v867 = vpop.permute.xlu0 %866
      %868 = vrot.lane.b32.xlu0 %v490, 4
      %v869 = vpop.permute.xlu0 %868
      %870 = vrot.lane.b32.xlu0 %v491, 4
      %v871 = vpop.permute.xlu0 %870
      %872 = vrot.lane.b32.xlu0 %v492, 4
      %v873 = vpop.permute.xlu0 %872
      %874 = vrot.lane.b32.xlu0 %v493, 4
      %v875 = vpop.permute.xlu0 %874
      %876 = vrot.lane.b32.xlu0 %v494, 4
      %v877 = vpop.permute.xlu0 %876
      %878 = vrot.lane.b32.xlu0 %v495, 4
      %v879 = vpop.permute.xlu0 %878
      %880 = vrot.lane.b32.xlu0 %v496, 4
      %v881 = vpop.permute.xlu0 %880
      %898 = vrot.lane.b32.xlu0 %v529, 8
      %v899 = vpop.permute.xlu0 %898
      %900 = vrot.lane.b32.xlu0 %v530, 8
      %v901 = vpop.permute.xlu0 %900
      %902 = vrot.lane.b32.xlu0 %v531, 8
      %v903 = vpop.permute.xlu0 %902
      %904 = vrot.lane.b32.xlu0 %v532, 8
      %v905 = vpop.permute.xlu0 %904
      %906 = vrot.lane.b32.xlu0 %v533, 8
      %v907 = vpop.permute.xlu0 %906
      %908 = vrot.lane.b32.xlu0 %v534, 8
      %v909 = vpop.permute.xlu0 %908
      %910 = vrot.lane.b32.xlu0 %v535, 8
      %v911 = vpop.permute.xlu0 %910
      %912 = vrot.lane.b32.xlu0 %v536, 8
      %v913 = vpop.permute.xlu0 %912
      %914 = vrot.lane.b32.xlu0 %v537, 8
      %v915 = vpop.permute.xlu0 %914
      %916 = vrot.lane.b32.xlu0 %v538, 8
      %v917 = vpop.permute.xlu0 %916
      %918 = vrot.lane.b32.xlu0 %v539, 8
      %v919 = vpop.permute.xlu0 %918
      %920 = vrot.lane.b32.xlu0 %v540, 8
      %v921 = vpop.permute.xlu0 %920
      %922 = vrot.lane.b32.xlu0 %v541, 8
      %v923 = vpop.permute.xlu0 %922
      %924 = vrot.lane.b32.xlu0 %v542, 8
      %v925 = vpop.permute.xlu0 %924
      %926 = vrot.lane.b32.xlu0 %v543, 8
      %v927 = vpop.permute.xlu0 %926
      %928 = vrot.lane.b32.xlu0 %v544, 8
      %v929 = vpop.permute.xlu0 %928
      %946 = vrot.lane.b32.xlu0 %v577, 12
      %v947 = vpop.permute.xlu0 %946
      %948 = vrot.lane.b32.xlu0 %v578, 12
      %v949 = vpop.permute.xlu0 %948
      %950 = vrot.lane.b32.xlu0 %v579, 12
      %v951 = vpop.permute.xlu0 %950
      %952 = vrot.lane.b32.xlu0 %v580, 12
      %v953 = vpop.permute.xlu0 %952
      %954 = vrot.lane.b32.xlu0 %v581, 12
      %v955 = vpop.permute.xlu0 %954
      %956 = vrot.lane.b32.xlu0 %v582, 12
      %v957 = vpop.permute.xlu0 %956
      %958 = vrot.lane.b32.xlu0 %v583, 12
      %v959 = vpop.permute.xlu0 %958
      %960 = vrot.lane.b32.xlu0 %v584, 12
      %v961 = vpop.permute.xlu0 %960
      %962 = vrot.lane.b32.xlu0 %v585, 12
      %v963 = vpop.permute.xlu0 %962
      %964 = vrot.lane.b32.xlu0 %v586, 12
      %v965 = vpop.permute.xlu0 %964
      %966 = vrot.lane.b32.xlu0 %v587, 12
      %v967 = vpop.permute.xlu0 %966
      %968 = vrot.lane.b32.xlu0 %v588, 12
      %v969 = vpop.permute.xlu0 %968
      %970 = vrot.lane.b32.xlu0 %v589, 12
      %v971 = vpop.permute.xlu0 %970
      %972 = vrot.lane.b32.xlu0 %v590, 12
      %v973 = vpop.permute.xlu0 %972
      %974 = vrot.lane.b32.xlu0 %v591, 12
      %v975 = vpop.permute.xlu0 %974
      %976 = vrot.lane.b32.xlu0 %v592, 12
      %v977 = vpop.permute.xlu0 %976
      %994 = vrot.lane.b32.xlu0 %v625, 16
      %v995 = vpop.permute.xlu0 %994
      %996 = vrot.lane.b32.xlu0 %v626, 16
      %v997 = vpop.permute.xlu0 %996
      %998 = vrot.lane.b32.xlu0 %v627, 16
      %v999 = vpop.permute.xlu0 %998
      %1000 = vrot.lane.b32.xlu0 %v628, 16
      %v1001 = vpop.permute.xlu0 %1000
      %1002 = vrot.lane.b32.xlu0 %v629, 16
      %v1003 = vpop.permute.xlu0 %1002
      %1004 = vrot.lane.b32.xlu0 %v630, 16
      %v1005 = vpop.permute.xlu0 %1004
      %1006 = vrot.lane.b32.xlu0 %v631, 16
      %v1007 = vpop.permute.xlu0 %1006
      %1008 = vrot.lane.b32.xlu0 %v632, 16
      %v1009 = vpop.permute.xlu0 %1008
      %1010 = vrot.lane.b32.xlu0 %v633, 16
      %v1011 = vpop.permute.xlu0 %1010
      %1012 = vrot.lane.b32.xlu0 %v634, 16
      %v1013 = vpop.permute.xlu0 %1012
      %1014 = vrot.lane.b32.xlu0 %v635, 16
      %v1015 = vpop.permute.xlu0 %1014
      %1016 = vrot.lane.b32.xlu0 %v636, 16
      %v1017 = vpop.permute.xlu0 %1016
      %1018 = vrot.lane.b32.xlu0 %v637, 16
      %v1019 = vpop.permute.xlu0 %1018
      %1020 = vrot.lane.b32.xlu0 %v638, 16
      %v1021 = vpop.permute.xlu0 %1020
      %1022 = vrot.lane.b32.xlu0 %v639, 16
      %v1023 = vpop.permute.xlu0 %1022
      %1024 = vrot.lane.b32.xlu0 %v640, 16
      %v1025 = vpop.permute.xlu0 %1024
      %1042 = vrot.lane.b32.xlu0 %v673, 20
      %v1043 = vpop.permute.xlu0 %1042
      %1044 = vrot.lane.b32.xlu0 %v674, 20
      %v1045 = vpop.permute.xlu0 %1044
      %1046 = vrot.lane.b32.xlu0 %v675, 20
      %v1047 = vpop.permute.xlu0 %1046
      %1048 = vrot.lane.b32.xlu0 %v676, 20
      %v1049 = vpop.permute.xlu0 %1048
      %1050 = vrot.lane.b32.xlu0 %v677, 20
      %v1051 = vpop.permute.xlu0 %1050
      %1052 = vrot.lane.b32.xlu0 %v678, 20
      %v1053 = vpop.permute.xlu0 %1052
      %1054 = vrot.lane.b32.xlu0 %v679, 20
      %v1055 = vpop.permute.xlu0 %1054
      %1056 = vrot.lane.b32.xlu0 %v680, 20
      %v1057 = vpop.permute.xlu0 %1056
      %1058 = vrot.lane.b32.xlu0 %v681, 20
      %v1059 = vpop.permute.xlu0 %1058
      %1060 = vrot.lane.b32.xlu0 %v682, 20
      %v1061 = vpop.permute.xlu0 %1060
      %1062 = vrot.lane.b32.xlu0 %v683, 20
      %v1063 = vpop.permute.xlu0 %1062
      %1064 = vrot.lane.b32.xlu0 %v684, 20
      %v1065 = vpop.permute.xlu0 %1064
      %1066 = vrot.lane.b32.xlu0 %v685, 20
      %v1067 = vpop.permute.xlu0 %1066
      %1068 = vrot.lane.b32.xlu0 %v686, 20
      %v1069 = vpop.permute.xlu0 %1068
      %1070 = vrot.lane.b32.xlu0 %v687, 20
      %v1071 = vpop.permute.xlu0 %1070
      %1072 = vrot.lane.b32.xlu0 %v688, 20
      %v1073 = vpop.permute.xlu0 %1072
      %1090 = vrot.lane.b32.xlu0 %v722, 24
      %v1091 = vpop.permute.xlu0 %1090
      %1092 = vrot.lane.b32.xlu0 %v723, 24
      %v1093 = vpop.permute.xlu0 %1092
      %1094 = vrot.lane.b32.xlu0 %v724, 24
      %v1095 = vpop.permute.xlu0 %1094
      %1096 = vrot.lane.b32.xlu0 %v725, 24
      %v1097 = vpop.permute.xlu0 %1096
      %1098 = vrot.lane.b32.xlu0 %v726, 24
      %v1099 = vpop.permute.xlu0 %1098
      %1100 = vrot.lane.b32.xlu0 %v727, 24
      %v1101 = vpop.permute.xlu0 %1100
      %1102 = vrot.lane.b32.xlu0 %v728, 24
      %v1103 = vpop.permute.xlu0 %1102
      %1104 = vrot.lane.b32.xlu0 %v729, 24
      %v1105 = vpop.permute.xlu0 %1104
      %1106 = vrot.lane.b32.xlu0 %v730, 24
      %v1107 = vpop.permute.xlu0 %1106
      %1108 = vrot.lane.b32.xlu0 %v731, 24
      %v1109 = vpop.permute.xlu0 %1108
      %1110 = vrot.lane.b32.xlu0 %v732, 24
      %v1111 = vpop.permute.xlu0 %1110
      %1112 = vrot.lane.b32.xlu0 %v733, 24
      %v1113 = vpop.permute.xlu0 %1112
      %1114 = vrot.lane.b32.xlu0 %v734, 24
      %v1115 = vpop.permute.xlu0 %1114
      %1116 = vrot.lane.b32.xlu0 %v735, 24
      %v1117 = vpop.permute.xlu0 %1116
      %1118 = vrot.lane.b32.xlu0 %v736, 24
      %v1119 = vpop.permute.xlu0 %1118
      %1120 = vrot.lane.b32.xlu0 %v737, 24
      %v1121 = vpop.permute.xlu0 %1120
      %1138 = vrot.lane.b32.xlu0 %v770, 28
      %v1139 = vpop.permute.xlu0 %1138
      %1140 = vrot.lane.b32.xlu0 %v771, 28
      %v1141 = vpop.permute.xlu0 %1140
      %1142 = vrot.lane.b32.xlu0 %v772, 28
      %v1143 = vpop.permute.xlu0 %1142
      %1144 = vrot.lane.b32.xlu0 %v773, 28
      %v1145 = vpop.permute.xlu0 %1144
      %1146 = vrot.lane.b32.xlu0 %v774, 28
      %v1147 = vpop.permute.xlu0 %1146
      %1148 = vrot.lane.b32.xlu0 %v775, 28
      %v1149 = vpop.permute.xlu0 %1148
      %1150 = vrot.lane.b32.xlu0 %v776, 28
      %v1151 = vpop.permute.xlu0 %1150
      %1152 = vrot.lane.b32.xlu0 %v777, 28
      %v1153 = vpop.permute.xlu0 %1152
      %1154 = vrot.lane.b32.xlu0 %v778, 28
      %v1155 = vpop.permute.xlu0 %1154
      %1156 = vrot.lane.b32.xlu0 %v779, 28
      %v1157 = vpop.permute.xlu0 %1156
      %1158 = vrot.lane.b32.xlu0 %v780, 28
      %v1159 = vpop.permute.xlu0 %1158
      %1160 = vrot.lane.b32.xlu0 %v781, 28
      %v1161 = vpop.permute.xlu0 %1160
      %1162 = vrot.lane.b32.xlu0 %v782, 28
      %v1163 = vpop.permute.xlu0 %1162
      %1164 = vrot.lane.b32.xlu0 %v783, 28
      %v1165 = vpop.permute.xlu0 %1164
      %1166 = vrot.lane.b32.xlu0 %v784, 28
      %v1167 = vpop.permute.xlu0 %1166
      %1168 = vrot.lane.b32.xlu0 %v785, 28
      %v1169 = vpop.permute.xlu0 %1168
      %1186 = vrot.lane.b32.xlu0 %v818, 32
      %v1187 = vpop.permute.xlu0 %1186
      %1188 = vrot.lane.b32.xlu0 %v819, 32
      %v1189 = vpop.permute.xlu0 %1188
      %1190 = vrot.lane.b32.xlu0 %v820, 32
      %v1191 = vpop.permute.xlu0 %1190
      %1192 = vrot.lane.b32.xlu0 %v821, 32
      %v1193 = vpop.permute.xlu0 %1192
      %1194 = vrot.lane.b32.xlu0 %v822, 32
      %v1195 = vpop.permute.xlu0 %1194
      %1196 = vrot.lane.b32.xlu0 %v823, 32
      %v1197 = vpop.permute.xlu0 %1196
      %1198 = vrot.lane.b32.xlu0 %v824, 32
      %v1199 = vpop.permute.xlu0 %1198
      %1200 = vrot.lane.b32.xlu0 %v825, 32
      %v1201 = vpop.permute.xlu0 %1200
      %1202 = vrot.lane.b32.xlu0 %v826, 32
      %v1203 = vpop.permute.xlu0 %1202
      %1204 = vrot.lane.b32.xlu0 %v827, 32
      %v1205 = vpop.permute.xlu0 %1204
      %1206 = vrot.lane.b32.xlu0 %v828, 32
      %v1207 = vpop.permute.xlu0 %1206
      %1208 = vrot.lane.b32.xlu0 %v829, 32
      %v1209 = vpop.permute.xlu0 %1208
      %1210 = vrot.lane.b32.xlu0 %v830, 32
      %v1211 = vpop.permute.xlu0 %1210
      %1212 = vrot.lane.b32.xlu0 %v831, 32
      %v1213 = vpop.permute.xlu0 %1212
      %1214 = vrot.lane.b32.xlu0 %v832, 32
      %v1215 = vpop.permute.xlu0 %1214
      %1216 = vrot.lane.b32.xlu0 %v833, 32
      %v1217 = vpop.permute.xlu0 %1216
      %v1220 = vsel %vm280, %v433, %v851
      %v1223 = vsel %vm280, %v434, %v853
      %v1226 = vsel %vm280, %v435, %v855
      %v1229 = vsel %vm280, %v436, %v857
      %v1232 = vsel %vm280, %v437, %v859
      %v1235 = vsel %vm280, %v438, %v861
      %v1238 = vsel %vm280, %v439, %v863
      %v1241 = vsel %vm280, %v440, %v865
      %v1244 = vsel %vm280, %v441, %v867
      %v1247 = vsel %vm280, %v442, %v869
      %v1250 = vsel %vm280, %v443, %v871
      %v1253 = vsel %vm280, %v444, %v873
      %v1256 = vsel %vm280, %v445, %v875
      %v1259 = vsel %vm280, %v446, %v877
      %v1262 = vsel %vm280, %v447, %v879
      %v1265 = vsel %vm280, %v448, %v881
      %vm1266 = vcmask 64512
      %v1268 = vsel %vm1266, %v1220, %v899
      %v1270 = vsel %vm1266, %v1223, %v901
      %v1272 = vsel %vm1266, %v1226, %v903
      %v1274 = vsel %vm1266, %v1229, %v905
      %v1276 = vsel %vm1266, %v1232, %v907
      %v1278 = vsel %vm1266, %v1235, %v909
      %v1280 = vsel %vm1266, %v1238, %v911
      %v1282 = vsel %vm1266, %v1241, %v913
      %v1284 = vsel %vm1266, %v1244, %v915
      %v1286 = vsel %vm1266, %v1247, %v917
      %v1288 = vsel %vm1266, %v1250, %v919
      %v1290 = vsel %vm1266, %v1253, %v921
      %v1292 = vsel %vm1266, %v1256, %v923
      %v1294 = vsel %vm1266, %v1259, %v925
      %v1296 = vsel %vm1266, %v1262, %v927
      %v1298 = vsel %vm1266, %v1265, %v929
      %vm1299 = vcmask 97280
      %v1301 = vsel %vm1299, %v1268, %v947
      %v1303 = vsel %vm1299, %v1270, %v949
      %v1305 = vsel %vm1299, %v1272, %v951
      %v1307 = vsel %vm1299, %v1274, %v953
      %v1309 = vsel %vm1299, %v1276, %v955
      %v1311 = vsel %vm1299, %v1278, %v957
      %v1313 = vsel %vm1299, %v1280, %v959
      %v1315 = vsel %vm1299, %v1282, %v961
      %v1317 = vsel %vm1299, %v1284, %v963
      %v1319 = vsel %vm1299, %v1286, %v965
      %v1321 = vsel %vm1299, %v1288, %v967
      %v1323 = vsel %vm1299, %v1290, %v969
      %v1325 = vsel %vm1299, %v1292, %v971
      %v1327 = vsel %vm1299, %v1294, %v973
      %v1329 = vsel %vm1299, %v1296, %v975
      %v1331 = vsel %vm1299, %v1298, %v977
      %vm1332 = vcmask 130048
      %v1334 = vsel %vm1332, %v1301, %v995
      %v1336 = vsel %vm1332, %v1303, %v997
      %v1338 = vsel %vm1332, %v1305, %v999
      %v1340 = vsel %vm1332, %v1307, %v1001
      %v1342 = vsel %vm1332, %v1309, %v1003
      %v1344 = vsel %vm1332, %v1311, %v1005
      %v1346 = vsel %vm1332, %v1313, %v1007
      %v1348 = vsel %vm1332, %v1315, %v1009
      %v1350 = vsel %vm1332, %v1317, %v1011
      %v1352 = vsel %vm1332, %v1319, %v1013
      %v1354 = vsel %vm1332, %v1321, %v1015
      %v1356 = vsel %vm1332, %v1323, %v1017
      %v1358 = vsel %vm1332, %v1325, %v1019
      %v1360 = vsel %vm1332, %v1327, %v1021
      %v1362 = vsel %vm1332, %v1329, %v1023
      %v1364 = vsel %vm1332, %v1331, %v1025
      %vm1365 = vcmask 162816
      %v1367 = vsel %vm1365, %v1334, %v1043
      %v1369 = vsel %vm1365, %v1336, %v1045
      %v1371 = vsel %vm1365, %v1338, %v1047
      %v1373 = vsel %vm1365, %v1340, %v1049
      %v1375 = vsel %vm1365, %v1342, %v1051
      %v1377 = vsel %vm1365, %v1344, %v1053
      %v1379 = vsel %vm1365, %v1346, %v1055
      %v1381 = vsel %vm1365, %v1348, %v1057
      %v1383 = vsel %vm1365, %v1350, %v1059
      %v1385 = vsel %vm1365, %v1352, %v1061
      %v1387 = vsel %vm1365, %v1354, %v1063
      %v1389 = vsel %vm1365, %v1356, %v1065
      %v1391 = vsel %vm1365, %v1358, %v1067
      %v1393 = vsel %vm1365, %v1360, %v1069
      %v1395 = vsel %vm1365, %v1362, %v1071
      %v1397 = vsel %vm1365, %v1364, %v1073
      %vm1398 = vcmask 195584
      %v1400 = vsel %vm1398, %v1367, %v1091
      %v1402 = vsel %vm1398, %v1369, %v1093
      %v1404 = vsel %vm1398, %v1371, %v1095
      %v1406 = vsel %vm1398, %v1373, %v1097
      %v1408 = vsel %vm1398, %v1375, %v1099
      %v1410 = vsel %vm1398, %v1377, %v1101
      %v1412 = vsel %vm1398, %v1379, %v1103
      %v1414 = vsel %vm1398, %v1381, %v1105
      %v1416 = vsel %vm1398, %v1383, %v1107
      %v1418 = vsel %vm1398, %v1385, %v1109
      %v1420 = vsel %vm1398, %v1387, %v1111
      %v1422 = vsel %vm1398, %v1389, %v1113
      %v1424 = vsel %vm1398, %v1391, %v1115
      %v1426 = vsel %vm1398, %v1393, %v1117
      %v1428 = vsel %vm1398, %v1395, %v1119
      %v1430 = vsel %vm1398, %v1397, %v1121
      %vm1431 = vcmask 228352
      %v1433 = vsel %vm1431, %v1400, %v1139
      %v1435 = vsel %vm1431, %v1402, %v1141
      %v1437 = vsel %vm1431, %v1404, %v1143
      %v1439 = vsel %vm1431, %v1406, %v1145
      %v1441 = vsel %vm1431, %v1408, %v1147
      %v1443 = vsel %vm1431, %v1410, %v1149
      %v1445 = vsel %vm1431, %v1412, %v1151
      %v1447 = vsel %vm1431, %v1414, %v1153
      %v1449 = vsel %vm1431, %v1416, %v1155
      %v1451 = vsel %vm1431, %v1418, %v1157
      %v1453 = vsel %vm1431, %v1420, %v1159
      %v1455 = vsel %vm1431, %v1422, %v1161
      %v1457 = vsel %vm1431, %v1424, %v1163
      %v1459 = vsel %vm1431, %v1426, %v1165
      %v1461 = vsel %vm1431, %v1428, %v1167
      %v1463 = vsel %vm1431, %v1430, %v1169
      %vm1464 = vcmask 261120
      %v1466 = vsel %vm1464, %v1433, %v1187
      %v1468 = vsel %vm1464, %v1435, %v1189
      %v1470 = vsel %vm1464, %v1437, %v1191
      %v1472 = vsel %vm1464, %v1439, %v1193
      %v1474 = vsel %vm1464, %v1441, %v1195
      %v1476 = vsel %vm1464, %v1443, %v1197
      %v1478 = vsel %vm1464, %v1445, %v1199
      %v1480 = vsel %vm1464, %v1447, %v1201
      %v1482 = vsel %vm1464, %v1449, %v1203
      %v1484 = vsel %vm1464, %v1451, %v1205
      %v1486 = vsel %vm1464, %v1453, %v1207
      %v1488 = vsel %vm1464, %v1455, %v1209
      %v1490 = vsel %vm1464, %v1457, %v1211
      %v1492 = vsel %vm1464, %v1459, %v1213
      %v1494 = vsel %vm1464, %v1461, %v1215
      %v1496 = vsel %vm1464, %v1463, %v1217
      %v1497 = vld [vmem:[%s1] sm:$0xf]
      %v1498 = vld [vmem:[%s1 + $0x4] sm:$0xf]
      %v1499 = vld [vmem:[%s1 + $0x8] sm:$0xf]
      %v1500 = vld [vmem:[%s1 + $0xc] sm:$0xf]
      %v1501 = vld [vmem:[%s1 + $0x10] sm:$0x3]
      %v1507 = vunpack.c.l.b16 %v1497
      %v1508 = vunpack.c.l.b16 %v1498
      %v1509 = vunpack.c.l.b16 %v1499
      %v1510 = vunpack.c.l.b16 %v1500
      %v1511 = vunpack.c.l.b16 %v1501
      %v1512 = vpack.c.b16 %v1508, %v1507
      %v1513 = vpack.c.b16 %v1510, %v1509
      %v1514 = vpack.c.b16 %v1511, %v1511
      %vm1517 = vcmask 293888
      %v1518 = vsel %vm1517, %v1466, 0
      %v1520 = vsel %vm1517, %v1468, 0
      %v1522 = vsel %vm1517, %v1470, 0
      %v1524 = vsel %vm1517, %v1472, 0
      %v1526 = vsel %vm1517, %v1474, 0
      %v1528 = vsel %vm1517, %v1476, 0
      %v1530 = vsel %vm1517, %v1478, 0
      %v1532 = vsel %vm1517, %v1480, 0
      %v1534 = vsel %vm1517, %v1482, 0
      %v1536 = vsel %vm1517, %v1484, 0
      %v1538 = vsel %vm1517, %v1486, 0
      %v1540 = vsel %vm1517, %v1488, 0
      %v1542 = vsel %vm1517, %v1490, 0
      %v1544 = vsel %vm1517, %v1492, 0
      %v1546 = vsel %vm1517, %v1494, 0
      %v1548 = vsel %vm1517, %v1496, 0
      %vm1550 = vcmask 1041408
      %v1552 = vsel %vm1550, %v1514, 0
      %1554 = vmatprep.subr.bf16.mxu0 0
      %1555 = vmatpush1.bf16.msra.mxu0 %v1512
      %1556 = vmatprep.subr.bf16.mxu0 0
      %1557 = vmatpush1.bf16.msra.mxu0 %v1513
      %1558 = vmatprep.subr.bf16.mxu0 0
      %1559 = vmatpush1.bf16.msra.mxu0 %v1552
      %1560 = vmatprep.subr.bf16.mxu0 0
      %1561 = vmatpush1.bf16.msra.mxu0 0
      %1562 = vmatprep.subr.bf16.mxu0 0
      %1563 = vmatpush1.bf16.msra.mxu0 0
      %1564 = vmatprep.subr.bf16.mxu0 0
      %1565 = vmatpush1.bf16.msra.mxu0 0
      %1566 = vmatprep.subr.bf16.mxu0 0
      %1567 = vmatpush1.bf16.msra.mxu0 0
      %1568 = vmatprep.subr.bf16.mxu0 0
      %1569 = vmatpush1.bf16.msra.mxu0 0
      %1570 = vmatprep.subr.bf16.mxu0 0
      %1571 = vmatpush1.bf16.msra.mxu0 0
      %1572 = vmatprep.subr.bf16.mxu0 0
      %1573 = vmatpush1.bf16.msra.mxu0 0
      %1574 = vmatprep.subr.bf16.mxu0 0
      %1575 = vmatpush1.bf16.msra.mxu0 0
      %1576 = vmatprep.subr.bf16.mxu0 0
      %1577 = vmatpush1.bf16.msra.mxu0 0
      %1578 = vmatprep.subr.bf16.mxu0 0
      %1579 = vmatpush1.bf16.msra.mxu0 0
      %1580 = vmatprep.subr.bf16.mxu0 0
      %1581 = vmatpush1.bf16.msra.mxu0 0
      %1582 = vmatprep.subr.bf16.mxu0 0
      %1583 = vmatpush1.bf16.msra.mxu0 0
      %1584 = vmatprep.subr.bf16.mxu0 0
      %1585 = vmatpush1.bf16.msra.mxu0 0
      %1586 = vmatprep.mubr.bf16.mxu0 0
      %1587 = vmatmul.mubr.bf16.gmra.mrb[0].mxu0 %v1518
      %v1588 = vpop.f32.mrb[0].mxu0
      %v1589 = vadd.f32 0.0, %v1588
      %v1590 = vpop.f32.mrb[0].mxu0
      %v1591 = vpop.f32.mrb[0].mxu0
      %v1592 = vadd.f32 0.0, %v1591
      %v1593 = vpop.f32.mrb[0].mxu0
      %1594 = vmatprep.mubr.bf16.mxu0 0
      %1595 = vmatmul.mubr.bf16.gmra.mrb[0].mxu0 %v1520
      %v1596 = vpop.f32.mrb[0].mxu0
      %v1597 = vadd.f32 0.0, %v1596
      %v1598 = vpop.f32.mrb[0].mxu0
      %v1599 = vpop.f32.mrb[0].mxu0
      %v1600 = vadd.f32 0.0, %v1599
      %v1601 = vpop.f32.mrb[0].mxu0
      %1602 = vmatprep.mubr.bf16.mxu0 0
      %1603 = vmatmul.mubr.bf16.gmra.mrb[0].mxu0 %v1522
      %v1604 = vpop.f32.mrb[0].mxu0
      %v1605 = vadd.f32 0.0, %v1604
      %v1606 = vpop.f32.mrb[0].mxu0
      %v1607 = vpop.f32.mrb[0].mxu0
      %v1608 = vadd.f32 0.0, %v1607
      %v1609 = vpop.f32.mrb[0].mxu0
      %1610 = vmatprep.mubr.bf16.mxu0 0
      %1611 = vmatmul.mubr.bf16.gmra.mrb[0].mxu0 %v1524
      %v1612 = vpop.f32.mrb[0].mxu0
      %v1613 = vadd.f32 0.0, %v1612
      %v1614 = vpop.f32.mrb[0].mxu0
      %v1615 = vpop.f32.mrb[0].mxu0
      %v1616 = vadd.f32 0.0, %v1615
      %v1617 = vpop.f32.mrb[0].mxu0
      %1618 = vmatprep.mubr.bf16.mxu0 0
      %1619 = vmatmul.mubr.bf16.gmra.mrb[0].mxu0 %v1526
      %v1620 = vpop.f32.mrb[0].mxu0
      %v1621 = vadd.f32 0.0, %v1620
      %v1622 = vpop.f32.mrb[0].mxu0
      %v1623 = vpop.f32.mrb[0].mxu0
      %v1624 = vadd.f32 0.0, %v1623
      %v1625 = vpop.f32.mrb[0].mxu0
      %1626 = vmatprep.mubr.bf16.mxu0 0
      %1627 = vmatmul.mubr.bf16.gmra.mrb[0].mxu0 %v1528
      %v1628 = vpop.f32.mrb[0].mxu0
      %v1629 = vadd.f32 0.0, %v1628
      %v1630 = vpop.f32.mrb[0].mxu0
      %v1631 = vpop.f32.mrb[0].mxu0
      %v1632 = vadd.f32 0.0, %v1631
      %v1633 = vpop.f32.mrb[0].mxu0
      %1634 = vmatprep.mubr.bf16.mxu0 0
      %1635 = vmatmul.mubr.bf16.gmra.mrb[0].mxu0 %v1530
      %v1636 = vpop.f32.mrb[0].mxu0
      %v1637 = vadd.f32 0.0, %v1636
      %v1638 = vpop.f32.mrb[0].mxu0
      %v1639 = vpop.f32.mrb[0].mxu0
      %v1640 = vadd.f32 0.0, %v1639
      %v1641 = vpop.f32.mrb[0].mxu0
      %1642 = vmatprep.mubr.bf16.mxu0 0
      %1643 = vmatmul.mubr.bf16.gmra.mrb[0].mxu0 %v1532
      %v1644 = vpop.f32.mrb[0].mxu0
      %v1645 = vadd.f32 0.0, %v1644
      %v1646 = vpop.f32.mrb[0].mxu0
      %v1647 = vpop.f32.mrb[0].mxu0
      %v1648 = vadd.f32 0.0, %v1647
      %v1649 = vpop.f32.mrb[0].mxu0
      %1650 = vmatprep.mubr.bf16.mxu0 0
      %1651 = vmatmul.mubr.bf16.gmra.mrb[0].mxu0 %v1534
      %v1652 = vpop.f32.mrb[0].mxu0
      %v1653 = vadd.f32 0.0, %v1652
      %v1654 = vpop.f32.mrb[0].mxu0
      %v1655 = vpop.f32.mrb[0].mxu0
      %v1656 = vadd.f32 0.0, %v1655
      %v1657 = vpop.f32.mrb[0].mxu0
      %1658 = vmatprep.mubr.bf16.mxu0 0
      %1659 = vmatmul.mubr.bf16.gmra.mrb[0].mxu0 %v1536
      %v1660 = vpop.f32.mrb[0].mxu0
      %v1661 = vadd.f32 0.0, %v1660
      %v1662 = vpop.f32.mrb[0].mxu0
      %v1663 = vpop.f32.mrb[0].mxu0
      %v1664 = vadd.f32 0.0, %v1663
      %v1665 = vpop.f32.mrb[0].mxu0
      %1666 = vmatprep.mubr.bf16.mxu0 0
      %1667 = vmatmul.mubr.bf16.gmra.mrb[0].mxu0 %v1538
      %v1668 = vpop.f32.mrb[0].mxu0
      %v1669 = vadd.f32 0.0, %v1668
      %v1670 = vpop.f32.mrb[0].mxu0
      %v1671 = vpop.f32.mrb[0].mxu0
      %v1672 = vadd.f32 0.0, %v1671
      %v1673 = vpop.f32.mrb[0].mxu0
      %1674 = vmatprep.mubr.bf16.mxu0 0
      %1675 = vmatmul.mubr.bf16.gmra.mrb[0].mxu0 %v1540
      %v1676 = vpop.f32.mrb[0].mxu0
      %v1677 = vadd.f32 0.0, %v1676
      %v1678 = vpop.f32.mrb[0].mxu0
      %v1679 = vpop.f32.mrb[0].mxu0
      %v1680 = vadd.f32 0.0, %v1679
      %v1681 = vpop.f32.mrb[0].mxu0
      %1682 = vmatprep.mubr.bf16.mxu0 0
      %1683 = vmatmul.mubr.bf16.gmra.mrb[0].mxu0 %v1542
      %v1684 = vpop.f32.mrb[0].mxu0
      %v1685 = vadd.f32 0.0, %v1684
      %v1686 = vpop.f32.mrb[0].mxu0
      %v1687 = vpop.f32.mrb[0].mxu0
      %v1688 = vadd.f32 0.0, %v1687
      %v1689 = vpop.f32.mrb[0].mxu0
      %1690 = vmatprep.mubr.bf16.mxu0 0
      %1691 = vmatmul.mubr.bf16.gmra.mrb[0].mxu0 %v1544
      %v1692 = vpop.f32.mrb[0].mxu0
      %v1693 = vadd.f32 0.0, %v1692
      %v1694 = vpop.f32.mrb[0].mxu0
      %v1695 = vpop.f32.mrb[0].mxu0
      %v1696 = vadd.f32 0.0, %v1695
      %v1697 = vpop.f32.mrb[0].mxu0
      %1698 = vmatprep.mubr.bf16.mxu0 0
      %1699 = vmatmul.mubr.bf16.gmra.mrb[0].mxu0 %v1546
      %v1700 = vpop.f32.mrb[0].mxu0
      %v1701 = vadd.f32 0.0, %v1700
      %v1702 = vpop.f32.mrb[0].mxu0
      %v1703 = vpop.f32.mrb[0].mxu0
      %v1704 = vadd.f32 0.0, %v1703
      %v1705 = vpop.f32.mrb[0].mxu0
      %1706 = vmatprep.mubr.bf16.mxu0 0
      %1707 = vmatmul.mubr.bf16.gmra.mrb[0].mxu0 %v1548
      %v1708 = vpop.f32.mrb[0].mxu0
      %v1709 = vadd.f32 0.0, %v1708
      %v1710 = vpop.f32.mrb[0].mxu0
      %v1711 = vpop.f32.mrb[0].mxu0
      %v1712 = vadd.f32 0.0, %v1711
      %v1713 = vpop.f32.mrb[0].mxu0
      %1714 = vdwg.mxu0
      %v1715 = vsel %vm280, %v1589, 0.0
      %v1716 = vsel %vm280, %v1592, 0.0
      %v1717 = vadd.f32 %v1715, %v1716
      %v1718 = vsel %vm280, %v1597, 0.0
      %v1719 = vadd.f32 %v1717, %v1718
      %v1720 = vsel %vm280, %v1600, 0.0
      %v1721 = vadd.f32 %v1719, %v1720
      %v1722 = vsel %vm280, %v1605, 0.0
      %v1723 = vadd.f32 %v1721, %v1722
      %v1724 = vsel %vm280, %v1608, 0.0
      %v1725 = vadd.f32 %v1723, %v1724
      %v1726 = vsel %vm280, %v1613, 0.0
      %v1727 = vadd.f32 %v1725, %v1726
      %v1728 = vsel %vm280, %v1616, 0.0
      %v1729 = vadd.f32 %v1727, %v1728
      %v1730 = vsel %vm280, %v1621, 0.0
      %v1731 = vadd.f32 %v1729, %v1730
      %v1732 = vsel %vm280, %v1624, 0.0
      %v1733 = vadd.f32 %v1731, %v1732
      %v1734 = vsel %vm280, %v1629, 0.0
      %v1735 = vadd.f32 %v1733, %v1734
      %v1736 = vsel %vm280, %v1632, 0.0
      %v1737 = vadd.f32 %v1735, %v1736
      %v1738 = vsel %vm280, %v1637, 0.0
      %v1739 = vadd.f32 %v1737, %v1738
      %v1740 = vsel %vm280, %v1640, 0.0
      %v1741 = vadd.f32 %v1739, %v1740
      %v1742 = vsel %vm280, %v1645, 0.0
      %v1743 = vadd.f32 %v1741, %v1742
      %v1744 = vsel %vm280, %v1648, 0.0
      %v1745 = vadd.f32 %v1743, %v1744
      %v1746 = vsel %vm280, %v1653, 0.0
      %v1747 = vadd.f32 %v1745, %v1746
      %v1748 = vsel %vm280, %v1656, 0.0
      %v1749 = vadd.f32 %v1747, %v1748
      %v1750 = vsel %vm280, %v1661, 0.0
      %v1751 = vadd.f32 %v1749, %v1750
      %v1752 = vsel %vm280, %v1664, 0.0
      %v1753 = vadd.f32 %v1751, %v1752
      %v1754 = vsel %vm280, %v1669, 0.0
      %v1755 = vadd.f32 %v1753, %v1754
      %v1756 = vsel %vm280, %v1672, 0.0
      %v1757 = vadd.f32 %v1755, %v1756
      %v1758 = vsel %vm280, %v1677, 0.0
      %v1759 = vadd.f32 %v1757, %v1758
      %v1760 = vsel %vm280, %v1680, 0.0
      %v1761 = vadd.f32 %v1759, %v1760
      %v1762 = vsel %vm280, %v1685, 0.0
      %v1763 = vadd.f32 %v1761, %v1762
      %v1764 = vsel %vm280, %v1688, 0.0
      %v1765 = vadd.f32 %v1763, %v1764
      %v1766 = vsel %vm280, %v1693, 0.0
      %v1767 = vadd.f32 %v1765, %v1766
      %v1768 = vsel %vm280, %v1696, 0.0
      %v1769 = vadd.f32 %v1767, %v1768
      %v1770 = vsel %vm280, %v1701, 0.0
      %v1771 = vadd.f32 %v1769, %v1770
      %v1772 = vsel %vm280, %v1704, 0.0
      %v1773 = vadd.f32 %v1771, %v1772
      %v1774 = vsel %vm280, %v1709, 0.0
      %v1775 = vadd.f32 %v1773, %v1774
      %v1776 = vsel %vm280, %v1712, 0.0
      %v1777 = vadd.f32 %v1775, %v1776
      %v1778 = vrot.slane %v1777, 4
      %v1779 = vadd.f32 %v1777, %v1778
      %v1780 = vrot.slane %v1779, 2
      %v1781 = vadd.f32 %v1779, %v1780
      %v1782 = vrot.slane %v1781, 1
      %v1783 = vadd.f32 %v1781, %v1782
      %v1784 = vmul.f32 %v1783, 0.00390625
      %v1785 = vmul.f32 %v1589, %v1589
      %v1786 = vmul.f32 %v1592, %v1592
      %v1787 = vmul.f32 %v1597, %v1597
      %v1788 = vmul.f32 %v1600, %v1600
      %v1789 = vmul.f32 %v1605, %v1605
      %v1790 = vmul.f32 %v1608, %v1608
      %v1791 = vmul.f32 %v1613, %v1613
      %v1792 = vmul.f32 %v1616, %v1616
      %v1793 = vmul.f32 %v1621, %v1621
      %v1794 = vmul.f32 %v1624, %v1624
      %v1795 = vmul.f32 %v1629, %v1629
      %v1796 = vmul.f32 %v1632, %v1632
      %v1797 = vmul.f32 %v1637, %v1637
      %v1798 = vmul.f32 %v1640, %v1640
      %v1799 = vmul.f32 %v1645, %v1645
      %v1800 = vmul.f32 %v1648, %v1648
      %v1801 = vmul.f32 %v1653, %v1653
      %v1802 = vmul.f32 %v1656, %v1656
      %v1803 = vmul.f32 %v1661, %v1661
      %v1804 = vmul.f32 %v1664, %v1664
      %v1805 = vmul.f32 %v1669, %v1669
      %v1806 = vmul.f32 %v1672, %v1672
      %v1807 = vmul.f32 %v1677, %v1677
      %v1808 = vmul.f32 %v1680, %v1680
      %v1809 = vmul.f32 %v1685, %v1685
      %v1810 = vmul.f32 %v1688, %v1688
      %v1811 = vmul.f32 %v1693, %v1693
      %v1812 = vmul.f32 %v1696, %v1696
      %v1813 = vmul.f32 %v1701, %v1701
      %v1814 = vmul.f32 %v1704, %v1704
      %v1815 = vmul.f32 %v1709, %v1709
      %v1816 = vmul.f32 %v1712, %v1712
      %v1817 = vsel %vm280, %v1785, 0.0
      %v1818 = vsel %vm280, %v1786, 0.0
      %v1819 = vadd.f32 %v1817, %v1818
      %v1820 = vsel %vm280, %v1787, 0.0
      %v1821 = vadd.f32 %v1819, %v1820
      %v1822 = vsel %vm280, %v1788, 0.0
      %v1823 = vadd.f32 %v1821, %v1822
      %v1824 = vsel %vm280, %v1789, 0.0
      %v1825 = vadd.f32 %v1823, %v1824
      %v1826 = vsel %vm280, %v1790, 0.0
      %v1827 = vadd.f32 %v1825, %v1826
      %v1828 = vsel %vm280, %v1791, 0.0
      %v1829 = vadd.f32 %v1827, %v1828
      %v1830 = vsel %vm280, %v1792, 0.0
      %v1831 = vadd.f32 %v1829, %v1830
      %v1832 = vsel %vm280, %v1793, 0.0
      %v1833 = vadd.f32 %v1831, %v1832
      %v1834 = vsel %vm280, %v1794, 0.0
      %v1835 = vadd.f32 %v1833, %v1834
      %v1836 = vsel %vm280, %v1795, 0.0
      %v1837 = vadd.f32 %v1835, %v1836
      %v1838 = vsel %vm280, %v1796, 0.0
      %v1839 = vadd.f32 %v1837, %v1838
      %v1840 = vsel %vm280, %v1797, 0.0
      %v1841 = vadd.f32 %v1839, %v1840
      %v1842 = vsel %vm280, %v1798, 0.0
      %v1843 = vadd.f32 %v1841, %v1842
      %v1844 = vsel %vm280, %v1799, 0.0
      %v1845 = vadd.f32 %v1843, %v1844
      %v1846 = vsel %vm280, %v1800, 0.0
      %v1847 = vadd.f32 %v1845, %v1846
      %v1848 = vsel %vm280, %v1801, 0.0
      %v1849 = vadd.f32 %v1847, %v1848
      %v1850 = vsel %vm280, %v1802, 0.0
      %v1851 = vadd.f32 %v1849, %v1850
      %v1852 = vsel %vm280, %v1803, 0.0
      %v1853 = vadd.f32 %v1851, %v1852
      %v1854 = vsel %vm280, %v1804, 0.0
      %v1855 = vadd.f32 %v1853, %v1854
      %v1856 = vsel %vm280, %v1805, 0.0
      %v1857 = vadd.f32 %v1855, %v1856
      %v1858 = vsel %vm280, %v1806, 0.0
      %v1859 = vadd.f32 %v1857, %v1858
      %v1860 = vsel %vm280, %v1807, 0.0
      %v1861 = vadd.f32 %v1859, %v1860
      %v1862 = vsel %vm280, %v1808, 0.0
      %v1863 = vadd.f32 %v1861, %v1862
      %v1864 = vsel %vm280, %v1809, 0.0
      %v1865 = vadd.f32 %v1863, %v1864
      %v1866 = vsel %vm280, %v1810, 0.0
      %v1867 = vadd.f32 %v1865, %v1866
      %v1868 = vsel %vm280, %v1811, 0.0
      %v1869 = vadd.f32 %v1867, %v1868
      %v1870 = vsel %vm280, %v1812, 0.0
      %v1871 = vadd.f32 %v1869, %v1870
      %v1872 = vsel %vm280, %v1813, 0.0
      %v1873 = vadd.f32 %v1871, %v1872
      %v1874 = vsel %vm280, %v1814, 0.0
      %v1875 = vadd.f32 %v1873, %v1874
      %v1876 = vsel %vm280, %v1815, 0.0
      %v1877 = vadd.f32 %v1875, %v1876
      %v1878 = vsel %vm280, %v1816, 0.0
      %v1879 = vadd.f32 %v1877, %v1878
      %v1880 = vrot.slane %v1879, 4
      %v1881 = vadd.f32 %v1879, %v1880
      %v1882 = vrot.slane %v1881, 2
      %v1883 = vadd.f32 %v1881, %v1882
      %v1884 = vrot.slane %v1883, 1
      %v1885 = vadd.f32 %v1883, %v1884
      %v1886 = vmul.f32 %v1885, 0.00390625
      %v1887 = vmul.f32 %v1784, %v1784
      %v1888 = vsub.f32 %v1886, %v1887
      %v1889 = vld [vmem:[%s3] sm:$0x1]
      %v1890 = vadd.f32 %v1888, 1e-05
      %v1891 = vrsqrt.pop %v1890
      %v1892 = vmul.f32 %v1889, %v1891
      %v1893 = vld [vmem:[%s4] sm:$0x1]
      %v1894 = vmul.f32 %v1784, %v1892
      %v1895 = vsub.f32 %v1893, %v1894
      %v1897 = vlaneseq
      %v1898 = vshrl.u32 %v1897, 7
      %v1899 = vsub.s32 0, %v1898
      %v1900 = vrot.slane %v1892, %v1899
      %v1902 = vmul.f32 %v1589, %v1900
      %v1903 = vmul.f32 %v1592, %v1900
      %v1904 = vmul.f32 %v1597, %v1900
      %v1905 = vmul.f32 %v1600, %v1900
      %v1906 = vmul.f32 %v1605, %v1900
      %v1907 = vmul.f32 %v1608, %v1900
      %v1908 = vmul.f32 %v1613, %v1900
      %v1909 = vmul.f32 %v1616, %v1900
      %v1910 = vmul.f32 %v1621, %v1900
      %v1911 = vmul.f32 %v1624, %v1900
      %v1912 = vmul.f32 %v1629, %v1900
      %v1913 = vmul.f32 %v1632, %v1900
      %v1914 = vmul.f32 %v1637, %v1900
      %v1915 = vmul.f32 %v1640, %v1900
      %v1916 = vmul.f32 %v1645, %v1900
      %v1917 = vmul.f32 %v1648, %v1900
      %v1918 = vmul.f32 %v1653, %v1900
      %v1919 = vmul.f32 %v1656, %v1900
      %v1920 = vmul.f32 %v1661, %v1900
      %v1921 = vmul.f32 %v1664, %v1900
      %v1922 = vmul.f32 %v1669, %v1900
      %v1923 = vmul.f32 %v1672, %v1900
      %v1924 = vmul.f32 %v1677, %v1900
      %v1925 = vmul.f32 %v1680, %v1900
      %v1926 = vmul.f32 %v1685, %v1900
      %v1927 = vmul.f32 %v1688, %v1900
      %v1928 = vmul.f32 %v1693, %v1900
      %v1929 = vmul.f32 %v1696, %v1900
      %v1930 = vmul.f32 %v1701, %v1900
      %v1931 = vmul.f32 %v1704, %v1900
      %v1932 = vmul.f32 %v1709, %v1900
      %v1933 = vmul.f32 %v1712, %v1900
      %v1935 = vlaneseq
      %v1936 = vshrl.u32 %v1935, 7
      %v1937 = vsub.s32 0, %v1936
      %v1938 = vrot.slane %v1895, %v1937
      %v1940 = vadd.f32 %v1902, %v1938
      %v1941 = vadd.f32 %v1903, %v1938
      %v1942 = vadd.f32 %v1904, %v1938
      %v1943 = vadd.f32 %v1905, %v1938
      %v1944 = vadd.f32 %v1906, %v1938
      %v1945 = vadd.f32 %v1907, %v1938
      %v1946 = vadd.f32 %v1908, %v1938
      %v1947 = vadd.f32 %v1909, %v1938
      %v1948 = vadd.f32 %v1910, %v1938
      %v1949 = vadd.f32 %v1911, %v1938
      %v1950 = vadd.f32 %v1912, %v1938
      %v1951 = vadd.f32 %v1913, %v1938
      %v1952 = vadd.f32 %v1914, %v1938
      %v1953 = vadd.f32 %v1915, %v1938
      %v1954 = vadd.f32 %v1916, %v1938
      %v1955 = vadd.f32 %v1917, %v1938
      %v1956 = vadd.f32 %v1918, %v1938
      %v1957 = vadd.f32 %v1919, %v1938
      %v1958 = vadd.f32 %v1920, %v1938
      %v1959 = vadd.f32 %v1921, %v1938
      %v1960 = vadd.f32 %v1922, %v1938
      %v1961 = vadd.f32 %v1923, %v1938
      %v1962 = vadd.f32 %v1924, %v1938
      %v1963 = vadd.f32 %v1925, %v1938
      %v1964 = vadd.f32 %v1926, %v1938
      %v1965 = vadd.f32 %v1927, %v1938
      %v1966 = vadd.f32 %v1928, %v1938
      %v1967 = vadd.f32 %v1929, %v1938
      %v1968 = vadd.f32 %v1930, %v1938
      %v1969 = vadd.f32 %v1931, %v1938
      %v1970 = vadd.f32 %v1932, %v1938
      %v1971 = vadd.f32 %v1933, %v1938
      %v1972 = vmax.f32 %v1940, 0.0
      %v1973 = vmax.f32 %v1941, 0.0
      %v1974 = vmax.f32 %v1942, 0.0
      %v1975 = vmax.f32 %v1943, 0.0
      %v1976 = vmax.f32 %v1944, 0.0
      %v1977 = vmax.f32 %v1945, 0.0
      %v1978 = vmax.f32 %v1946, 0.0
      %v1979 = vmax.f32 %v1947, 0.0
      %v1980 = vmax.f32 %v1948, 0.0
      %v1981 = vmax.f32 %v1949, 0.0
      %v1982 = vmax.f32 %v1950, 0.0
      %v1983 = vmax.f32 %v1951, 0.0
      %v1984 = vmax.f32 %v1952, 0.0
      %v1985 = vmax.f32 %v1953, 0.0
      %v1986 = vmax.f32 %v1954, 0.0
      %v1987 = vmax.f32 %v1955, 0.0
      %v1988 = vmax.f32 %v1956, 0.0
      %v1989 = vmax.f32 %v1957, 0.0
      %v1990 = vmax.f32 %v1958, 0.0
      %v1991 = vmax.f32 %v1959, 0.0
      %v1992 = vmax.f32 %v1960, 0.0
      %v1993 = vmax.f32 %v1961, 0.0
      %v1994 = vmax.f32 %v1962, 0.0
      %v1995 = vmax.f32 %v1963, 0.0
      %v1996 = vmax.f32 %v1964, 0.0
      %v1997 = vmax.f32 %v1965, 0.0
      %v1998 = vmax.f32 %v1966, 0.0
      %v1999 = vmax.f32 %v1967, 0.0
      %v2000 = vmax.f32 %v1968, 0.0
      %v2001 = vmax.f32 %v1969, 0.0
      %v2002 = vmax.f32 %v1970, 0.0
      %v2003 = vmax.f32 %v1971, 0.0
      %2004 = vst.msk [vmem:[%s368 + $0x1] sm:$0xff] %vm280, %v1972
      %2005 = vst.msk [vmem:[%s368 + $0x9] sm:$0xff] %vm280, %v1973
      %2006 = vst.msk [vmem:[%s368 + $0x19] sm:$0xff] %vm280, %v1974
      %2007 = vst.msk [vmem:[%s368 + $0x21] sm:$0xff] %vm280, %v1975
      %2008 = vst.msk [vmem:[%s368 + $0x31] sm:$0xff] %vm280, %v1976
      %2009 = vst.msk [vmem:[%s368 + $0x39] sm:$0xff] %vm280, %v1977
      %2010 = vst.msk [vmem:[%s368 + $0x49] sm:$0xff] %vm280, %v1978
      %2011 = vst.msk [vmem:[%s368 + $0x51] sm:$0xff] %vm280, %v1979
      %2012 = vst.msk [vmem:[%s368 + $0x61] sm:$0xff] %vm280, %v1980
      %2013 = vst.msk [vmem:[%s368 + $0x69] sm:$0xff] %vm280, %v1981
      %2014 = vst.msk [vmem:[%s368 + $0x79] sm:$0xff] %vm280, %v1982
      %2015 = vst.msk [vmem:[%s368 + $0x81] sm:$0xff] %vm280, %v1983
      %2016 = vst.msk [vmem:[%s368 + $0x91] sm:$0xff] %vm280, %v1984
      %2017 = vst.msk [vmem:[%s368 + $0x99] sm:$0xff] %vm280, %v1985
      %2018 = vst.msk [vmem:[%s368 + $0xa9] sm:$0xff] %vm280, %v1986
      %2019 = vst.msk [vmem:[%s368 + $0xb1] sm:$0xff] %vm280, %v1987
      %2020 = vst.msk [vmem:[%s368 + $0xc1] sm:$0xff] %vm280, %v1988
      %2021 = vst.msk [vmem:[%s368 + $0xc9] sm:$0xff] %vm280, %v1989
      %2022 = vst.msk [vmem:[%s368 + $0xd9] sm:$0xff] %vm280, %v1990
      %2023 = vst.msk [vmem:[%s368 + $0xe1] sm:$0xff] %vm280, %v1991
      %2024 = vst.msk [vmem:[%s368 + $0xf1] sm:$0xff] %vm280, %v1992
      %2025 = vst.msk [vmem:[%s368 + $0xf9] sm:$0xff] %vm280, %v1993
      %2026 = vst.msk [vmem:[%s368 + $0x109] sm:$0xff] %vm280, %v1994
      %2027 = vst.msk [vmem:[%s368 + $0x111] sm:$0xff] %vm280, %v1995
      %2028 = vst.msk [vmem:[%s368 + $0x121] sm:$0xff] %vm280, %v1996
      %2029 = vst.msk [vmem:[%s368 + $0x129] sm:$0xff] %vm280, %v1997
      %2030 = vst.msk [vmem:[%s368 + $0x139] sm:$0xff] %vm280, %v1998
      %2031 = vst.msk [vmem:[%s368 + $0x141] sm:$0xff] %vm280, %v1999
      %2032 = vst.msk [vmem:[%s368 + $0x151] sm:$0xff] %vm280, %v2000
      %2033 = vst.msk [vmem:[%s368 + $0x159] sm:$0xff] %vm280, %v2001
      %2034 = vst.msk [vmem:[%s368 + $0x169] sm:$0xff] %vm280, %v2002
      %2035 = vst.msk [vmem:[%s368 + $0x171] sm:$0xff] %vm280, %v2003
      %v2036 = vld [vmem:[#allocation2] sm:$0xff]
      %v2037 = vld [vmem:[#allocation2 + $0x8] sm:$0xff]
      %v2038 = vld [vmem:[#allocation2 + $0x18] sm:$0xff]
      %v2039 = vld [vmem:[#allocation2 + $0x20] sm:$0xff]
      %v2040 = vld [vmem:[#allocation2 + $0x30] sm:$0xff]
      %v2041 = vld [vmem:[#allocation2 + $0x38] sm:$0xff]
      %v2042 = vld [vmem:[#allocation2 + $0x48] sm:$0xff]
      %v2043 = vld [vmem:[#allocation2 + $0x50] sm:$0xff]
      %v2044 = vld [vmem:[#allocation2 + $0x60] sm:$0xff]
      %v2045 = vld [vmem:[#allocation2 + $0x68] sm:$0xff]
      %v2046 = vld [vmem:[#allocation2 + $0x78] sm:$0xff]
      %v2047 = vld [vmem:[#allocation2 + $0x80] sm:$0xff]
      %v2048 = vld [vmem:[#allocation2 + $0x90] sm:$0xff]
      %v2049 = vld [vmem:[#allocation2 + $0x98] sm:$0xff]
      %v2050 = vld [vmem:[#allocation2 + $0xa8] sm:$0xff]
      %v2051 = vld [vmem:[#allocation2 + $0xb0] sm:$0xff]
      %v2052 = vld [vmem:[#allocation2 + $0xc0] sm:$0xff]
      %v2053 = vld [vmem:[#allocation2 + $0xc8] sm:$0xff]
      %v2054 = vld [vmem:[#allocation2 + $0xd8] sm:$0xff]
      %v2055 = vld [vmem:[#allocation2 + $0xe0] sm:$0xff]
      %v2056 = vld [vmem:[#allocation2 + $0xf0] sm:$0xff]
      %v2057 = vld [vmem:[#allocation2 + $0xf8] sm:$0xff]
      %v2058 = vld [vmem:[#allocation2 + $0x108] sm:$0xff]
      %v2059 = vld [vmem:[#allocation2 + $0x110] sm:$0xff]
      %v2060 = vld [vmem:[#allocation2 + $0x120] sm:$0xff]
      %v2061 = vld [vmem:[#allocation2 + $0x128] sm:$0xff]
      %v2062 = vld [vmem:[#allocation2 + $0x138] sm:$0xff]
      %v2063 = vld [vmem:[#allocation2 + $0x140] sm:$0xff]
      %v2064 = vld [vmem:[#allocation2 + $0x150] sm:$0xff]
      %v2065 = vld [vmem:[#allocation2 + $0x158] sm:$0xff]
      %v2066 = vld [vmem:[#allocation2 + $0x168] sm:$0xff]
      %v2067 = vld [vmem:[#allocation2 + $0x170] sm:$0xff]
      %v2068 = vpack.c.bf16 %v2037, %v2036
      %v2069 = vpack.c.bf16 %v2039, %v2038
      %v2070 = vpack.c.bf16 %v2041, %v2040
      %v2071 = vpack.c.bf16 %v2043, %v2042
      %v2072 = vpack.c.bf16 %v2045, %v2044
      %v2073 = vpack.c.bf16 %v2047, %v2046
      %v2074 = vpack.c.bf16 %v2049, %v2048
      %v2075 = vpack.c.bf16 %v2051, %v2050
      %v2076 = vpack.c.bf16 %v2053, %v2052
      %v2077 = vpack.c.bf16 %v2055, %v2054
      %v2078 = vpack.c.bf16 %v2057, %v2056
      %v2079 = vpack.c.bf16 %v2059, %v2058
      %v2080 = vpack.c.bf16 %v2061, %v2060
      %v2081 = vpack.c.bf16 %v2063, %v2062
      %v2082 = vpack.c.bf16 %v2065, %v2064
      %v2083 = vpack.c.bf16 %v2067, %v2066
      %v2084 = vld [vmem:[#allocation2 + $0x1] sm:$0xff]
      %v2085 = vld [vmem:[#allocation2 + $0x9] sm:$0xff]
      %v2086 = vld [vmem:[#allocation2 + $0x19] sm:$0xff]
      %v2087 = vld [vmem:[#allocation2 + $0x21] sm:$0xff]
      %v2088 = vld [vmem:[#allocation2 + $0x31] sm:$0xff]
      %v2089 = vld [vmem:[#allocation2 + $0x39] sm:$0xff]
      %v2090 = vld [vmem:[#allocation2 + $0x49] sm:$0xff]
      %v2091 = vld [vmem:[#allocation2 + $0x51] sm:$0xff]
      %v2092 = vld [vmem:[#allocation2 + $0x61] sm:$0xff]
      %v2093 = vld [vmem:[#allocation2 + $0x69] sm:$0xff]
      %v2094 = vld [vmem:[#allocation2 + $0x79] sm:$0xff]
      %v2095 = vld [vmem:[#allocation2 + $0x81] sm:$0xff]
      %v2096 = vld [vmem:[#allocation2 + $0x91] sm:$0xff]
      %v2097 = vld [vmem:[#allocation2 + $0x99] sm:$0xff]
      %v2098 = vld [vmem:[#allocation2 + $0xa9] sm:$0xff]
      %v2099 = vld [vmem:[#allocation2 + $0xb1] sm:$0xff]
      %v2100 = vld [vmem:[#allocation2 + $0xc1] sm:$0xff]
      %v2101 = vld [vmem:[#allocation2 + $0xc9] sm:$0xff]
      %v2102 = vld [vmem:[#allocation2 + $0xd9] sm:$0xff]
      %v2103 = vld [vmem:[#allocation2 + $0xe1] sm:$0xff]
      %v2104 = vld [vmem:[#allocation2 + $0xf1] sm:$0xff]
      %v2105 = vld [vmem:[#allocation2 + $0xf9] sm:$0xff]
      %v2106 = vld [vmem:[#allocation2 + $0x109] sm:$0xff]
      %v2107 = vld [vmem:[#allocation2 + $0x111] sm:$0xff]
      %v2108 = vld [vmem:[#allocation2 + $0x121] sm:$0xff]
      %v2109 = vld [vmem:[#allocation2 + $0x129] sm:$0xff]
      %v2110 = vld [vmem:[#allocation2 + $0x139] sm:$0xff]
      %v2111 = vld [vmem:[#allocation2 + $0x141] sm:$0xff]
      %v2112 = vld [vmem:[#allocation2 + $0x151] sm:$0xff]
      %v2113 = vld [vmem:[#allocation2 + $0x159] sm:$0xff]
      %v2114 = vld [vmem:[#allocation2 + $0x169] sm:$0xff]
      %v2115 = vld [vmem:[#allocation2 + $0x171] sm:$0xff]
      %v2116 = vpack.c.bf16 %v2085, %v2084
      %v2117 = vpack.c.bf16 %v2087, %v2086
      %v2118 = vpack.c.bf16 %v2089, %v2088
      %v2119 = vpack.c.bf16 %v2091, %v2090
      %v2120 = vpack.c.bf16 %v2093, %v2092
      %v2121 = vpack.c.bf16 %v2095, %v2094
      %v2122 = vpack.c.bf16 %v2097, %v2096
      %v2123 = vpack.c.bf16 %v2099, %v2098
      %v2124 = vpack.c.bf16 %v2101, %v2100
      %v2125 = vpack.c.bf16 %v2103, %v2102
      %v2126 = vpack.c.bf16 %v2105, %v2104
      %v2127 = vpack.c.bf16 %v2107, %v2106
      %v2128 = vpack.c.bf16 %v2109, %v2108
      %v2129 = vpack.c.bf16 %v2111, %v2110
      %v2130 = vpack.c.bf16 %v2113, %v2112
      %v2131 = vpack.c.bf16 %v2115, %v2114
      %v2132 = vld [vmem:[#allocation2 + $0x2] sm:$0xff]
      %v2133 = vld [vmem:[#allocation2 + $0xa] sm:$0xff]
      %v2134 = vld [vmem:[#allocation2 + $0x1a] sm:$0xff]
      %v2135 = vld [vmem:[#allocation2 + $0x22] sm:$0xff]
      %v2136 = vld [vmem:[#allocation2 + $0x32] sm:$0xff]
      %v2137 = vld [vmem:[#allocation2 + $0x3a] sm:$0xff]
      %v2138 = vld [vmem:[#allocation2 + $0x4a] sm:$0xff]
      %v2139 = vld [vmem:[#allocation2 + $0x52] sm:$0xff]
      %v2140 = vld [vmem:[#allocation2 + $0x62] sm:$0xff]
      %v2141 = vld [vmem:[#allocation2 + $0x6a] sm:$0xff]
      %v2142 = vld [vmem:[#allocation2 + $0x7a] sm:$0xff]
      %v2143 = vld [vmem:[#allocation2 + $0x82] sm:$0xff]
      %v2144 = vld [vmem:[#allocation2 + $0x92] sm:$0xff]
      %v2145 = vld [vmem:[#allocation2 + $0x9a] sm:$0xff]
      %v2146 = vld [vmem:[#allocation2 + $0xaa] sm:$0xff]
      %v2147 = vld [vmem:[#allocation2 + $0xb2] sm:$0xff]
      %v2148 = vld [vmem:[#allocation2 + $0xc2] sm:$0xff]
      %v2149 = vld [vmem:[#allocation2 + $0xca] sm:$0xff]
      %v2150 = vld [vmem:[#allocation2 + $0xda] sm:$0xff]
      %v2151 = vld [vmem:[#allocation2 + $0xe2] sm:$0xff]
      %v2152 = vld [vmem:[#allocation2 + $0xf2] sm:$0xff]
      %v2153 = vld [vmem:[#allocation2 + $0xfa] sm:$0xff]
      %v2154 = vld [vmem:[#allocation2 + $0x10a] sm:$0xff]
      %v2155 = vld [vmem:[#allocation2 + $0x112] sm:$0xff]
      %v2156 = vld [vmem:[#allocation2 + $0x122] sm:$0xff]
      %v2157 = vld [vmem:[#allocation2 + $0x12a] sm:$0xff]
      %v2158 = vld [vmem:[#allocation2 + $0x13a] sm:$0xff]
      %v2159 = vld [vmem:[#allocation2 + $0x142] sm:$0xff]
      %v2160 = vld [vmem:[#allocation2 + $0x152] sm:$0xff]
      %v2161 = vld [vmem:[#allocation2 + $0x15a] sm:$0xff]
      %v2162 = vld [vmem:[#allocation2 + $0x16a] sm:$0xff]
      %v2163 = vld [vmem:[#allocation2 + $0x172] sm:$0xff]
      %v2164 = vpack.c.bf16 %v2133, %v2132
      %v2165 = vpack.c.bf16 %v2135, %v2134
      %v2166 = vpack.c.bf16 %v2137, %v2136
      %v2167 = vpack.c.bf16 %v2139, %v2138
      %v2168 = vpack.c.bf16 %v2141, %v2140
      %v2169 = vpack.c.bf16 %v2143, %v2142
      %v2170 = vpack.c.bf16 %v2145, %v2144
      %v2171 = vpack.c.bf16 %v2147, %v2146
      %v2172 = vpack.c.bf16 %v2149, %v2148
      %v2173 = vpack.c.bf16 %v2151, %v2150
      %v2174 = vpack.c.bf16 %v2153, %v2152
      %v2175 = vpack.c.bf16 %v2155, %v2154
      %v2176 = vpack.c.bf16 %v2157, %v2156
      %v2177 = vpack.c.bf16 %v2159, %v2158
      %v2178 = vpack.c.bf16 %v2161, %v2160
      %v2179 = vpack.c.bf16 %v2163, %v2162
      %v2180 = vld [vmem:[%s368] sm:$0xff]
      %v2181 = vld [vmem:[%s368 + $0x8] sm:$0xff]
      %v2182 = vld [vmem:[%s368 + $0x18] sm:$0xff]
      %v2183 = vld [vmem:[%s368 + $0x20] sm:$0xff]
      %v2184 = vld [vmem:[%s368 + $0x30] sm:$0xff]
      %v2185 = vld [vmem:[%s368 + $0x38] sm:$0xff]
      %v2186 = vld [vmem:[%s368 + $0x48] sm:$0xff]
      %v2187 = vld [vmem:[%s368 + $0x50] sm:$0xff]
      %v2188 = vld [vmem:[%s368 + $0x60] sm:$0xff]
      %v2189 = vld [vmem:[%s368 + $0x68] sm:$0xff]
      %v2190 = vld [vmem:[%s368 + $0x78] sm:$0xff]
      %v2191 = vld [vmem:[%s368 + $0x80] sm:$0xff]
      %v2192 = vld [vmem:[%s368 + $0x90] sm:$0xff]
      %v2193 = vld [vmem:[%s368 + $0x98] sm:$0xff]
      %v2194 = vld [vmem:[%s368 + $0xa8] sm:$0xff]
      %v2195 = vld [vmem:[%s368 + $0xb0] sm:$0xff]
      %v2196 = vld [vmem:[%s368 + $0xc0] sm:$0xff]
      %v2197 = vld [vmem:[%s368 + $0xc8] sm:$0xff]
      %v2198 = vld [vmem:[%s368 + $0xd8] sm:$0xff]
      %v2199 = vld [vmem:[%s368 + $0xe0] sm:$0xff]
      %v2200 = vld [vmem:[%s368 + $0xf0] sm:$0xff]
      %v2201 = vld [vmem:[%s368 + $0xf8] sm:$0xff]
      %v2202 = vld [vmem:[%s368 + $0x108] sm:$0xff]
      %v2203 = vld [vmem:[%s368 + $0x110] sm:$0xff]
      %v2204 = vld [vmem:[%s368 + $0x120] sm:$0xff]
      %v2205 = vld [vmem:[%s368 + $0x128] sm:$0xff]
      %v2206 = vld [vmem:[%s368 + $0x138] sm:$0xff]
      %v2207 = vld [vmem:[%s368 + $0x140] sm:$0xff]
      %v2208 = vld [vmem:[%s368 + $0x150] sm:$0xff]
      %v2209 = vld [vmem:[%s368 + $0x158] sm:$0xff]
      %v2210 = vld [vmem:[%s368 + $0x168] sm:$0xff]
      %v2211 = vld [vmem:[%s368 + $0x170] sm:$0xff]
      %v2212 = vpack.c.bf16 %v2181, %v2180
      %v2213 = vpack.c.bf16 %v2183, %v2182
      %v2214 = vpack.c.bf16 %v2185, %v2184
      %v2215 = vpack.c.bf16 %v2187, %v2186
      %v2216 = vpack.c.bf16 %v2189, %v2188
      %v2217 = vpack.c.bf16 %v2191, %v2190
      %v2218 = vpack.c.bf16 %v2193, %v2192
      %v2219 = vpack.c.bf16 %v2195, %v2194
      %v2220 = vpack.c.bf16 %v2197, %v2196
      %v2221 = vpack.c.bf16 %v2199, %v2198
      %v2222 = vpack.c.bf16 %v2201, %v2200
      %v2223 = vpack.c.bf16 %v2203, %v2202
      %v2224 = vpack.c.bf16 %v2205, %v2204
      %v2225 = vpack.c.bf16 %v2207, %v2206
      %v2226 = vpack.c.bf16 %v2209, %v2208
      %v2227 = vpack.c.bf16 %v2211, %v2210
      %v2228 = vld [vmem:[%s368 + $0x1] sm:$0xff]
      %v2229 = vld [vmem:[%s368 + $0x9] sm:$0xff]
      %v2230 = vld [vmem:[%s368 + $0x19] sm:$0xff]
      %v2231 = vld [vmem:[%s368 + $0x21] sm:$0xff]
      %v2232 = vld [vmem:[%s368 + $0x31] sm:$0xff]
      %v2233 = vld [vmem:[%s368 + $0x39] sm:$0xff]
      %v2234 = vld [vmem:[%s368 + $0x49] sm:$0xff]
      %v2235 = vld [vmem:[%s368 + $0x51] sm:$0xff]
      %v2236 = vld [vmem:[%s368 + $0x61] sm:$0xff]
      %v2237 = vld [vmem:[%s368 + $0x69] sm:$0xff]
      %v2238 = vld [vmem:[%s368 + $0x79] sm:$0xff]
      %v2239 = vld [vmem:[%s368 + $0x81] sm:$0xff]
      %v2240 = vld [vmem:[%s368 + $0x91] sm:$0xff]
      %v2241 = vld [vmem:[%s368 + $0x99] sm:$0xff]
      %v2242 = vld [vmem:[%s368 + $0xa9] sm:$0xff]
      %v2243 = vld [vmem:[%s368 + $0xb1] sm:$0xff]
      %v2244 = vld [vmem:[%s368 + $0xc1] sm:$0xff]
      %v2245 = vld [vmem:[%s368 + $0xc9] sm:$0xff]
      %v2246 = vld [vmem:[%s368 + $0xd9] sm:$0xff]
      %v2247 = vld [vmem:[%s368 + $0xe1] sm:$0xff]
      %v2248 = vld [vmem:[%s368 + $0xf1] sm:$0xff]
      %v2249 = vld [vmem:[%s368 + $0xf9] sm:$0xff]
      %v2250 = vld [vmem:[%s368 + $0x109] sm:$0xff]
      %v2251 = vld [vmem:[%s368 + $0x111] sm:$0xff]
      %v2252 = vld [vmem:[%s368 + $0x121] sm:$0xff]
      %v2253 = vld [vmem:[%s368 + $0x129] sm:$0xff]
      %v2254 = vld [vmem:[%s368 + $0x139] sm:$0xff]
      %v2255 = vld [vmem:[%s368 + $0x141] sm:$0xff]
      %v2256 = vld [vmem:[%s368 + $0x151] sm:$0xff]
      %v2257 = vld [vmem:[%s368 + $0x159] sm:$0xff]
      %v2258 = vld [vmem:[%s368 + $0x169] sm:$0xff]
      %v2259 = vld [vmem:[%s368 + $0x171] sm:$0xff]
      %v2260 = vpack.c.bf16 %v2229, %v2228
      %v2261 = vpack.c.bf16 %v2231, %v2230
      %v2262 = vpack.c.bf16 %v2233, %v2232
      %v2263 = vpack.c.bf16 %v2235, %v2234
      %v2264 = vpack.c.bf16 %v2237, %v2236
      %v2265 = vpack.c.bf16 %v2239, %v2238
      %v2266 = vpack.c.bf16 %v2241, %v2240
      %v2267 = vpack.c.bf16 %v2243, %v2242
      %v2268 = vpack.c.bf16 %v2245, %v2244
      %v2269 = vpack.c.bf16 %v2247, %v2246
      %v2270 = vpack.c.bf16 %v2249, %v2248
      %v2271 = vpack.c.bf16 %v2251, %v2250
      %v2272 = vpack.c.bf16 %v2253, %v2252
      %v2273 = vpack.c.bf16 %v2255, %v2254
      %v2274 = vpack.c.bf16 %v2257, %v2256
      %v2275 = vpack.c.bf16 %v2259, %v2258
      %v2276 = vld [vmem:[%s368 + $0x2] sm:$0xff]
      %v2277 = vld [vmem:[%s368 + $0xa] sm:$0xff]
      %v2278 = vld [vmem:[%s368 + $0x1a] sm:$0xff]
      %v2279 = vld [vmem:[%s368 + $0x22] sm:$0xff]
      %v2280 = vld [vmem:[%s368 + $0x32] sm:$0xff]
      %v2281 = vld [vmem:[%s368 + $0x3a] sm:$0xff]
      %v2282 = vld [vmem:[%s368 + $0x4a] sm:$0xff]
      %v2283 = vld [vmem:[%s368 + $0x52] sm:$0xff]
      %v2284 = vld [vmem:[%s368 + $0x62] sm:$0xff]
      %v2285 = vld [vmem:[%s368 + $0x6a] sm:$0xff]
      %v2286 = vld [vmem:[%s368 + $0x7a] sm:$0xff]
      %v2287 = vld [vmem:[%s368 + $0x82] sm:$0xff]
      %v2288 = vld [vmem:[%s368 + $0x92] sm:$0xff]
      %v2289 = vld [vmem:[%s368 + $0x9a] sm:$0xff]
      %v2290 = vld [vmem:[%s368 + $0xaa] sm:$0xff]
      %v2291 = vld [vmem:[%s368 + $0xb2] sm:$0xff]
      %v2292 = vld [vmem:[%s368 + $0xc2] sm:$0xff]
      %v2293 = vld [vmem:[%s368 + $0xca] sm:$0xff]
      %v2294 = vld [vmem:[%s368 + $0xda] sm:$0xff]
      %v2295 = vld [vmem:[%s368 + $0xe2] sm:$0xff]
      %v2296 = vld [vmem:[%s368 + $0xf2] sm:$0xff]
      %v2297 = vld [vmem:[%s368 + $0xfa] sm:$0xff]
      %v2298 = vld [vmem:[%s368 + $0x10a] sm:$0xff]
      %v2299 = vld [vmem:[%s368 + $0x112] sm:$0xff]
      %v2300 = vld [vmem:[%s368 + $0x122] sm:$0xff]
      %v2301 = vld [vmem:[%s368 + $0x12a] sm:$0xff]
      %v2302 = vld [vmem:[%s368 + $0x13a] sm:$0xff]
      %v2303 = vld [vmem:[%s368 + $0x142] sm:$0xff]
      %v2304 = vld [vmem:[%s368 + $0x152] sm:$0xff]
      %v2305 = vld [vmem:[%s368 + $0x15a] sm:$0xff]
      %v2306 = vld [vmem:[%s368 + $0x16a] sm:$0xff]
      %v2307 = vld [vmem:[%s368 + $0x172] sm:$0xff]
      %v2308 = vpack.c.bf16 %v2277, %v2276
      %v2309 = vpack.c.bf16 %v2279, %v2278
      %v2310 = vpack.c.bf16 %v2281, %v2280
      %v2311 = vpack.c.bf16 %v2283, %v2282
      %v2312 = vpack.c.bf16 %v2285, %v2284
      %v2313 = vpack.c.bf16 %v2287, %v2286
      %v2314 = vpack.c.bf16 %v2289, %v2288
      %v2315 = vpack.c.bf16 %v2291, %v2290
      %v2316 = vpack.c.bf16 %v2293, %v2292
      %v2317 = vpack.c.bf16 %v2295, %v2294
      %v2318 = vpack.c.bf16 %v2297, %v2296
      %v2319 = vpack.c.bf16 %v2299, %v2298
      %v2320 = vpack.c.bf16 %v2301, %v2300
      %v2321 = vpack.c.bf16 %v2303, %v2302
      %v2322 = vpack.c.bf16 %v2305, %v2304
      %v2323 = vpack.c.bf16 %v2307, %v2306
      %v2324 = vld [vmem:[%s689] sm:$0xff]
      %v2325 = vld [vmem:[%s689 + $0x8] sm:$0xff]
      %v2326 = vld [vmem:[%s689 + $0x18] sm:$0xff]
      %v2327 = vld [vmem:[%s689 + $0x20] sm:$0xff]
      %v2328 = vld [vmem:[%s689 + $0x30] sm:$0xff]
      %v2329 = vld [vmem:[%s689 + $0x38] sm:$0xff]
      %v2330 = vld [vmem:[%s689 + $0x48] sm:$0xff]
      %v2331 = vld [vmem:[%s689 + $0x50] sm:$0xff]
      %v2332 = vld [vmem:[%s689 + $0x60] sm:$0xff]
      %v2333 = vld [vmem:[%s689 + $0x68] sm:$0xff]
      %v2334 = vld [vmem:[%s689 + $0x78] sm:$0xff]
      %v2335 = vld [vmem:[%s689 + $0x80] sm:$0xff]
      %v2336 = vld [vmem:[%s689 + $0x90] sm:$0xff]
      %v2337 = vld [vmem:[%s689 + $0x98] sm:$0xff]
      %v2338 = vld [vmem:[%s689 + $0xa8] sm:$0xff]
      %v2339 = vld [vmem:[%s689 + $0xb0] sm:$0xff]
      %v2340 = vld [vmem:[%s689 + $0xc0] sm:$0xff]
      %v2341 = vld [vmem:[%s689 + $0xc8] sm:$0xff]
      %v2342 = vld [vmem:[%s689 + $0xd8] sm:$0xff]
      %v2343 = vld [vmem:[%s689 + $0xe0] sm:$0xff]
      %v2344 = vld [vmem:[%s689 + $0xf0] sm:$0xff]
      %v2345 = vld [vmem:[%s689 + $0xf8] sm:$0xff]
      %v2346 = vld [vmem:[%s689 + $0x108] sm:$0xff]
      %v2347 = vld [vmem:[%s689 + $0x110] sm:$0xff]
      %v2348 = vld [vmem:[%s689 + $0x120] sm:$0xff]
      %v2349 = vld [vmem:[%s689 + $0x128] sm:$0xff]
      %v2350 = vld [vmem:[%s689 + $0x138] sm:$0xff]
      %v2351 = vld [vmem:[%s689 + $0x140] sm:$0xff]
      %v2352 = vld [vmem:[%s689 + $0x150] sm:$0xff]
      %v2353 = vld [vmem:[%s689 + $0x158] sm:$0xff]
      %v2354 = vld [vmem:[%s689 + $0x168] sm:$0xff]
      %v2355 = vld [vmem:[%s689 + $0x170] sm:$0xff]
      %v2356 = vpack.c.bf16 %v2325, %v2324
      %v2357 = vpack.c.bf16 %v2327, %v2326
      %v2358 = vpack.c.bf16 %v2329, %v2328
      %v2359 = vpack.c.bf16 %v2331, %v2330
      %v2360 = vpack.c.bf16 %v2333, %v2332
      %v2361 = vpack.c.bf16 %v2335, %v2334
      %v2362 = vpack.c.bf16 %v2337, %v2336
      %v2363 = vpack.c.bf16 %v2339, %v2338
      %v2364 = vpack.c.bf16 %v2341, %v2340
      %v2365 = vpack.c.bf16 %v2343, %v2342
      %v2366 = vpack.c.bf16 %v2345, %v2344
      %v2367 = vpack.c.bf16 %v2347, %v2346
      %v2368 = vpack.c.bf16 %v2349, %v2348
      %v2369 = vpack.c.bf16 %v2351, %v2350
      %v2370 = vpack.c.bf16 %v2353, %v2352
      %v2371 = vpack.c.bf16 %v2355, %v2354
      %v2372 = vld [vmem:[%s689 + $0x1] sm:$0xff]
      %v2373 = vld [vmem:[%s689 + $0x9] sm:$0xff]
      %v2374 = vld [vmem:[%s689 + $0x19] sm:$0xff]
      %v2375 = vld [vmem:[%s689 + $0x21] sm:$0xff]
      %v2376 = vld [vmem:[%s689 + $0x31] sm:$0xff]
      %v2377 = vld [vmem:[%s689 + $0x39] sm:$0xff]
      %v2378 = vld [vmem:[%s689 + $0x49] sm:$0xff]
      %v2379 = vld [vmem:[%s689 + $0x51] sm:$0xff]
      %v2380 = vld [vmem:[%s689 + $0x61] sm:$0xff]
      %v2381 = vld [vmem:[%s689 + $0x69] sm:$0xff]
      %v2382 = vld [vmem:[%s689 + $0x79] sm:$0xff]
      %v2383 = vld [vmem:[%s689 + $0x81] sm:$0xff]
      %v2384 = vld [vmem:[%s689 + $0x91] sm:$0xff]
      %v2385 = vld [vmem:[%s689 + $0x99] sm:$0xff]
      %v2386 = vld [vmem:[%s689 + $0xa9] sm:$0xff]
      %v2387 = vld [vmem:[%s689 + $0xb1] sm:$0xff]
      %v2388 = vld [vmem:[%s689 + $0xc1] sm:$0xff]
      %v2389 = vld [vmem:[%s689 + $0xc9] sm:$0xff]
      %v2390 = vld [vmem:[%s689 + $0xd9] sm:$0xff]
      %v2391 = vld [vmem:[%s689 + $0xe1] sm:$0xff]
      %v2392 = vld [vmem:[%s689 + $0xf1] sm:$0xff]
      %v2393 = vld [vmem:[%s689 + $0xf9] sm:$0xff]
      %v2394 = vld [vmem:[%s689 + $0x109] sm:$0xff]
      %v2395 = vld [vmem:[%s689 + $0x111] sm:$0xff]
      %v2396 = vld [vmem:[%s689 + $0x121] sm:$0xff]
      %v2397 = vld [vmem:[%s689 + $0x129] sm:$0xff]
      %v2398 = vld [vmem:[%s689 + $0x139] sm:$0xff]
      %v2399 = vld [vmem:[%s689 + $0x141] sm:$0xff]
      %v2400 = vld [vmem:[%s689 + $0x151] sm:$0xff]
      %v2401 = vld [vmem:[%s689 + $0x159] sm:$0xff]
      %v2402 = vld [vmem:[%s689 + $0x169] sm:$0xff]
      %v2403 = vld [vmem:[%s689 + $0x171] sm:$0xff]
      %v2404 = vpack.c.bf16 %v2373, %v2372
      %v2405 = vpack.c.bf16 %v2375, %v2374
      %v2406 = vpack.c.bf16 %v2377, %v2376
      %v2407 = vpack.c.bf16 %v2379, %v2378
      %v2408 = vpack.c.bf16 %v2381, %v2380
      %v2409 = vpack.c.bf16 %v2383, %v2382
      %v2410 = vpack.c.bf16 %v2385, %v2384
      %v2411 = vpack.c.bf16 %v2387, %v2386
      %v2412 = vpack.c.bf16 %v2389, %v2388
      %v2413 = vpack.c.bf16 %v2391, %v2390
      %v2414 = vpack.c.bf16 %v2393, %v2392
      %v2415 = vpack.c.bf16 %v2395, %v2394
      %v2416 = vpack.c.bf16 %v2397, %v2396
      %v2417 = vpack.c.bf16 %v2399, %v2398
      %v2418 = vpack.c.bf16 %v2401, %v2400
      %v2419 = vpack.c.bf16 %v2403, %v2402
      %v2420 = vld [vmem:[%s689 + $0x2] sm:$0xff]
      %v2421 = vld [vmem:[%s689 + $0xa] sm:$0xff]
      %v2422 = vld [vmem:[%s689 + $0x1a] sm:$0xff]
      %v2423 = vld [vmem:[%s689 + $0x22] sm:$0xff]
      %v2424 = vld [vmem:[%s689 + $0x32] sm:$0xff]
      %v2425 = vld [vmem:[%s689 + $0x3a] sm:$0xff]
      %v2426 = vld [vmem:[%s689 + $0x4a] sm:$0xff]
      %v2427 = vld [vmem:[%s689 + $0x52] sm:$0xff]
      %v2428 = vld [vmem:[%s689 + $0x62] sm:$0xff]
      %v2429 = vld [vmem:[%s689 + $0x6a] sm:$0xff]
      %v2430 = vld [vmem:[%s689 + $0x7a] sm:$0xff]
      %v2431 = vld [vmem:[%s689 + $0x82] sm:$0xff]
      %v2432 = vld [vmem:[%s689 + $0x92] sm:$0xff]
      %v2433 = vld [vmem:[%s689 + $0x9a] sm:$0xff]
      %v2434 = vld [vmem:[%s689 + $0xaa] sm:$0xff]
      %v2435 = vld [vmem:[%s689 + $0xb2] sm:$0xff]
      %v2436 = vld [vmem:[%s689 + $0xc2] sm:$0xff]
      %v2437 = vld [vmem:[%s689 + $0xca] sm:$0xff]
      %v2438 = vld [vmem:[%s689 + $0xda] sm:$0xff]
      %v2439 = vld [vmem:[%s689 + $0xe2] sm:$0xff]
      %v2440 = vld [vmem:[%s689 + $0xf2] sm:$0xff]
      %v2441 = vld [vmem:[%s689 + $0xfa] sm:$0xff]
      %v2442 = vld [vmem:[%s689 + $0x10a] sm:$0xff]
      %v2443 = vld [vmem:[%s689 + $0x112] sm:$0xff]
      %v2444 = vld [vmem:[%s689 + $0x122] sm:$0xff]
      %v2445 = vld [vmem:[%s689 + $0x12a] sm:$0xff]
      %v2446 = vld [vmem:[%s689 + $0x13a] sm:$0xff]
      %v2447 = vld [vmem:[%s689 + $0x142] sm:$0xff]
      %v2448 = vld [vmem:[%s689 + $0x152] sm:$0xff]
      %v2449 = vld [vmem:[%s689 + $0x15a] sm:$0xff]
      %v2450 = vld [vmem:[%s689 + $0x16a] sm:$0xff]
      %v2451 = vld [vmem:[%s689 + $0x172] sm:$0xff]
      %v2452 = vpack.c.bf16 %v2421, %v2420
      %v2453 = vpack.c.bf16 %v2423, %v2422
      %v2454 = vpack.c.bf16 %v2425, %v2424
      %v2455 = vpack.c.bf16 %v2427, %v2426
      %v2456 = vpack.c.bf16 %v2429, %v2428
      %v2457 = vpack.c.bf16 %v2431, %v2430
      %v2458 = vpack.c.bf16 %v2433, %v2432
      %v2459 = vpack.c.bf16 %v2435, %v2434
      %v2460 = vpack.c.bf16 %v2437, %v2436
      %v2461 = vpack.c.bf16 %v2439, %v2438
      %v2462 = vpack.c.bf16 %v2441, %v2440
      %v2463 = vpack.c.bf16 %v2443, %v2442
      %v2464 = vpack.c.bf16 %v2445, %v2444
      %v2465 = vpack.c.bf16 %v2447, %v2446
      %v2466 = vpack.c.bf16 %v2449, %v2448
      %v2467 = vpack.c.bf16 %v2451, %v2450
      %2484 = vrot.lane.b32.xlu0 %v2116, 4
      %v2485 = vpop.permute.xlu0 %2484
      %2486 = vrot.lane.b32.xlu0 %v2117, 4
      %v2487 = vpop.permute.xlu0 %2486
      %2488 = vrot.lane.b32.xlu0 %v2118, 4
      %v2489 = vpop.permute.xlu0 %2488
      %2490 = vrot.lane.b32.xlu0 %v2119, 4
      %v2491 = vpop.permute.xlu0 %2490
      %2492 = vrot.lane.b32.xlu0 %v2120, 4
      %v2493 = vpop.permute.xlu0 %2492
      %2494 = vrot.lane.b32.xlu0 %v2121, 4
      %v2495 = vpop.permute.xlu0 %2494
      %2496 = vrot.lane.b32.xlu0 %v2122, 4
      %v2497 = vpop.permute.xlu0 %2496
      %2498 = vrot.lane.b32.xlu0 %v2123, 4
      %v2499 = vpop.permute.xlu0 %2498
      %2500 = vrot.lane.b32.xlu0 %v2124, 4
      %v2501 = vpop.permute.xlu0 %2500
      %2502 = vrot.lane.b32.xlu0 %v2125, 4
      %v2503 = vpop.permute.xlu0 %2502
      %2504 = vrot.lane.b32.xlu0 %v2126, 4
      %v2505 = vpop.permute.xlu0 %2504
      %2506 = vrot.lane.b32.xlu0 %v2127, 4
      %v2507 = vpop.permute.xlu0 %2506
      %2508 = vrot.lane.b32.xlu0 %v2128, 4
      %v2509 = vpop.permute.xlu0 %2508
      %2510 = vrot.lane.b32.xlu0 %v2129, 4
      %v2511 = vpop.permute.xlu0 %2510
      %2512 = vrot.lane.b32.xlu0 %v2130, 4
      %v2513 = vpop.permute.xlu0 %2512
      %2514 = vrot.lane.b32.xlu0 %v2131, 4
      %v2515 = vpop.permute.xlu0 %2514
      %2532 = vrot.lane.b32.xlu0 %v2164, 8
      %v2533 = vpop.permute.xlu0 %2532
      %2534 = vrot.lane.b32.xlu0 %v2165, 8
      %v2535 = vpop.permute.xlu0 %2534
      %2536 = vrot.lane.b32.xlu0 %v2166, 8
      %v2537 = vpop.permute.xlu0 %2536
      %2538 = vrot.lane.b32.xlu0 %v2167, 8
      %v2539 = vpop.permute.xlu0 %2538
      %2540 = vrot.lane.b32.xlu0 %v2168, 8
      %v2541 = vpop.permute.xlu0 %2540
      %2542 = vrot.lane.b32.xlu0 %v2169, 8
      %v2543 = vpop.permute.xlu0 %2542
      %2544 = vrot.lane.b32.xlu0 %v2170, 8
      %v2545 = vpop.permute.xlu0 %2544
      %2546 = vrot.lane.b32.xlu0 %v2171, 8
      %v2547 = vpop.permute.xlu0 %2546
      %2548 = vrot.lane.b32.xlu0 %v2172, 8
      %v2549 = vpop.permute.xlu0 %2548
      %2550 = vrot.lane.b32.xlu0 %v2173, 8
      %v2551 = vpop.permute.xlu0 %2550
      %2552 = vrot.lane.b32.xlu0 %v2174, 8
      %v2553 = vpop.permute.xlu0 %2552
      %2554 = vrot.lane.b32.xlu0 %v2175, 8
      %v2555 = vpop.permute.xlu0 %2554
      %2556 = vrot.lane.b32.xlu0 %v2176, 8
      %v2557 = vpop.permute.xlu0 %2556
      %2558 = vrot.lane.b32.xlu0 %v2177, 8
      %v2559 = vpop.permute.xlu0 %2558
      %2560 = vrot.lane.b32.xlu0 %v2178, 8
      %v2561 = vpop.permute.xlu0 %2560
      %2562 = vrot.lane.b32.xlu0 %v2179, 8
      %v2563 = vpop.permute.xlu0 %2562
      %2580 = vrot.lane.b32.xlu0 %v2212, 12
      %v2581 = vpop.permute.xlu0 %2580
      %2582 = vrot.lane.b32.xlu0 %v2213, 12
      %v2583 = vpop.permute.xlu0 %2582
      %2584 = vrot.lane.b32.xlu0 %v2214, 12
      %v2585 = vpop.permute.xlu0 %2584
      %2586 = vrot.lane.b32.xlu0 %v2215, 12
      %v2587 = vpop.permute.xlu0 %2586
      %2588 = vrot.lane.b32.xlu0 %v2216, 12
      %v2589 = vpop.permute.xlu0 %2588
      %2590 = vrot.lane.b32.xlu0 %v2217, 12
      %v2591 = vpop.permute.xlu0 %2590
      %2592 = vrot.lane.b32.xlu0 %v2218, 12
      %v2593 = vpop.permute.xlu0 %2592
      %2594 = vrot.lane.b32.xlu0 %v2219, 12
      %v2595 = vpop.permute.xlu0 %2594
      %2596 = vrot.lane.b32.xlu0 %v2220, 12
      %v2597 = vpop.permute.xlu0 %2596
      %2598 = vrot.lane.b32.xlu0 %v2221, 12
      %v2599 = vpop.permute.xlu0 %2598
      %2600 = vrot.lane.b32.xlu0 %v2222, 12
      %v2601 = vpop.permute.xlu0 %2600
      %2602 = vrot.lane.b32.xlu0 %v2223, 12
      %v2603 = vpop.permute.xlu0 %2602
      %2604 = vrot.lane.b32.xlu0 %v2224, 12
      %v2605 = vpop.permute.xlu0 %2604
      %2606 = vrot.lane.b32.xlu0 %v2225, 12
      %v2607 = vpop.permute.xlu0 %2606
      %2608 = vrot.lane.b32.xlu0 %v2226, 12
      %v2609 = vpop.permute.xlu0 %2608
      %2610 = vrot.lane.b32.xlu0 %v2227, 12
      %v2611 = vpop.permute.xlu0 %2610
      %2628 = vrot.lane.b32.xlu0 %v2260, 16
      %v2629 = vpop.permute.xlu0 %2628
      %2630 = vrot.lane.b32.xlu0 %v2261, 16
      %v2631 = vpop.permute.xlu0 %2630
      %2632 = vrot.lane.b32.xlu0 %v2262, 16
      %v2633 = vpop.permute.xlu0 %2632
      %2634 = vrot.lane.b32.xlu0 %v2263, 16
      %v2635 = vpop.permute.xlu0 %2634
      %2636 = vrot.lane.b32.xlu0 %v2264, 16
      %v2637 = vpop.permute.xlu0 %2636
      %2638 = vrot.lane.b32.xlu0 %v2265, 16
      %v2639 = vpop.permute.xlu0 %2638
      %2640 = vrot.lane.b32.xlu0 %v2266, 16
      %v2641 = vpop.permute.xlu0 %2640
      %2642 = vrot.lane.b32.xlu0 %v2267, 16
      %v2643 = vpop.permute.xlu0 %2642
      %2644 = vrot.lane.b32.xlu0 %v2268, 16
      %v2645 = vpop.permute.xlu0 %2644
      %2646 = vrot.lane.b32.xlu0 %v2269, 16
      %v2647 = vpop.permute.xlu0 %2646
      %2648 = vrot.lane.b32.xlu0 %v2270, 16
      %v2649 = vpop.permute.xlu0 %2648
      %2650 = vrot.lane.b32.xlu0 %v2271, 16
      %v2651 = vpop.permute.xlu0 %2650
      %2652 = vrot.lane.b32.xlu0 %v2272, 16
      %v2653 = vpop.permute.xlu0 %2652
      %2654 = vrot.lane.b32.xlu0 %v2273, 16
      %v2655 = vpop.permute.xlu0 %2654
      %2656 = vrot.lane.b32.xlu0 %v2274, 16
      %v2657 = vpop.permute.xlu0 %2656
      %2658 = vrot.lane.b32.xlu0 %v2275, 16
      %v2659 = vpop.permute.xlu0 %2658
      %2676 = vrot.lane.b32.xlu0 %v2308, 20
      %v2677 = vpop.permute.xlu0 %2676
      %2678 = vrot.lane.b32.xlu0 %v2309, 20
      %v2679 = vpop.permute.xlu0 %2678
      %2680 = vrot.lane.b32.xlu0 %v2310, 20
      %v2681 = vpop.permute.xlu0 %2680
      %2682 = vrot.lane.b32.xlu0 %v2311, 20
      %v2683 = vpop.permute.xlu0 %2682
      %2684 = vrot.lane.b32.xlu0 %v2312, 20
      %v2685 = vpop.permute.xlu0 %2684
      %2686 = vrot.lane.b32.xlu0 %v2313, 20
      %v2687 = vpop.permute.xlu0 %2686
      %2688 = vrot.lane.b32.xlu0 %v2314, 20
      %v2689 = vpop.permute.xlu0 %2688
      %2690 = vrot.lane.b32.xlu0 %v2315, 20
      %v2691 = vpop.permute.xlu0 %2690
      %2692 = vrot.lane.b32.xlu0 %v2316, 20
      %v2693 = vpop.permute.xlu0 %2692
      %2694 = vrot.lane.b32.xlu0 %v2317, 20
      %v2695 = vpop.permute.xlu0 %2694
      %2696 = vrot.lane.b32.xlu0 %v2318, 20
      %v2697 = vpop.permute.xlu0 %2696
      %2698 = vrot.lane.b32.xlu0 %v2319, 20
      %v2699 = vpop.permute.xlu0 %2698
      %2700 = vrot.lane.b32.xlu0 %v2320, 20
      %v2701 = vpop.permute.xlu0 %2700
      %2702 = vrot.lane.b32.xlu0 %v2321, 20
      %v2703 = vpop.permute.xlu0 %2702
      %2704 = vrot.lane.b32.xlu0 %v2322, 20
      %v2705 = vpop.permute.xlu0 %2704
      %2706 = vrot.lane.b32.xlu0 %v2323, 20
      %v2707 = vpop.permute.xlu0 %2706
      %2724 = vrot.lane.b32.xlu0 %v2356, 24
      %v2725 = vpop.permute.xlu0 %2724
      %2726 = vrot.lane.b32.xlu0 %v2357, 24
      %v2727 = vpop.permute.xlu0 %2726
      %2728 = vrot.lane.b32.xlu0 %v2358, 24
      %v2729 = vpop.permute.xlu0 %2728
      %2730 = vrot.lane.b32.xlu0 %v2359, 24
      %v2731 = vpop.permute.xlu0 %2730
      %2732 = vrot.lane.b32.xlu0 %v2360, 24
      %v2733 = vpop.permute.xlu0 %2732
      %2734 = vrot.lane.b32.xlu0 %v2361, 24
      %v2735 = vpop.permute.xlu0 %2734
      %2736 = vrot.lane.b32.xlu0 %v2362, 24
      %v2737 = vpop.permute.xlu0 %2736
      %2738 = vrot.lane.b32.xlu0 %v2363, 24
      %v2739 = vpop.permute.xlu0 %2738
      %2740 = vrot.lane.b32.xlu0 %v2364, 24
      %v2741 = vpop.permute.xlu0 %2740
      %2742 = vrot.lane.b32.xlu0 %v2365, 24
      %v2743 = vpop.permute.xlu0 %2742
      %2744 = vrot.lane.b32.xlu0 %v2366, 24
      %v2745 = vpop.permute.xlu0 %2744
      %2746 = vrot.lane.b32.xlu0 %v2367, 24
      %v2747 = vpop.permute.xlu0 %2746
      %2748 = vrot.lane.b32.xlu0 %v2368, 24
      %v2749 = vpop.permute.xlu0 %2748
      %2750 = vrot.lane.b32.xlu0 %v2369, 24
      %v2751 = vpop.permute.xlu0 %2750
      %2752 = vrot.lane.b32.xlu0 %v2370, 24
      %v2753 = vpop.permute.xlu0 %2752
      %2754 = vrot.lane.b32.xlu0 %v2371, 24
      %v2755 = vpop.permute.xlu0 %2754
      %2772 = vrot.lane.b32.xlu0 %v2404, 28
      %v2773 = vpop.permute.xlu0 %2772
      %2774 = vrot.lane.b32.xlu0 %v2405, 28
      %v2775 = vpop.permute.xlu0 %2774
      %2776 = vrot.lane.b32.xlu0 %v2406, 28
      %v2777 = vpop.permute.xlu0 %2776
      %2778 = vrot.lane.b32.xlu0 %v2407, 28
      %v2779 = vpop.permute.xlu0 %2778
      %2780 = vrot.lane.b32.xlu0 %v2408, 28
      %v2781 = vpop.permute.xlu0 %2780
      %2782 = vrot.lane.b32.xlu0 %v2409, 28
      %v2783 = vpop.permute.xlu0 %2782
      %2784 = vrot.lane.b32.xlu0 %v2410, 28
      %v2785 = vpop.permute.xlu0 %2784
      %2786 = vrot.lane.b32.xlu0 %v2411, 28
      %v2787 = vpop.permute.xlu0 %2786
      %2788 = vrot.lane.b32.xlu0 %v2412, 28
      %v2789 = vpop.permute.xlu0 %2788
      %2790 = vrot.lane.b32.xlu0 %v2413, 28
      %v2791 = vpop.permute.xlu0 %2790
      %2792 = vrot.lane.b32.xlu0 %v2414, 28
      %v2793 = vpop.permute.xlu0 %2792
      %2794 = vrot.lane.b32.xlu0 %v2415, 28
      %v2795 = vpop.permute.xlu0 %2794
      %2796 = vrot.lane.b32.xlu0 %v2416, 28
      %v2797 = vpop.permute.xlu0 %2796
      %2798 = vrot.lane.b32.xlu0 %v2417, 28
      %v2799 = vpop.permute.xlu0 %2798
      %2800 = vrot.lane.b32.xlu0 %v2418, 28
      %v2801 = vpop.permute.xlu0 %2800
      %2802 = vrot.lane.b32.xlu0 %v2419, 28
      %v2803 = vpop.permute.xlu0 %2802
      %2820 = vrot.lane.b32.xlu0 %v2452, 32
      %v2821 = vpop.permute.xlu0 %2820
      %2822 = vrot.lane.b32.xlu0 %v2453, 32
      %v2823 = vpop.permute.xlu0 %2822
      %2824 = vrot.lane.b32.xlu0 %v2454, 32
      %v2825 = vpop.permute.xlu0 %2824
      %2826 = vrot.lane.b32.xlu0 %v2455, 32
      %v2827 = vpop.permute.xlu0 %2826
      %2828 = vrot.lane.b32.xlu0 %v2456, 32
      %v2829 = vpop.permute.xlu0 %2828
      %2830 = vrot.lane.b32.xlu0 %v2457, 32
      %v2831 = vpop.permute.xlu0 %2830
      %2832 = vrot.lane.b32.xlu0 %v2458, 32
      %v2833 = vpop.permute.xlu0 %2832
      %2834 = vrot.lane.b32.xlu0 %v2459, 32
      %v2835 = vpop.permute.xlu0 %2834
      %2836 = vrot.lane.b32.xlu0 %v2460, 32
      %v2837 = vpop.permute.xlu0 %2836
      %2838 = vrot.lane.b32.xlu0 %v2461, 32
      %v2839 = vpop.permute.xlu0 %2838
      %2840 = vrot.lane.b32.xlu0 %v2462, 32
      %v2841 = vpop.permute.xlu0 %2840
      %2842 = vrot.lane.b32.xlu0 %v2463, 32
      %v2843 = vpop.permute.xlu0 %2842
      %2844 = vrot.lane.b32.xlu0 %v2464, 32
      %v2845 = vpop.permute.xlu0 %2844
      %2846 = vrot.lane.b32.xlu0 %v2465, 32
      %v2847 = vpop.permute.xlu0 %2846
      %2848 = vrot.lane.b32.xlu0 %v2466, 32
      %v2849 = vpop.permute.xlu0 %2848
      %2850 = vrot.lane.b32.xlu0 %v2467, 32
      %v2851 = vpop.permute.xlu0 %2850
      %v2854 = vsel %vm280, %v2068, %v2485
      %v2857 = vsel %vm280, %v2069, %v2487
      %v2860 = vsel %vm280, %v2070, %v2489
      %v2863 = vsel %vm280, %v2071, %v2491
      %v2866 = vsel %vm280, %v2072, %v2493
      %v2869 = vsel %vm280, %v2073, %v2495
      %v2872 = vsel %vm280, %v2074, %v2497
      %v2875 = vsel %vm280, %v2075, %v2499
      %v2878 = vsel %vm280, %v2076, %v2501
      %v2881 = vsel %vm280, %v2077, %v2503
      %v2884 = vsel %vm280, %v2078, %v2505
      %v2887 = vsel %vm280, %v2079, %v2507
      %v2890 = vsel %vm280, %v2080, %v2509
      %v2893 = vsel %vm280, %v2081, %v2511
      %v2896 = vsel %vm280, %v2082, %v2513
      %v2899 = vsel %vm280, %v2083, %v2515
      %v2901 = vsel %vm1266, %v2854, %v2533
      %v2903 = vsel %vm1266, %v2857, %v2535
      %v2905 = vsel %vm1266, %v2860, %v2537
      %v2907 = vsel %vm1266, %v2863, %v2539
      %v2909 = vsel %vm1266, %v2866, %v2541
      %v2911 = vsel %vm1266, %v2869, %v2543
      %v2913 = vsel %vm1266, %v2872, %v2545
      %v2915 = vsel %vm1266, %v2875, %v2547
      %v2917 = vsel %vm1266, %v2878, %v2549
      %v2919 = vsel %vm1266, %v2881, %v2551
      %v2921 = vsel %vm1266, %v2884, %v2553
      %v2923 = vsel %vm1266, %v2887, %v2555
      %v2925 = vsel %vm1266, %v2890, %v2557
      %v2927 = vsel %vm1266, %v2893, %v2559
      %v2929 = vsel %vm1266, %v2896, %v2561
      %v2931 = vsel %vm1266, %v2899, %v2563
      %v2933 = vsel %vm1299, %v2901, %v2581
      %v2935 = vsel %vm1299, %v2903, %v2583
      %v2937 = vsel %vm1299, %v2905, %v2585
      %v2939 = vsel %vm1299, %v2907, %v2587
      %v2941 = vsel %vm1299, %v2909, %v2589
      %v2943 = vsel %vm1299, %v2911, %v2591
      %v2945 = vsel %vm1299, %v2913, %v2593
      %v2947 = vsel %vm1299, %v2915, %v2595
      %v2949 = vsel %vm1299, %v2917, %v2597
      %v2951 = vsel %vm1299, %v2919, %v2599
      %v2953 = vsel %vm1299, %v2921, %v2601
      %v2955 = vsel %vm1299, %v2923, %v2603
      %v2957 = vsel %vm1299, %v2925, %v2605
      %v2959 = vsel %vm1299, %v2927, %v2607
      %v2961 = vsel %vm1299, %v2929, %v2609
      %v2963 = vsel %vm1299, %v2931, %v2611
      %v2965 = vsel %vm1332, %v2933, %v2629
      %v2967 = vsel %vm1332, %v2935, %v2631
      %v2969 = vsel %vm1332, %v2937, %v2633
      %v2971 = vsel %vm1332, %v2939, %v2635
      %v2973 = vsel %vm1332, %v2941, %v2637
      %v2975 = vsel %vm1332, %v2943, %v2639
      %v2977 = vsel %vm1332, %v2945, %v2641
      %v2979 = vsel %vm1332, %v2947, %v2643
      %v2981 = vsel %vm1332, %v2949, %v2645
      %v2983 = vsel %vm1332, %v2951, %v2647
      %v2985 = vsel %vm1332, %v2953, %v2649
      %v2987 = vsel %vm1332, %v2955, %v2651
      %v2989 = vsel %vm1332, %v2957, %v2653
      %v2991 = vsel %vm1332, %v2959, %v2655
      %v2993 = vsel %vm1332, %v2961, %v2657
      %v2995 = vsel %vm1332, %v2963, %v2659
      %v2997 = vsel %vm1365, %v2965, %v2677
      %v2999 = vsel %vm1365, %v2967, %v2679
      %v3001 = vsel %vm1365, %v2969, %v2681
      %v3003 = vsel %vm1365, %v2971, %v2683
      %v3005 = vsel %vm1365, %v2973, %v2685
      %v3007 = vsel %vm1365, %v2975, %v2687
      %v3009 = vsel %vm1365, %v2977, %v2689
      %v3011 = vsel %vm1365, %v2979, %v2691
      %v3013 = vsel %vm1365, %v2981, %v2693
      %v3015 = vsel %vm1365, %v2983, %v2695
      %v3017 = vsel %vm1365, %v2985, %v2697
      %v3019 = vsel %vm1365, %v2987, %v2699
      %v3021 = vsel %vm1365, %v2989, %v2701
      %v3023 = vsel %vm1365, %v2991, %v2703
      %v3025 = vsel %vm1365, %v2993, %v2705
      %v3027 = vsel %vm1365, %v2995, %v2707
      %v3029 = vsel %vm1398, %v2997, %v2725
      %v3031 = vsel %vm1398, %v2999, %v2727
      %v3033 = vsel %vm1398, %v3001, %v2729
      %v3035 = vsel %vm1398, %v3003, %v2731
      %v3037 = vsel %vm1398, %v3005, %v2733
      %v3039 = vsel %vm1398, %v3007, %v2735
      %v3041 = vsel %vm1398, %v3009, %v2737
      %v3043 = vsel %vm1398, %v3011, %v2739
      %v3045 = vsel %vm1398, %v3013, %v2741
      %v3047 = vsel %vm1398, %v3015, %v2743
      %v3049 = vsel %vm1398, %v3017, %v2745
      %v3051 = vsel %vm1398, %v3019, %v2747
      %v3053 = vsel %vm1398, %v3021, %v2749
      %v3055 = vsel %vm1398, %v3023, %v2751
      %v3057 = vsel %vm1398, %v3025, %v2753
      %v3059 = vsel %vm1398, %v3027, %v2755
      %v3061 = vsel %vm1431, %v3029, %v2773
      %v3063 = vsel %vm1431, %v3031, %v2775
      %v3065 = vsel %vm1431, %v3033, %v2777
      %v3067 = vsel %vm1431, %v3035, %v2779
      %v3069 = vsel %vm1431, %v3037, %v2781
      %v3071 = vsel %vm1431, %v3039, %v2783
      %v3073 = vsel %vm1431, %v3041, %v2785
      %v3075 = vsel %vm1431, %v3043, %v2787
      %v3077 = vsel %vm1431, %v3045, %v2789
      %v3079 = vsel %vm1431, %v3047, %v2791
      %v3081 = vsel %vm1431, %v3049, %v2793
      %v3083 = vsel %vm1431, %v3051, %v2795
      %v3085 = vsel %vm1431, %v3053, %v2797
      %v3087 = vsel %vm1431, %v3055, %v2799
      %v3089 = vsel %vm1431, %v3057, %v2801
      %v3091 = vsel %vm1431, %v3059, %v2803
      %v3093 = vsel %vm1464, %v3061, %v2821
      %v3095 = vsel %vm1464, %v3063, %v2823
      %v3097 = vsel %vm1464, %v3065, %v2825
      %v3099 = vsel %vm1464, %v3067, %v2827
      %v3101 = vsel %vm1464, %v3069, %v2829
      %v3103 = vsel %vm1464, %v3071, %v2831
      %v3105 = vsel %vm1464, %v3073, %v2833
      %v3107 = vsel %vm1464, %v3075, %v2835
      %v3109 = vsel %vm1464, %v3077, %v2837
      %v3111 = vsel %vm1464, %v3079, %v2839
      %v3113 = vsel %vm1464, %v3081, %v2841
      %v3115 = vsel %vm1464, %v3083, %v2843
      %v3117 = vsel %vm1464, %v3085, %v2845
      %v3119 = vsel %vm1464, %v3087, %v2847
      %v3121 = vsel %vm1464, %v3089, %v2849
      %v3123 = vsel %vm1464, %v3091, %v2851
      %v3124 = vld [vmem:[%s2] sm:$0xf]
      %v3125 = vld [vmem:[%s2 + $0x4] sm:$0xf]
      %v3126 = vld [vmem:[%s2 + $0x8] sm:$0xf]
      %v3127 = vld [vmem:[%s2 + $0xc] sm:$0xf]
      %v3128 = vld [vmem:[%s2 + $0x10] sm:$0x3]
      %v3134 = vunpack.c.l.b16 %v3124
      %v3135 = vunpack.c.l.b16 %v3125
      %v3136 = vunpack.c.l.b16 %v3126
      %v3137 = vunpack.c.l.b16 %v3127
      %v3138 = vunpack.c.l.b16 %v3128
      %v3139 = vpack.c.b16 %v3135, %v3134
      %v3140 = vpack.c.b16 %v3137, %v3136
      %v3141 = vpack.c.b16 %v3138, %v3138
      %v3144 = vsel %vm1517, %v3093, 0
      %v3146 = vsel %vm1517, %v3095, 0
      %v3148 = vsel %vm1517, %v3097, 0
      %v3150 = vsel %vm1517, %v3099, 0
      %v3152 = vsel %vm1517, %v3101, 0
      %v3154 = vsel %vm1517, %v3103, 0
      %v3156 = vsel %vm1517, %v3105, 0
      %v3158 = vsel %vm1517, %v3107, 0
      %v3160 = vsel %vm1517, %v3109, 0
      %v3162 = vsel %vm1517, %v3111, 0
      %v3164 = vsel %vm1517, %v3113, 0
      %v3166 = vsel %vm1517, %v3115, 0
      %v3168 = vsel %vm1517, %v3117, 0
      %v3170 = vsel %vm1517, %v3119, 0
      %v3172 = vsel %vm1517, %v3121, 0
      %v3174 = vsel %vm1517, %v3123, 0
      %v3177 = vsel %vm1550, %v3141, 0
      %3179 = vmatprep.subr.bf16.mxu0 0
      %3180 = vmatpush1.bf16.msra.mxu0 %v3139
      %3181 = vmatprep.subr.bf16.mxu0 0
      %3182 = vmatpush1.bf16.msra.mxu0 %v3140
      %3183 = vmatprep.subr.bf16.mxu0 0
      %3184 = vmatpush1.bf16.msra.mxu0 %v3177
      %3185 = vmatprep.subr.bf16.mxu0 0
      %3186 = vmatpush1.bf16.msra.mxu0 0
      %3187 = vmatprep.subr.bf16.mxu0 0
      %3188 = vmatpush1.bf16.msra.mxu0 0
      %3189 = vmatprep.subr.bf16.mxu0 0
      %3190 = vmatpush1.bf16.msra.mxu0 0
      %3191 = vmatprep.subr.bf16.mxu0 0
      %3192 = vmatpush1.bf16.msra.mxu0 0
      %3193 = vmatprep.subr.bf16.mxu0 0
      %3194 = vmatpush1.bf16.msra.mxu0 0
      %3195 = vmatprep.subr.bf16.mxu0 0
      %3196 = vmatpush1.bf16.msra.mxu0 0
      %3197 = vmatprep.subr.bf16.mxu0 0
      %3198 = vmatpush1.bf16.msra.mxu0 0
      %3199 = vmatprep.subr.bf16.mxu0 0
      %3200 = vmatpush1.bf16.msra.mxu0 0
      %3201 = vmatprep.subr.bf16.mxu0 0
      %3202 = vmatpush1.bf16.msra.mxu0 0
      %3203 = vmatprep.subr.bf16.mxu0 0
      %3204 = vmatpush1.bf16.msra.mxu0 0
      %3205 = vmatprep.subr.bf16.mxu0 0
      %3206 = vmatpush1.bf16.msra.mxu0 0
      %3207 = vmatprep.subr.bf16.mxu0 0
      %3208 = vmatpush1.bf16.msra.mxu0 0
      %3209 = vmatprep.subr.bf16.mxu0 0
      %3210 = vmatpush1.bf16.msra.mxu0 0
      %3211 = vmatprep.mubr.bf16.mxu0 0
      %3212 = vmatmul.mubr.bf16.gmra.mrb[0].mxu0 %v3144
      %v3213 = vpop.f32.mrb[0].mxu0
      %v3214 = vadd.f32 0.0, %v3213
      %v3215 = vpop.f32.mrb[0].mxu0
      %v3216 = vpop.f32.mrb[0].mxu0
      %v3217 = vadd.f32 0.0, %v3216
      %v3218 = vpop.f32.mrb[0].mxu0
      %3219 = vmatprep.mubr.bf16.mxu0 0
      %3220 = vmatmul.mubr.bf16.gmra.mrb[0].mxu0 %v3146
      %v3221 = vpop.f32.mrb[0].mxu0
      %v3222 = vadd.f32 0.0, %v3221
      %v3223 = vpop.f32.mrb[0].mxu0
      %v3224 = vpop.f32.mrb[0].mxu0
      %v3225 = vadd.f32 0.0, %v3224
      %v3226 = vpop.f32.mrb[0].mxu0
      %3227 = vmatprep.mubr.bf16.mxu0 0
      %3228 = vmatmul.mubr.bf16.gmra.mrb[0].mxu0 %v3148
      %v3229 = vpop.f32.mrb[0].mxu0
      %v3230 = vadd.f32 0.0, %v3229
      %v3231 = vpop.f32.mrb[0].mxu0
      %v3232 = vpop.f32.mrb[0].mxu0
      %v3233 = vadd.f32 0.0, %v3232
      %v3234 = vpop.f32.mrb[0].mxu0
      %3235 = vmatprep.mubr.bf16.mxu0 0
      %3236 = vmatmul.mubr.bf16.gmra.mrb[0].mxu0 %v3150
      %v3237 = vpop.f32.mrb[0].mxu0
      %v3238 = vadd.f32 0.0, %v3237
      %v3239 = vpop.f32.mrb[0].mxu0
      %v3240 = vpop.f32.mrb[0].mxu0
      %v3241 = vadd.f32 0.0, %v3240
      %v3242 = vpop.f32.mrb[0].mxu0
      %3243 = vmatprep.mubr.bf16.mxu0 0
      %3244 = vmatmul.mubr.bf16.gmra.mrb[0].mxu0 %v3152
      %v3245 = vpop.f32.mrb[0].mxu0
      %v3246 = vadd.f32 0.0, %v3245
      %v3247 = vpop.f32.mrb[0].mxu0
      %v3248 = vpop.f32.mrb[0].mxu0
      %v3249 = vadd.f32 0.0, %v3248
      %v3250 = vpop.f32.mrb[0].mxu0
      %3251 = vmatprep.mubr.bf16.mxu0 0
      %3252 = vmatmul.mubr.bf16.gmra.mrb[0].mxu0 %v3154
      %v3253 = vpop.f32.mrb[0].mxu0
      %v3254 = vadd.f32 0.0, %v3253
      %v3255 = vpop.f32.mrb[0].mxu0
      %v3256 = vpop.f32.mrb[0].mxu0
      %v3257 = vadd.f32 0.0, %v3256
      %v3258 = vpop.f32.mrb[0].mxu0
      %3259 = vmatprep.mubr.bf16.mxu0 0
      %3260 = vmatmul.mubr.bf16.gmra.mrb[0].mxu0 %v3156
      %v3261 = vpop.f32.mrb[0].mxu0
      %v3262 = vadd.f32 0.0, %v3261
      %v3263 = vpop.f32.mrb[0].mxu0
      %v3264 = vpop.f32.mrb[0].mxu0
      %v3265 = vadd.f32 0.0, %v3264
      %v3266 = vpop.f32.mrb[0].mxu0
      %3267 = vmatprep.mubr.bf16.mxu0 0
      %3268 = vmatmul.mubr.bf16.gmra.mrb[0].mxu0 %v3158
      %v3269 = vpop.f32.mrb[0].mxu0
      %v3270 = vadd.f32 0.0, %v3269
      %v3271 = vpop.f32.mrb[0].mxu0
      %v3272 = vpop.f32.mrb[0].mxu0
      %v3273 = vadd.f32 0.0, %v3272
      %v3274 = vpop.f32.mrb[0].mxu0
      %3275 = vmatprep.mubr.bf16.mxu0 0
      %3276 = vmatmul.mubr.bf16.gmra.mrb[0].mxu0 %v3160
      %v3277 = vpop.f32.mrb[0].mxu0
      %v3278 = vadd.f32 0.0, %v3277
      %v3279 = vpop.f32.mrb[0].mxu0
      %v3280 = vpop.f32.mrb[0].mxu0
      %v3281 = vadd.f32 0.0, %v3280
      %v3282 = vpop.f32.mrb[0].mxu0
      %3283 = vmatprep.mubr.bf16.mxu0 0
      %3284 = vmatmul.mubr.bf16.gmra.mrb[0].mxu0 %v3162
      %v3285 = vpop.f32.mrb[0].mxu0
      %v3286 = vadd.f32 0.0, %v3285
      %v3287 = vpop.f32.mrb[0].mxu0
      %v3288 = vpop.f32.mrb[0].mxu0
      %v3289 = vadd.f32 0.0, %v3288
      %v3290 = vpop.f32.mrb[0].mxu0
      %3291 = vmatprep.mubr.bf16.mxu0 0
      %3292 = vmatmul.mubr.bf16.gmra.mrb[0].mxu0 %v3164
      %v3293 = vpop.f32.mrb[0].mxu0
      %v3294 = vadd.f32 0.0, %v3293
      %v3295 = vpop.f32.mrb[0].mxu0
      %v3296 = vpop.f32.mrb[0].mxu0
      %v3297 = vadd.f32 0.0, %v3296
      %v3298 = vpop.f32.mrb[0].mxu0
      %3299 = vmatprep.mubr.bf16.mxu0 0
      %3300 = vmatmul.mubr.bf16.gmra.mrb[0].mxu0 %v3166
      %v3301 = vpop.f32.mrb[0].mxu0
      %v3302 = vadd.f32 0.0, %v3301
      %v3303 = vpop.f32.mrb[0].mxu0
      %v3304 = vpop.f32.mrb[0].mxu0
      %v3305 = vadd.f32 0.0, %v3304
      %v3306 = vpop.f32.mrb[0].mxu0
      %3307 = vmatprep.mubr.bf16.mxu0 0
      %3308 = vmatmul.mubr.bf16.gmra.mrb[0].mxu0 %v3168
      %v3309 = vpop.f32.mrb[0].mxu0
      %v3310 = vadd.f32 0.0, %v3309
      %v3311 = vpop.f32.mrb[0].mxu0
      %v3312 = vpop.f32.mrb[0].mxu0
      %v3313 = vadd.f32 0.0, %v3312
      %v3314 = vpop.f32.mrb[0].mxu0
      %3315 = vmatprep.mubr.bf16.mxu0 0
      %3316 = vmatmul.mubr.bf16.gmra.mrb[0].mxu0 %v3170
      %v3317 = vpop.f32.mrb[0].mxu0
      %v3318 = vadd.f32 0.0, %v3317
      %v3319 = vpop.f32.mrb[0].mxu0
      %v3320 = vpop.f32.mrb[0].mxu0
      %v3321 = vadd.f32 0.0, %v3320
      %v3322 = vpop.f32.mrb[0].mxu0
      %3323 = vmatprep.mubr.bf16.mxu0 0
      %3324 = vmatmul.mubr.bf16.gmra.mrb[0].mxu0 %v3172
      %v3325 = vpop.f32.mrb[0].mxu0
      %v3326 = vadd.f32 0.0, %v3325
      %v3327 = vpop.f32.mrb[0].mxu0
      %v3328 = vpop.f32.mrb[0].mxu0
      %v3329 = vadd.f32 0.0, %v3328
      %v3330 = vpop.f32.mrb[0].mxu0
      %3331 = vmatprep.mubr.bf16.mxu0 0
      %3332 = vmatmul.mubr.bf16.gmra.mrb[0].mxu0 %v3174
      %v3333 = vpop.f32.mrb[0].mxu0
      %v3334 = vadd.f32 0.0, %v3333
      %v3335 = vpop.f32.mrb[0].mxu0
      %v3336 = vpop.f32.mrb[0].mxu0
      %v3337 = vadd.f32 0.0, %v3336
      %v3338 = vpop.f32.mrb[0].mxu0
      %3339 = vdwg.mxu0
      %v3340 = vsel %vm280, %v3214, 0.0
      %v3341 = vsel %vm280, %v3217, 0.0
      %v3342 = vadd.f32 %v3340, %v3341
      %v3343 = vsel %vm280, %v3222, 0.0
      %v3344 = vadd.f32 %v3342, %v3343
      %v3345 = vsel %vm280, %v3225, 0.0
      %v3346 = vadd.f32 %v3344, %v3345
      %v3347 = vsel %vm280, %v3230, 0.0
      %v3348 = vadd.f32 %v3346, %v3347
      %v3349 = vsel %vm280, %v3233, 0.0
      %v3350 = vadd.f32 %v3348, %v3349
      %v3351 = vsel %vm280, %v3238, 0.0
      %v3352 = vadd.f32 %v3350, %v3351
      %v3353 = vsel %vm280, %v3241, 0.0
      %v3354 = vadd.f32 %v3352, %v3353
      %v3355 = vsel %vm280, %v3246, 0.0
      %v3356 = vadd.f32 %v3354, %v3355
      %v3357 = vsel %vm280, %v3249, 0.0
      %v3358 = vadd.f32 %v3356, %v3357
      %v3359 = vsel %vm280, %v3254, 0.0
      %v3360 = vadd.f32 %v3358, %v3359
      %v3361 = vsel %vm280, %v3257, 0.0
      %v3362 = vadd.f32 %v3360, %v3361
      %v3363 = vsel %vm280, %v3262, 0.0
      %v3364 = vadd.f32 %v3362, %v3363
      %v3365 = vsel %vm280, %v3265, 0.0
      %v3366 = vadd.f32 %v3364, %v3365
      %v3367 = vsel %vm280, %v3270, 0.0
      %v3368 = vadd.f32 %v3366, %v3367
      %v3369 = vsel %vm280, %v3273, 0.0
      %v3370 = vadd.f32 %v3368, %v3369
      %v3371 = vsel %vm280, %v3278, 0.0
      %v3372 = vadd.f32 %v3370, %v3371
      %v3373 = vsel %vm280, %v3281, 0.0
      %v3374 = vadd.f32 %v3372, %v3373
      %v3375 = vsel %vm280, %v3286, 0.0
      %v3376 = vadd.f32 %v3374, %v3375
      %v3377 = vsel %vm280, %v3289, 0.0
      %v3378 = vadd.f32 %v3376, %v3377
      %v3379 = vsel %vm280, %v3294, 0.0
      %v3380 = vadd.f32 %v3378, %v3379
      %v3381 = vsel %vm280, %v3297, 0.0
      %v3382 = vadd.f32 %v3380, %v3381
      %v3383 = vsel %vm280, %v3302, 0.0
      %v3384 = vadd.f32 %v3382, %v3383
      %v3385 = vsel %vm280, %v3305, 0.0
      %v3386 = vadd.f32 %v3384, %v3385
      %v3387 = vsel %vm280, %v3310, 0.0
      %v3388 = vadd.f32 %v3386, %v3387
      %v3389 = vsel %vm280, %v3313, 0.0
      %v3390 = vadd.f32 %v3388, %v3389
      %v3391 = vsel %vm280, %v3318, 0.0
      %v3392 = vadd.f32 %v3390, %v3391
      %v3393 = vsel %vm280, %v3321, 0.0
      %v3394 = vadd.f32 %v3392, %v3393
      %v3395 = vsel %vm280, %v3326, 0.0
      %v3396 = vadd.f32 %v3394, %v3395
      %v3397 = vsel %vm280, %v3329, 0.0
      %v3398 = vadd.f32 %v3396, %v3397
      %v3399 = vsel %vm280, %v3334, 0.0
      %v3400 = vadd.f32 %v3398, %v3399
      %v3401 = vsel %vm280, %v3337, 0.0
      %v3402 = vadd.f32 %v3400, %v3401
      %v3403 = vrot.slane %v3402, 4
      %v3404 = vadd.f32 %v3402, %v3403
      %v3405 = vrot.slane %v3404, 2
      %v3406 = vadd.f32 %v3404, %v3405
      %v3407 = vrot.slane %v3406, 1
      %v3408 = vadd.f32 %v3406, %v3407
      %v3409 = vmul.f32 %v3408, 0.00390625
      %v3410 = vmul.f32 %v3214, %v3214
      %v3411 = vmul.f32 %v3217, %v3217
      %v3412 = vmul.f32 %v3222, %v3222
      %v3413 = vmul.f32 %v3225, %v3225
      %v3414 = vmul.f32 %v3230, %v3230
      %v3415 = vmul.f32 %v3233, %v3233
      %v3416 = vmul.f32 %v3238, %v3238
      %v3417 = vmul.f32 %v3241, %v3241
      %v3418 = vmul.f32 %v3246, %v3246
      %v3419 = vmul.f32 %v3249, %v3249
      %v3420 = vmul.f32 %v3254, %v3254
      %v3421 = vmul.f32 %v3257, %v3257
      %v3422 = vmul.f32 %v3262, %v3262
      %v3423 = vmul.f32 %v3265, %v3265
      %v3424 = vmul.f32 %v3270, %v3270
      %v3425 = vmul.f32 %v3273, %v3273
      %v3426 = vmul.f32 %v3278, %v3278
      %v3427 = vmul.f32 %v3281, %v3281
      %v3428 = vmul.f32 %v3286, %v3286
      %v3429 = vmul.f32 %v3289, %v3289
      %v3430 = vmul.f32 %v3294, %v3294
      %v3431 = vmul.f32 %v3297, %v3297
      %v3432 = vmul.f32 %v3302, %v3302
      %v3433 = vmul.f32 %v3305, %v3305
      %v3434 = vmul.f32 %v3310, %v3310
      %v3435 = vmul.f32 %v3313, %v3313
      %v3436 = vmul.f32 %v3318, %v3318
      %v3437 = vmul.f32 %v3321, %v3321
      %v3438 = vmul.f32 %v3326, %v3326
      %v3439 = vmul.f32 %v3329, %v3329
      %v3440 = vmul.f32 %v3334, %v3334
      %v3441 = vmul.f32 %v3337, %v3337
      %v3442 = vsel %vm280, %v3410, 0.0
      %v3443 = vsel %vm280, %v3411, 0.0
      %v3444 = vadd.f32 %v3442, %v3443
      %v3445 = vsel %vm280, %v3412, 0.0
      %v3446 = vadd.f32 %v3444, %v3445
      %v3447 = vsel %vm280, %v3413, 0.0
      %v3448 = vadd.f32 %v3446, %v3447
      %v3449 = vsel %vm280, %v3414, 0.0
      %v3450 = vadd.f32 %v3448, %v3449
      %v3451 = vsel %vm280, %v3415, 0.0
      %v3452 = vadd.f32 %v3450, %v3451
      %v3453 = vsel %vm280, %v3416, 0.0
      %v3454 = vadd.f32 %v3452, %v3453
      %v3455 = vsel %vm280, %v3417, 0.0
      %v3456 = vadd.f32 %v3454, %v3455
      %v3457 = vsel %vm280, %v3418, 0.0
      %v3458 = vadd.f32 %v3456, %v3457
      %v3459 = vsel %vm280, %v3419, 0.0
      %v3460 = vadd.f32 %v3458, %v3459
      %v3461 = vsel %vm280, %v3420, 0.0
      %v3462 = vadd.f32 %v3460, %v3461
      %v3463 = vsel %vm280, %v3421, 0.0
      %v3464 = vadd.f32 %v3462, %v3463
      %v3465 = vsel %vm280, %v3422, 0.0
      %v3466 = vadd.f32 %v3464, %v3465
      %v3467 = vsel %vm280, %v3423, 0.0
      %v3468 = vadd.f32 %v3466, %v3467
      %v3469 = vsel %vm280, %v3424, 0.0
      %v3470 = vadd.f32 %v3468, %v3469
      %v3471 = vsel %vm280, %v3425, 0.0
      %v3472 = vadd.f32 %v3470, %v3471
      %v3473 = vsel %vm280, %v3426, 0.0
      %v3474 = vadd.f32 %v3472, %v3473
      %v3475 = vsel %vm280, %v3427, 0.0
      %v3476 = vadd.f32 %v3474, %v3475
      %v3477 = vsel %vm280, %v3428, 0.0
      %v3478 = vadd.f32 %v3476, %v3477
      %v3479 = vsel %vm280, %v3429, 0.0
      %v3480 = vadd.f32 %v3478, %v3479
      %v3481 = vsel %vm280, %v3430, 0.0
      %v3482 = vadd.f32 %v3480, %v3481
      %v3483 = vsel %vm280, %v3431, 0.0
      %v3484 = vadd.f32 %v3482, %v3483
      %v3485 = vsel %vm280, %v3432, 0.0
      %v3486 = vadd.f32 %v3484, %v3485
      %v3487 = vsel %vm280, %v3433, 0.0
      %v3488 = vadd.f32 %v3486, %v3487
      %v3489 = vsel %vm280, %v3434, 0.0
      %v3490 = vadd.f32 %v3488, %v3489
      %v3491 = vsel %vm280, %v3435, 0.0
      %v3492 = vadd.f32 %v3490, %v3491
      %v3493 = vsel %vm280, %v3436, 0.0
      %v3494 = vadd.f32 %v3492, %v3493
      %v3495 = vsel %vm280, %v3437, 0.0
      %v3496 = vadd.f32 %v3494, %v3495
      %v3497 = vsel %vm280, %v3438, 0.0
      %v3498 = vadd.f32 %v3496, %v3497
      %v3499 = vsel %vm280, %v3439, 0.0
      %v3500 = vadd.f32 %v3498, %v3499
      %v3501 = vsel %vm280, %v3440, 0.0
      %v3502 = vadd.f32 %v3500, %v3501
      %v3503 = vsel %vm280, %v3441, 0.0
      %v3504 = vadd.f32 %v3502, %v3503
      %v3505 = vrot.slane %v3504, 4
      %v3506 = vadd.f32 %v3504, %v3505
      %v3507 = vrot.slane %v3506, 2
      %v3508 = vadd.f32 %v3506, %v3507
      %v3509 = vrot.slane %v3508, 1
      %v3510 = vadd.f32 %v3508, %v3509
      %v3511 = vmul.f32 %v3510, 0.00390625
      %v3512 = vmul.f32 %v3409, %v3409
      %v3513 = vsub.f32 %v3511, %v3512
      %v3514 = vld [vmem:[%s5] sm:$0x1]
      %v3515 = vadd.f32 %v3513, 1e-05
      %v3516 = vrsqrt.pop %v3515
      %v3517 = vmul.f32 %v3514, %v3516
      %v3518 = vld [vmem:[%s6] sm:$0x1]
      %v3519 = vmul.f32 %v3409, %v3517
      %v3520 = vsub.f32 %v3518, %v3519
      %v3522 = vlaneseq
      %v3523 = vshrl.u32 %v3522, 7
      %v3524 = vsub.s32 0, %v3523
      %v3525 = vrot.slane %v3517, %v3524
      %v3527 = vmul.f32 %v3214, %v3525
      %v3528 = vmul.f32 %v3217, %v3525
      %v3529 = vmul.f32 %v3222, %v3525
      %v3530 = vmul.f32 %v3225, %v3525
      %v3531 = vmul.f32 %v3230, %v3525
      %v3532 = vmul.f32 %v3233, %v3525
      %v3533 = vmul.f32 %v3238, %v3525
      %v3534 = vmul.f32 %v3241, %v3525
      %v3535 = vmul.f32 %v3246, %v3525
      %v3536 = vmul.f32 %v3249, %v3525
      %v3537 = vmul.f32 %v3254, %v3525
      %v3538 = vmul.f32 %v3257, %v3525
      %v3539 = vmul.f32 %v3262, %v3525
      %v3540 = vmul.f32 %v3265, %v3525
      %v3541 = vmul.f32 %v3270, %v3525
      %v3542 = vmul.f32 %v3273, %v3525
      %v3543 = vmul.f32 %v3278, %v3525
      %v3544 = vmul.f32 %v3281, %v3525
      %v3545 = vmul.f32 %v3286, %v3525
      %v3546 = vmul.f32 %v3289, %v3525
      %v3547 = vmul.f32 %v3294, %v3525
      %v3548 = vmul.f32 %v3297, %v3525
      %v3549 = vmul.f32 %v3302, %v3525
      %v3550 = vmul.f32 %v3305, %v3525
      %v3551 = vmul.f32 %v3310, %v3525
      %v3552 = vmul.f32 %v3313, %v3525
      %v3553 = vmul.f32 %v3318, %v3525
      %v3554 = vmul.f32 %v3321, %v3525
      %v3555 = vmul.f32 %v3326, %v3525
      %v3556 = vmul.f32 %v3329, %v3525
      %v3557 = vmul.f32 %v3334, %v3525
      %v3558 = vmul.f32 %v3337, %v3525
      %v3560 = vlaneseq
      %v3561 = vshrl.u32 %v3560, 7
      %v3562 = vsub.s32 0, %v3561
      %v3563 = vrot.slane %v3520, %v3562
      %v3565 = vadd.f32 %v3527, %v3563
      %v3566 = vadd.f32 %v3528, %v3563
      %v3567 = vadd.f32 %v3529, %v3563
      %v3568 = vadd.f32 %v3530, %v3563
      %v3569 = vadd.f32 %v3531, %v3563
      %v3570 = vadd.f32 %v3532, %v3563
      %v3571 = vadd.f32 %v3533, %v3563
      %v3572 = vadd.f32 %v3534, %v3563
      %v3573 = vadd.f32 %v3535, %v3563
      %v3574 = vadd.f32 %v3536, %v3563
      %v3575 = vadd.f32 %v3537, %v3563
      %v3576 = vadd.f32 %v3538, %v3563
      %v3577 = vadd.f32 %v3539, %v3563
      %v3578 = vadd.f32 %v3540, %v3563
      %v3579 = vadd.f32 %v3541, %v3563
      %v3580 = vadd.f32 %v3542, %v3563
      %v3581 = vadd.f32 %v3543, %v3563
      %v3582 = vadd.f32 %v3544, %v3563
      %v3583 = vadd.f32 %v3545, %v3563
      %v3584 = vadd.f32 %v3546, %v3563
      %v3585 = vadd.f32 %v3547, %v3563
      %v3586 = vadd.f32 %v3548, %v3563
      %v3587 = vadd.f32 %v3549, %v3563
      %v3588 = vadd.f32 %v3550, %v3563
      %v3589 = vadd.f32 %v3551, %v3563
      %v3590 = vadd.f32 %v3552, %v3563
      %v3591 = vadd.f32 %v3553, %v3563
      %v3592 = vadd.f32 %v3554, %v3563
      %v3593 = vadd.f32 %v3555, %v3563
      %v3594 = vadd.f32 %v3556, %v3563
      %v3595 = vadd.f32 %v3557, %v3563
      %v3596 = vadd.f32 %v3558, %v3563
      %v3597 = vld [vmem:[%s273] sm:$0xff]
      %v3598 = vld [vmem:[%s273 + $0x8] sm:$0xff]
      %v3599 = vld [vmem:[%s273 + $0x10] sm:$0xff]
      %v3600 = vld [vmem:[%s273 + $0x18] sm:$0xff]
      %v3601 = vld [vmem:[%s273 + $0x20] sm:$0xff]
      %v3602 = vld [vmem:[%s273 + $0x28] sm:$0xff]
      %v3603 = vld [vmem:[%s273 + $0x30] sm:$0xff]
      %v3604 = vld [vmem:[%s273 + $0x38] sm:$0xff]
      %v3605 = vld [vmem:[%s273 + $0x40] sm:$0xff]
      %v3606 = vld [vmem:[%s273 + $0x48] sm:$0xff]
      %v3607 = vld [vmem:[%s273 + $0x50] sm:$0xff]
      %v3608 = vld [vmem:[%s273 + $0x58] sm:$0xff]
      %v3609 = vld [vmem:[%s273 + $0x60] sm:$0xff]
      %v3610 = vld [vmem:[%s273 + $0x68] sm:$0xff]
      %v3611 = vld [vmem:[%s273 + $0x70] sm:$0xff]
      %v3612 = vld [vmem:[%s273 + $0x78] sm:$0xff]
      %v3613 = vld [vmem:[%s273 + $0x80] sm:$0xff]
      %v3614 = vld [vmem:[%s273 + $0x88] sm:$0xff]
      %v3615 = vld [vmem:[%s273 + $0x90] sm:$0xff]
      %v3616 = vld [vmem:[%s273 + $0x98] sm:$0xff]
      %v3617 = vld [vmem:[%s273 + $0xa0] sm:$0xff]
      %v3618 = vld [vmem:[%s273 + $0xa8] sm:$0xff]
      %v3619 = vld [vmem:[%s273 + $0xb0] sm:$0xff]
      %v3620 = vld [vmem:[%s273 + $0xb8] sm:$0xff]
      %v3621 = vld [vmem:[%s273 + $0xc0] sm:$0xff]
      %v3622 = vld [vmem:[%s273 + $0xc8] sm:$0xff]
      %v3623 = vld [vmem:[%s273 + $0xd0] sm:$0xff]
      %v3624 = vld [vmem:[%s273 + $0xd8] sm:$0xff]
      %v3625 = vld [vmem:[%s273 + $0xe0] sm:$0xff]
      %v3626 = vld [vmem:[%s273 + $0xe8] sm:$0xff]
      %v3627 = vld [vmem:[%s273 + $0xf0] sm:$0xff]
      %v3628 = vld [vmem:[%s273 + $0xf8] sm:$0xff]
      %v3629 = vadd.f32 %v3597, %v3565
      %v3630 = vadd.f32 %v3598, %v3566
      %v3631 = vadd.f32 %v3599, %v3567
      %v3632 = vadd.f32 %v3600, %v3568
      %v3633 = vadd.f32 %v3601, %v3569
      %v3634 = vadd.f32 %v3602, %v3570
      %v3635 = vadd.f32 %v3603, %v3571
      %v3636 = vadd.f32 %v3604, %v3572
      %v3637 = vadd.f32 %v3605, %v3573
      %v3638 = vadd.f32 %v3606, %v3574
      %v3639 = vadd.f32 %v3607, %v3575
      %v3640 = vadd.f32 %v3608, %v3576
      %v3641 = vadd.f32 %v3609, %v3577
      %v3642 = vadd.f32 %v3610, %v3578
      %v3643 = vadd.f32 %v3611, %v3579
      %v3644 = vadd.f32 %v3612, %v3580
      %v3645 = vadd.f32 %v3613, %v3581
      %v3646 = vadd.f32 %v3614, %v3582
      %v3647 = vadd.f32 %v3615, %v3583
      %v3648 = vadd.f32 %v3616, %v3584
      %v3649 = vadd.f32 %v3617, %v3585
      %v3650 = vadd.f32 %v3618, %v3586
      %v3651 = vadd.f32 %v3619, %v3587
      %v3652 = vadd.f32 %v3620, %v3588
      %v3653 = vadd.f32 %v3621, %v3589
      %v3654 = vadd.f32 %v3622, %v3590
      %v3655 = vadd.f32 %v3623, %v3591
      %v3656 = vadd.f32 %v3624, %v3592
      %v3657 = vadd.f32 %v3625, %v3593
      %v3658 = vadd.f32 %v3626, %v3594
      %v3659 = vadd.f32 %v3627, %v3595
      %v3660 = vadd.f32 %v3628, %v3596
      %3661 = vst.msk [vmem:[%s278] sm:$0xff] %vm280, %v3629
      %3662 = vst.msk [vmem:[%s278 + $0x8] sm:$0xff] %vm280, %v3630
      %3663 = vst.msk [vmem:[%s278 + $0x10] sm:$0xff] %vm280, %v3631
      %3664 = vst.msk [vmem:[%s278 + $0x18] sm:$0xff] %vm280, %v3632
      %3665 = vst.msk [vmem:[%s278 + $0x20] sm:$0xff] %vm280, %v3633
      %3666 = vst.msk [vmem:[%s278 + $0x28] sm:$0xff] %vm280, %v3634
      %3667 = vst.msk [vmem:[%s278 + $0x30] sm:$0xff] %vm280, %v3635
      %3668 = vst.msk [vmem:[%s278 + $0x38] sm:$0xff] %vm280, %v3636
      %3669 = vst.msk [vmem:[%s278 + $0x40] sm:$0xff] %vm280, %v3637
      %3670 = vst.msk [vmem:[%s278 + $0x48] sm:$0xff] %vm280, %v3638
      %3671 = vst.msk [vmem:[%s278 + $0x50] sm:$0xff] %vm280, %v3639
      %3672 = vst.msk [vmem:[%s278 + $0x58] sm:$0xff] %vm280, %v3640
      %3673 = vst.msk [vmem:[%s278 + $0x60] sm:$0xff] %vm280, %v3641
      %3674 = vst.msk [vmem:[%s278 + $0x68] sm:$0xff] %vm280, %v3642
      %3675 = vst.msk [vmem:[%s278 + $0x70] sm:$0xff] %vm280, %v3643
      %3676 = vst.msk [vmem:[%s278 + $0x78] sm:$0xff] %vm280, %v3644
      %3677 = vst.msk [vmem:[%s278 + $0x80] sm:$0xff] %vm280, %v3645
      %3678 = vst.msk [vmem:[%s278 + $0x88] sm:$0xff] %vm280, %v3646
      %3679 = vst.msk [vmem:[%s278 + $0x90] sm:$0xff] %vm280, %v3647
      %3680 = vst.msk [vmem:[%s278 + $0x98] sm:$0xff] %vm280, %v3648
      %3681 = vst.msk [vmem:[%s278 + $0xa0] sm:$0xff] %vm280, %v3649
      %3682 = vst.msk [vmem:[%s278 + $0xa8] sm:$0xff] %vm280, %v3650
      %3683 = vst.msk [vmem:[%s278 + $0xb0] sm:$0xff] %vm280, %v3651
      %3684 = vst.msk [vmem:[%s278 + $0xb8] sm:$0xff] %vm280, %v3652
      %3685 = vst.msk [vmem:[%s278 + $0xc0] sm:$0xff] %vm280, %v3653
      %3686 = vst.msk [vmem:[%s278 + $0xc8] sm:$0xff] %vm280, %v3654
      %3687 = vst.msk [vmem:[%s278 + $0xd0] sm:$0xff] %vm280, %v3655
      %3688 = vst.msk [vmem:[%s278 + $0xd8] sm:$0xff] %vm280, %v3656
      %3689 = vst.msk [vmem:[%s278 + $0xe0] sm:$0xff] %vm280, %v3657
      %3690 = vst.msk [vmem:[%s278 + $0xe8] sm:$0xff] %vm280, %v3658
      %3691 = vst.msk [vmem:[%s278 + $0xf0] sm:$0xff] %vm280, %v3659
      %3692 = vst.msk [vmem:[%s278 + $0xf8] sm:$0xff] %vm280, %v3660
      %p3693 = scmp.lt.s32.totalorder %s18, 1
      %s3694 = scalar_select %p3693, %s18, 1
      %s3695 = smul.addr %s3694, 32
      %s3696 = smul.addr %s3695, 8
      %s3697 = scalar_lea.vmem %s7, %s3696
      // Predicated region
      $region49: #{tpu_custom_call.1} parent=47 // pred_check
        %p3698 = pneg %p188
      $region50: #{tpu_custom_call.1} parent=47 // pred_check_branch
        %3700 = sbr.rel (%p3698) target = $region52
      $region51: #{tpu_custom_call.1} parent=47 // pred_region
        _
      $region52: #{tpu_custom_call.1} parent=47 // pred_fallthru
        _
    $region48: #{tpu_custom_call.1} parent=5 // pred_fallthru
      _
    %p3701 = scmp.le.s32.totalorder 2, %s13
    // Predicated region
    $region53: #{tpu_custom_call.1} parent=5 // pred_check
      %p3702 = pneg %p3701
    $region54: #{tpu_custom_call.1} parent=5 // pred_check_branch
      %3704 = sbr.rel (%p3702) target = $region56
    $region55: #{tpu_custom_call.1} parent=5 // pred_region
      %s3705 = ssub.s32 %s13, 2
      // Predicated region
      $region57: #{tpu_custom_call.1} parent=55 // pred_check
        %p3706 = pneg %p194
      $region58: #{tpu_custom_call.1} parent=55 // pred_check_branch
        %3708 = sbr.rel (%p3706) target = $region60
      $region59: #{tpu_custom_call.1} parent=55 // pred_region
        %p3709 = scmp.lt.s32.totalorder %s19, 1
        %s3710 = scalar_select %p3709, %s19, 1
        %s3711 = smul.addr %s3710, 32
        %s3712 = smul.addr %s3711, 8
        %s3713 = scalar_lea.vmem %s7, %s3712
      $region60: #{tpu_custom_call.1} parent=55 // pred_fallthru
        _
    $region56: #{tpu_custom_call.1} parent=5 // pred_fallthru
      _
  $region6: #{tpu_custom_call.1} parent=0 // loop_footer
    %s17 = sadd.s32 1, %s13
  $region7: #{tpu_custom_call.1} parent=0 // loop_footer_branch
    %12 = sbr.rel target = $region3
  $region8: #{tpu_custom_call.1} parent=0 // loop_exit
    _

</llo_original>
